<compile_context>
chip_gen: v7x
topology: tpu7x:2x2x1
jax: 0.10.0
libtpu: 0.0.40
codegen_flags: <defaults>
</compile_context>

<pallas_src>
import functools

import jax
import jax.numpy as jnp
import numpy as np
from jax.experimental import pallas as pl
from jax.experimental.pallas import tpu as pltpu

_VMEM_LIMIT = 48 * 1024 * 1024  # safe on v5e/v6e (128 MiB) and v7x (64 MiB)


def _vmem_spec():
    return pl.BlockSpec(memory_space=pltpu.MemorySpace.VMEM)


# ----------------------------------------------------------------------------
# K1: drug graph branch (GCN tower + global max pool + drug FC chain)
# ----------------------------------------------------------------------------
def _drug_graph_kernel(a_ref, x_ref, w1_ref, b1_ref, w2_ref, b2_ref,
                       w3_ref, b3_ref, mask_ref,
                       fw1_ref, fb1_ref, fw2_ref, fb2_ref, o_ref):
    a = a_ref[...]                                   # (N, N) normalized adjacency
    h = x_ref[...]                                   # (N, 78)

    # conv1..3:  relu(A_hat @ (h @ W) + b)   (weights tiny -> kept f32)
    h = jnp.dot(h, w1_ref[...], preferred_element_type=jnp.float32)
    h = jnp.maximum(jnp.dot(a, h, preferred_element_type=jnp.float32)
                    + b1_ref[...], 0.0)
    h = jnp.dot(h, w2_ref[...], preferred_element_type=jnp.float32)
    h = jnp.maximum(jnp.dot(a, h, preferred_element_type=jnp.float32)
                    + b2_ref[...], 0.0)
    h = jnp.dot(h, w3_ref[...], preferred_element_type=jnp.float32)
    h = jnp.maximum(jnp.dot(a, h, preferred_element_type=jnp.float32)
                    + b3_ref[...], 0.0)              # (N, 312)

    # global max pool, vectorized (one full-block result, single store)
    m = mask_ref[...]                                # (N, B)
    vals = jnp.where(m[:, :, None] > 0, h[:, None, :], jnp.float32(-1e30))
    xg = jnp.max(vals, axis=0)                       # (B, 312)

    # drug_fc1 + relu, drug_fc2 + relu  (bf16 weights, f32 accumulate)
    xg = jnp.maximum(
        jnp.dot(xg.astype(jnp.bfloat16), fw1_ref[...],
                preferred_element_type=jnp.float32) + fb1_ref[...], 0.0)
    xg = jnp.maximum(
        jnp.dot(xg.astype(jnp.bfloat16), fw2_ref[...],
                preferred_element_type=jnp.float32) + fb2_ref[...], 0.0)
    o_ref[...] = xg                                  # (B, 512)


def drug_graph_branch(a_norm, node_x, mask, p, n_graphs):
    out_dim = p["drug_fc2_w"].shape[1]
    return pl.pallas_call(
        _drug_graph_kernel,
        out_shape=jax.ShapeDtypeStruct((n_graphs, out_dim), jnp.float32),
        in_specs=[_vmem_spec() for _ in range(13)],
        out_specs=_vmem_spec(),
    )(a_norm, node_x,
      p["conv1_w"], p["conv1_b"], p["conv2_w"], p["conv2_b"],
      p["conv3_w"], p["conv3_b"], mask,
      p["drug_fc1_w"], p["drug_fc1_b"], p["drug_fc2_w"], p["drug_fc2_b"])


# ----------------------------------------------------------------------------
# K2: protein branch (pro_fc1 + pro_fc2 fused, K-tiled over the 4096 input dim)
# ----------------------------------------------------------------------------
def _pro_branch_kernel(x_ref, w1_ref, b1_ref, w2_ref, b2_ref, o_ref, acc_ref):
    k = pl.program_id(0)

    @pl.when(k == 0)
    def _():
        acc_ref[...] = jnp.zeros_like(acc_ref)

    acc_ref[...] += jnp.dot(x_ref[...].astype(jnp.bfloat16), w1_ref[...],
                            preferred_element_type=jnp.float32)

    @pl.when(k == pl.num_programs(0) - 1)
    def _():
        h = jnp.maximum(acc_ref[...] + b1_ref[...], 0.0)      # (B, 2048)
        y = jnp.dot(h.astype(jnp.bfloat16), w2_ref[...],
                    preferred_element_type=jnp.float32) + b2_ref[...]
        o_ref[...] = jnp.maximum(y, 0.0)                      # (B, 512)


def pro_branch(x, p, tk=2048):
    M, K = x.shape
    w1, b1 = p["pro_fc1_w"], p["pro_fc1_b"]
    w2, b2 = p["pro_fc2_w"], p["pro_fc2_b"]
    N1, N2 = w1.shape[1], w2.shape[1]
    tk_e = tk if (K % tk == 0) else K
    grid = (K // tk_e,)
    return pl.pallas_call(
        _pro_branch_kernel,
        out_shape=jax.ShapeDtypeStruct((M, N2), jnp.float32),
        grid_spec=pltpu.PrefetchScalarGridSpec(
            num_scalar_prefetch=0, grid=grid,
            in_specs=[
                pl.BlockSpec((M, tk_e), lambda k: (0, k)),
                pl.BlockSpec((tk_e, N1), lambda k: (k, 0)),
                pl.BlockSpec((1, N1), lambda k: (0, 0)),
                pl.BlockSpec((w2.shape[0], N2), lambda k: (0, 0)),
                pl.BlockSpec((1, N2), lambda k: (0, 0)),
            ],
            out_specs=pl.BlockSpec((M, N2), lambda k: (0, 0)),
            scratch_shapes=[pltpu.VMEM((M, N1), jnp.float32)]),
        compiler_params=pltpu.CompilerParams(
            dimension_semantics=("arbitrary",),
            vmem_limit_bytes=_VMEM_LIMIT),
    )(x, w1, b1, w2, b2)


# ----------------------------------------------------------------------------
# K3: generic 2-layer FC chain (used for the drug-embedding branch)
# ----------------------------------------------------------------------------
def _fc_chain2_kernel(x_ref, w1_ref, b1_ref, w2_ref, b2_ref, o_ref):
    h = jnp.dot(x_ref[...].astype(jnp.bfloat16), w1_ref[...],
                preferred_element_type=jnp.float32)
    h = jnp.maximum(h + b1_ref[...], 0.0)
    h = jnp.dot(h.astype(jnp.bfloat16), w2_ref[...],
                preferred_element_type=jnp.float32)
    o_ref[...] = jnp.maximum(h + b2_ref[...], 0.0)


def fc_chain2(x, w1, b1, w2, b2):
    M, N = x.shape[0], w2.shape[1]
    return pl.pallas_call(
        _fc_chain2_kernel,
        out_shape=jax.ShapeDtypeStruct((M, N), jnp.float32),
        in_specs=[_vmem_spec() for _ in range(5)],
        out_specs=_vmem_spec(),
    )(x, w1, b1, w2, b2)


# ----------------------------------------------------------------------------
# K4: fused QKV projection + all attention heads in a single kernel
# ----------------------------------------------------------------------------
def _qkv_attn_kernel(x_ref, wqkv_ref, o_ref, *, n_heads, d_k, scale):
    x = x_ref[...].astype(jnp.bfloat16)                       # (B, 1536)
    qkv = jnp.dot(x, wqkv_ref[...],
                  preferred_element_type=jnp.float32)         # (B, 3*H*d_k)
    D = n_heads * d_k
    for h in range(n_heads):                                  # static, small
        q = qkv[:, h * d_k:(h + 1) * d_k]                     # (B, d_k)
        k = qkv[:, D + h * d_k:D + (h + 1) * d_k]
        v = qkv[:, 2 * D + h * d_k:2 * D + (h + 1) * d_k]
        s = jax.lax.dot_general(q, k, (((1,), (1,)), ((), ())),
                                preferred_element_type=jnp.float32) * scale
        s = s - jnp.max(s, axis=-1, keepdims=True)
        p = jnp.exp(s)
        p = p * pl.reciprocal(jnp.sum(p, axis=-1, keepdims=True), approx=True)
        o_ref[h] = jnp.dot(p, v, preferred_element_type=jnp.float32)


def qkv_attention(x, wqkv, n_heads, d_k):
    B = x.shape[0]
    return pl.pallas_call(
        functools.partial(_qkv_attn_kernel, n_heads=n_heads, d_k=d_k,
                          scale=float(1.0 / np.sqrt(d_k))),
        out_shape=jax.ShapeDtypeStruct((n_heads, B, d_k), jnp.float32),
        in_specs=[_vmem_spec(), _vmem_spec()],
        out_specs=_vmem_spec(),
        compiler_params=pltpu.CompilerParams(vmem_limit_bytes=_VMEM_LIMIT),
    )(x, wqkv)


# ----------------------------------------------------------------------------
# K5: tail = mha.fc + fc1 + fc2 + out  (fc1 split to avoid in-kernel concat)
# ----------------------------------------------------------------------------
def _tail_kernel(xc_ref, ctx_ref, wfc_ref, w1a_ref, w1b_ref, b1_ref,
                 w2_ref, b2_ref, wo_ref, bo_ref, o_ref):
    # multi-head attention output projection (no bias in torch reference)
    att = jnp.dot(ctx_ref[...].astype(jnp.bfloat16), wfc_ref[...],
                  preferred_element_type=jnp.float32)           # (B, 1536)
    # fc1 over concat([xc, att]) == xc @ W1a + att @ W1b
    h = jnp.dot(xc_ref[...].astype(jnp.bfloat16), w1a_ref[...],
                preferred_element_type=jnp.float32)
    h = h + jnp.dot(att.astype(jnp.bfloat16), w1b_ref[...],
                    preferred_element_type=jnp.float32)
    h = jnp.maximum(h + b1_ref[...], 0.0)                       # (B, 1024)
    # fc2 + relu
    h = jnp.maximum(
        jnp.dot(h.astype(jnp.bfloat16), w2_ref[...],
                preferred_element_type=jnp.float32) + b2_ref[...], 0.0)  # (B, 512)
    # output head kept in f32
    o_ref[...] = jnp.dot(h, wo_ref[...],
                         preferred_element_type=jnp.float32) + bo_ref[...]


def tail(xc, ctx_r, p):
    M, N = xc.shape[0], p["out_w"].shape[1]
    return pl.pallas_call(
        _tail_kernel,
        out_shape=jax.ShapeDtypeStruct((M, N), jnp.float32),
        in_specs=[_vmem_spec() for _ in range(10)],
        out_specs=_vmem_spec(),
        compiler_params=pltpu.CompilerParams(vmem_limit_bytes=_VMEM_LIMIT),
    )(xc, ctx_r, p["mha_fc"], p["fc1_wa"], p["fc1_wb"], p["fc1_b"],
      p["fc2_w"], p["fc2_b"], p["out_w"], p["out_b"])


# ----------------------------------------------------------------------------
# Model glue
# ----------------------------------------------------------------------------
def build_norm_adj(edge_index, n_nodes):
    """D^{-1/2} (A + I) D^{-1/2} for GCNConv, A[i, j] = 1 if edge j -> i."""
    src, dst = edge_index[0], edge_index[1]
    A = jnp.zeros((n_nodes, n_nodes), jnp.float32).at[dst, src].set(1.0)
    A = A + jnp.eye(n_nodes, dtype=jnp.float32)
    deg = jnp.sum(A, axis=1)
    d_inv_sqrt = 1.0 / jnp.sqrt(deg)
    return A * d_inv_sqrt[:, None] * d_inv_sqrt[None, :]


def gcnnet_forward(params, node_x, edge_index, batch, drug_embedding,
                   pro_embedding, n_graphs, n_heads=4):
    a_norm = build_norm_adj(edge_index, node_x.shape[0])
    mask = (batch[:, None] == jnp.arange(n_graphs)[None, :]).astype(jnp.float32)

    # Branches (one fused kernel each)
    xg = drug_graph_branch(a_norm, node_x, mask, params, n_graphs)        # (B, 512)
    pro = pro_branch(pro_embedding, params)                               # (B, 512)
    dem = fc_chain2(drug_embedding, params["demb_fc1_w"], params["demb_fc1_b"],
                    params["demb_fc2_w"], params["demb_fc2_b"])           # (B, 512)

    xc = jnp.concatenate([xg, pro, dem], axis=1)                          # (B, 1536)

    # Multi-head attention: fused QKV matmul + all heads in one kernel
    d_k = xc.shape[1] // n_heads
    ctx = qkv_attention(xc, params["mha_wqkv"], n_heads, d_k)             # (H, B, d_k)
    # Faithful to torch: context.transpose(1, 2).reshape(-1, n_heads * d_v)
    # (note: this interleaves batch/head exactly like the PyTorch reference).
    ctx_r = jnp.transpose(ctx, (0, 2, 1)).reshape(-1, n_heads * d_k)      # (B, 1536)

    # mha.fc + concat + fc1 + fc2 + out, fused
    return tail(xc, ctx_r, params)                                        # (B, 2)


def init_params(key):
    shapes = {
        "conv1_w": (78, 78), "conv1_b": (78,),
        "conv2_w": (78, 156), "conv2_b": (156,),
        "conv3_w": (156, 312), "conv3_b": (312,),
        "drug_fc1_w": (312, 1024), "drug_fc1_b": (1024,),
        "drug_fc2_w": (1024, 512), "drug_fc2_b": (512,),
        "pro_fc1_w": (4096, 2048), "pro_fc1_b": (2048,),
        "pro_fc2_w": (2048, 512), "pro_fc2_b": (512,),
        "demb_fc1_w": (512, 1024), "demb_fc1_b": (1024,),
        "demb_fc2_w": (1024, 512), "demb_fc2_b": (512,),
        "mha_wq": (1536, 1536), "mha_wk": (1536, 1536),
        "mha_wv": (1536, 1536), "mha_fc": (1536, 1536),
        "fc1_w": (3072, 1024), "fc1_b": (1024,),
        "fc2_w": (1024, 512), "fc2_b": (512,),
        "out_w": (512, 2), "out_b": (2,),
    }
    params = {}
    keys = jax.random.split(key, len(shapes))
    for (name, shape), k in zip(shapes.items(), keys):
        scale = 0.01 if name.endswith("_b") else 0.02
        params[name] = scale * jax.random.normal(k, shape, jnp.float32)
    return params


def prepare_params(p):
    """One-time prep: bf16 weight cast, fused QKV, split fc1, (1, N) f32 biases."""
    f32, bf16 = jnp.float32, jnp.bfloat16
    pp = {}
    # GCN conv weights stay f32 (tiny)
    for name in ("conv1", "conv2", "conv3"):
        pp[name + "_w"] = p[name + "_w"].astype(f32)
        pp[name + "_b"] = p[name + "_b"].reshape(1, -1).astype(f32)
    # large FC weights -> bf16 (f32 accumulate in-kernel), biases -> (1, N) f32
    for name in ("drug_fc1", "drug_fc2", "pro_fc1", "pro_fc2",
                 "demb_fc1", "demb_fc2", "fc2"):
        pp[name + "_w"] = p[name + "_w"].astype(bf16)
        pp[name + "_b"] = p[name + "_b"].reshape(1, -1).astype(f32)
    # fused QKV projection (1536, 4608) bf16
    pp["mha_wqkv"] = jnp.concatenate(
        [p["mha_wq"], p["mha_wk"], p["mha_wv"]], axis=1).astype(bf16)
    pp["mha_fc"] = p["mha_fc"].astype(bf16)
    # fc1 split into the halves acting on xc and on the attention output
    half = p["fc1_w"].shape[0] // 2
    pp["fc1_wa"] = p["fc1_w"][:half].astype(bf16)
    pp["fc1_wb"] = p["fc1_w"][half:].astype(bf16)
    pp["fc1_b"] = p["fc1_b"].reshape(1, -1).astype(f32)
    # output head kept f32 for logit accuracy
    pp["out_w"] = p["out_w"].astype(f32)
    pp["out_b"] = p["out_b"].reshape(1, -1).astype(f32)
    return pp


if __name__ == "__main__":
    key = jax.random.PRNGKey(0)
    k_param, k_x, k_smi, k_pro = jax.random.split(key, 4)

    params = prepare_params(init_params(k_param))

    B = 2                   # number of graphs (batch)
    NODES_PER_GRAPH = 8
    N_NODES = B * NODES_PER_GRAPH

    # Drug node features (N_nodes, 78)
    node_x = jax.random.normal(k_x, (N_NODES, 78), jnp.float32)

    # Ring graph per molecule (undirected), edge_index shape (2, E)
    edges = []
    for g in range(B):
        off = g * NODES_PER_GRAPH
        for i in range(NODES_PER_GRAPH):
            j = (i + 1) % NODES_PER_GRAPH
            edges.append((off + i, off + j))
            edges.append((off + j, off + i))
    edge_index = jnp.asarray(np.array(edges, dtype=np.int32).T)

    # Graph membership per node
    batch = jnp.asarray(
        np.repeat(np.arange(B, dtype=np.int32), NODES_PER_GRAPH))

    # data.smiles -> drug embedding (B, 512), data.proseq -> protein emb (B, 4096)
    drug_embedding = jax.random.normal(k_smi, (B, 512), jnp.float32)
    pro_embedding = jax.random.normal(k_pro, (B, 4096), jnp.float32)

    out = gcnnet_forward(params, node_x, edge_index, batch,
                         drug_embedding, pro_embedding, n_graphs=B)
    out = jax.block_until_ready(out)
    assert out.shape == (B, 2) and out.dtype == jnp.float32
    print("KERNEL_OK")
</pallas_src>

<mosaic_0001>
module attributes {stable_mosaic.version = 11 : i64} {
  func.func @_drug_graph_kernel(%arg0: memref<16x16xf32, #tpu.memory_space<vmem>>, %arg1: memref<16x78xf32, #tpu.memory_space<vmem>>, %arg2: memref<78x78xf32, #tpu.memory_space<vmem>>, %arg3: memref<1x78xf32, #tpu.memory_space<vmem>>, %arg4: memref<78x156xf32, #tpu.memory_space<vmem>>, %arg5: memref<1x156xf32, #tpu.memory_space<vmem>>, %arg6: memref<156x312xf32, #tpu.memory_space<vmem>>, %arg7: memref<1x312xf32, #tpu.memory_space<vmem>>, %arg8: memref<16x2xf32, #tpu.memory_space<vmem>>, %arg9: memref<312x1024xbf16, #tpu.memory_space<vmem>>, %arg10: memref<1x1024xf32, #tpu.memory_space<vmem>>, %arg11: memref<1024x512xbf16, #tpu.memory_space<vmem>>, %arg12: memref<1x512xf32, #tpu.memory_space<vmem>>, %arg13: memref<2x512xf32, #tpu.memory_space<vmem>>) attributes {dimension_semantics = [], scalar_prefetch = 0 : i64, scratch_operands = 0 : i64, tpu.core_type = #tpu.core_type<tc>} {
    %c0 = arith.constant 0 : index
    %c0_0 = arith.constant 0 : index
    %0 = vector.load %arg0[%c0, %c0_0] : memref<16x16xf32, #tpu.memory_space<vmem>>, vector<16x16xf32>
    %c0_1 = arith.constant 0 : index
    %c0_2 = arith.constant 0 : index
    %1 = vector.load %arg1[%c0_1, %c0_2] : memref<16x78xf32, #tpu.memory_space<vmem>>, vector<16x78xf32>
    %c0_3 = arith.constant 0 : index
    %c0_4 = arith.constant 0 : index
    %2 = vector.load %arg2[%c0_3, %c0_4] : memref<78x78xf32, #tpu.memory_space<vmem>>, vector<78x78xf32>
    %cst = arith.constant dense<0.000000e+00> : vector<16x78xf32>
    %3 = tpu.matmul %1, %2, %cst {dimension_numbers = #tpu.dot_dimension_numbers<[1], [0], [0], [1], [0, 0, 1, 1], [], []>} : vector<16x78xf32>, vector<78x78xf32>, vector<16x78xf32> -> vector<16x78xf32>
    %cst_5 = arith.constant dense<0.000000e+00> : vector<16x78xf32>
    %4 = tpu.matmul %0, %3, %cst_5 {dimension_numbers = #tpu.dot_dimension_numbers<[1], [0], [0], [1], [0, 0, 1, 1], [], []>} : vector<16x16xf32>, vector<16x78xf32>, vector<16x78xf32> -> vector<16x78xf32>
    %c0_6 = arith.constant 0 : index
    %c0_7 = arith.constant 0 : index
    %5 = vector.load %arg3[%c0_6, %c0_7] : memref<1x78xf32, #tpu.memory_space<vmem>>, vector<1x78xf32>
    %6 = vector.broadcast %5 : vector<1x78xf32> to vector<16x78xf32>
    %7 = arith.addf %4, %6 : vector<16x78xf32>
    %cst_8 = arith.constant 0.000000e+00 : f32
    %8 = vector.broadcast %cst_8 : f32 to vector<16x78xf32>
    %9 = arith.maximumf %7, %8 : vector<16x78xf32>
    %c0_9 = arith.constant 0 : index
    %c0_10 = arith.constant 0 : index
    %10 = vector.load %arg4[%c0_9, %c0_10] : memref<78x156xf32, #tpu.memory_space<vmem>>, vector<78x156xf32>
    %cst_11 = arith.constant dense<0.000000e+00> : vector<16x156xf32>
    %11 = tpu.matmul %9, %10, %cst_11 {dimension_numbers = #tpu.dot_dimension_numbers<[1], [0], [0], [1], [0, 0, 1, 1], [], []>} : vector<16x78xf32>, vector<78x156xf32>, vector<16x156xf32> -> vector<16x156xf32>
    %cst_12 = arith.constant dense<0.000000e+00> : vector<16x156xf32>
    %12 = tpu.matmul %0, %11, %cst_12 {dimension_numbers = #tpu.dot_dimension_numbers<[1], [0], [0], [1], [0, 0, 1, 1], [], []>} : vector<16x16xf32>, vector<16x156xf32>, vector<16x156xf32> -> vector<16x156xf32>
    %c0_13 = arith.constant 0 : index
    %c0_14 = arith.constant 0 : index
    %13 = vector.load %arg5[%c0_13, %c0_14] : memref<1x156xf32, #tpu.memory_space<vmem>>, vector<1x156xf32>
    %14 = vector.broadcast %13 : vector<1x156xf32> to vector<16x156xf32>
    %15 = arith.addf %12, %14 : vector<16x156xf32>
    %cst_15 = arith.constant 0.000000e+00 : f32
    %16 = vector.broadcast %cst_15 : f32 to vector<16x156xf32>
    %17 = arith.maximumf %15, %16 : vector<16x156xf32>
    %c0_16 = arith.constant 0 : index
    %c0_17 = arith.constant 0 : index
    %18 = vector.load %arg6[%c0_16, %c0_17] : memref<156x312xf32, #tpu.memory_space<vmem>>, vector<156x312xf32>
    %cst_18 = arith.constant dense<0.000000e+00> : vector<16x312xf32>
    %19 = tpu.matmul %17, %18, %cst_18 {dimension_numbers = #tpu.dot_dimension_numbers<[1], [0], [0], [1], [0, 0, 1, 1], [], []>} : vector<16x156xf32>, vector<156x312xf32>, vector<16x312xf32> -> vector<16x312xf32>
    %cst_19 = arith.constant dense<0.000000e+00> : vector<16x312xf32>
    %20 = tpu.matmul %0, %19, %cst_19 {dimension_numbers = #tpu.dot_dimension_numbers<[1], [0], [0], [1], [0, 0, 1, 1], [], []>} : vector<16x16xf32>, vector<16x312xf32>, vector<16x312xf32> -> vector<16x312xf32>
    %c0_20 = arith.constant 0 : index
    %c0_21 = arith.constant 0 : index
    %21 = vector.load %arg7[%c0_20, %c0_21] : memref<1x312xf32, #tpu.memory_space<vmem>>, vector<1x312xf32>
    %22 = vector.broadcast %21 : vector<1x312xf32> to vector<16x312xf32>
    %23 = arith.addf %20, %22 : vector<16x312xf32>
    %cst_22 = arith.constant 0.000000e+00 : f32
    %24 = vector.broadcast %cst_22 : f32 to vector<16x312xf32>
    %25 = arith.maximumf %23, %24 : vector<16x312xf32>
    %c0_23 = arith.constant 0 : index
    %c0_24 = arith.constant 0 : index
    %26 = vector.load %arg8[%c0_23, %c0_24] : memref<16x2xf32, #tpu.memory_space<vmem>>, vector<16x2xf32>
    %27 = vector.shape_cast %26 : vector<16x2xf32> to vector<16x2x1xf32>
    %cst_25 = arith.constant 0.000000e+00 : f32
    %28 = vector.broadcast %cst_25 : f32 to vector<16x2x1xf32>
    %29 = arith.cmpf ogt, %27, %28 : vector<16x2x1xf32>
    %30 = vector.shape_cast %25 : vector<16x312xf32> to vector<16x1x312xf32>
    %cst_26 = arith.constant -1.000000e+30 : f32
    %31 = vector.shape_cast %29 : vector<16x2x1xi1> to vector<16x2x1xi1>
    %32 = vector.broadcast %31 : vector<16x2x1xi1> to vector<16x2x312xi1>
    %33 = vector.shape_cast %30 : vector<16x1x312xf32> to vector<16x1x312xf32>
    %34 = vector.broadcast %33 : vector<16x1x312xf32> to vector<16x2x312xf32>
    %35 = vector.broadcast %cst_26 : f32 to vector<16x2x312xf32>
    %36 = arith.select %32, %34, %35 : vector<16x2x312xi1>, vector<16x2x312xf32>
    %cst_27 = arith.constant dense<0xFF800000> : vector<2x312xf32>
    %37 = vector.multi_reduction <maximumf>, %36, %cst_27 [0] : vector<16x2x312xf32> to vector<2x312xf32>
    %38 = arith.truncf %37 : vector<2x312xf32> to vector<2x312xbf16>
    %c0_28 = arith.constant 0 : index
    %c0_29 = arith.constant 0 : index
    %39 = vector.load %arg9[%c0_28, %c0_29] : memref<312x1024xbf16, #tpu.memory_space<vmem>>, vector<312x1024xbf16>
    %cst_30 = arith.constant dense<0.000000e+00> : vector<2x1024xf32>
    %40 = tpu.matmul %38, %39, %cst_30 {dimension_numbers = #tpu.dot_dimension_numbers<[1], [0], [0], [1], [0, 0, 1, 1], [], []>} : vector<2x312xbf16>, vector<312x1024xbf16>, vector<2x1024xf32> -> vector<2x1024xf32>
    %c0_31 = arith.constant 0 : index
    %c0_32 = arith.constant 0 : index
    %41 = vector.load %arg10[%c0_31, %c0_32] : memref<1x1024xf32, #tpu.memory_space<vmem>>, vector<1x1024xf32>
    %42 = vector.broadcast %41 : vector<1x1024xf32> to vector<2x1024xf32>
    %43 = arith.addf %40, %42 : vector<2x1024xf32>
    %cst_33 = arith.constant 0.000000e+00 : f32
    %44 = vector.broadcast %cst_33 : f32 to vector<2x1024xf32>
    %45 = arith.maximumf %43, %44 : vector<2x1024xf32>
    %46 = arith.truncf %45 : vector<2x1024xf32> to vector<2x1024xbf16>
    %c0_34 = arith.constant 0 : index
    %c0_35 = arith.constant 0 : index
    %47 = vector.load %arg11[%c0_34, %c0_35] : memref<1024x512xbf16, #tpu.memory_space<vmem>>, vector<1024x512xbf16>
    %cst_36 = arith.constant dense<0.000000e+00> : vector<2x512xf32>
    %48 = tpu.matmul %46, %47, %cst_36 {dimension_numbers = #tpu.dot_dimension_numbers<[1], [0], [0], [1], [0, 0, 1, 1], [], []>} : vector<2x1024xbf16>, vector<1024x512xbf16>, vector<2x512xf32> -> vector<2x512xf32>
    %c0_37 = arith.constant 0 : index
    %c0_38 = arith.constant 0 : index
    %49 = vector.load %arg12[%c0_37, %c0_38] : memref<1x512xf32, #tpu.memory_space<vmem>>, vector<1x512xf32>
    %50 = vector.broadcast %49 : vector<1x512xf32> to vector<2x512xf32>
    %51 = arith.addf %48, %50 : vector<2x512xf32>
    %cst_39 = arith.constant 0.000000e+00 : f32
    %52 = vector.broadcast %cst_39 : f32 to vector<2x512xf32>
    %53 = arith.maximumf %51, %52 : vector<2x512xf32>
    %c0_40 = arith.constant 0 : index
    %c0_41 = arith.constant 0 : index
    %54 = vector.load %arg13[%c0_40, %c0_41] : memref<2x512xf32, #tpu.memory_space<vmem>>, vector<2x512xf32>
    tpu.vector_store %arg13[%c0_40, %c0_41], %53 {strides = array<i32>} : memref<2x512xf32, #tpu.memory_space<vmem>>, vector<2x512xf32>,
    return
  }
}

</mosaic_0001>

<llo_original>
// kernel: tpu_custom_call.1
$region0: #{tpu_custom_call.1}
  #allocation0 [shape = 'u32[]', space=smem, size = 0x4, offset = 0x4, fixed_abs, tag = 'smem constant byte address 0x4 - core index']
  #allocation1 [shape = 'u32[144,128]{1,0:T(1,128)}', space=vmem, size = 0x12000, scoped, tag = 'internal scratch']
  %s0 = inlined_call_operand.vmem [shape: f32[16,16], index: 0, kind: input, shape index: {}]
  %s1 = inlined_call_operand.hbm [shape: f32[16,78], index: 1, kind: input, shape index: {}]
  %s2 = inlined_call_operand.hbm [shape: f32[78,78], index: 2, kind: input, shape index: {}]
  %s3 = inlined_call_operand.hbm [shape: f32[1,78], index: 3, kind: input, shape index: {}]
  %s4 = inlined_call_operand.hbm [shape: f32[78,156], index: 4, kind: input, shape index: {}]
  %s5 = inlined_call_operand.vmem [shape: f32[1,156], index: 5, kind: input, shape index: {}]
  %s6 = inlined_call_operand.hbm [shape: f32[156,312], index: 6, kind: input, shape index: {}]
  %s7 = inlined_call_operand.vmem [shape: f32[1,312], index: 7, kind: input, shape index: {}]
  %s8 = inlined_call_operand.vmem [shape: f32[16,2], index: 8, kind: input, shape index: {}]
  %s9 = inlined_call_operand.hbm [shape: bf16[312,1024], index: 9, kind: input, shape index: {}]
  %s10 = inlined_call_operand.vmem [shape: f32[1,1024], index: 10, kind: input, shape index: {}]
  %s11 = inlined_call_operand.hbm [shape: bf16[1024,512], index: 11, kind: input, shape index: {}]
  %s12 = inlined_call_operand.vmem [shape: f32[1,512], index: 12, kind: input, shape index: {}]
  %s13 = inlined_call_operand.hbm [shape: f32[2,512], index: 13, kind: output, shape index: {}]
  %s14 = sld [smem:[#allocation0]]
  $region90: #{tpu_custom_call.1} parent=0
    _
  %s16 = ssub.s32 1, %s14
  %s17 = scalar_select 0, %s16, %s14
  $region1: #{tpu_custom_call.1} parent=0
    #allocation2 [shape = 'u8[8192]{0}', space=vmem, size = 0x2000, scoped, tag = 'input window, operand 1, single buffered']
    #allocation3 [shape = 's32[1]{0}', space=sflag, size = 0x4, scoped, tag = 'scoped memory for tpu_custom_call.1']
    #allocation4 [shape = 's32[1]{0}', space=sflag, size = 0x4, scoped, tag = 'scoped memory for tpu_custom_call.1']
    #allocation5 [shape = 'u8[40960]{0}', space=vmem, size = 0xa000, scoped, tag = 'input window, operand 2, single buffered']
    #allocation6 [shape = 's32[1]{0}', space=sflag, size = 0x4, scoped, tag = 'scoped memory for tpu_custom_call.1']
    #allocation7 [shape = 'u8[512]{0}', space=vmem, size = 0x400, scoped, tag = 'input window, operand 3, single buffered']
    #allocation8 [shape = 'u8[81920]{0}', space=vmem, size = 0x14000, scoped, tag = 'input window, operand 4, single buffered']
    #allocation9 [shape = 's32[1]{0}', space=sflag, size = 0x4, scoped, tag = 'scoped memory for tpu_custom_call.1']
    #allocation10 [shape = 'u8[245760]{0}', space=vmem, size = 0x3c000, scoped, tag = 'input window, operand 6, single buffered']
    #allocation11 [shape = 'u8[638976]{0}', space=vmem, size = 0x9c000, scoped, tag = 'input window, operand 9, single buffered']
    #allocation12 [shape = 's32[1]{0}', space=sflag, size = 0x4, scoped, tag = 'scoped memory for tpu_custom_call.1']
    #allocation13 [shape = 'u8[1048576]{0}', space=vmem, size = 0x100000, scoped, tag = 'input window, operand 11, single buffered']
    #allocation14 [shape = 'u8[4096]{0}', space=vmem, size = 0x1000, scoped, tag = 'output window, operand 0, single buffered']
    %18 = vsyncpa [#allocation3], 0
    %19 = vsyncpa [#allocation6], 0
    %20 = vsyncpa [#allocation9], 0
    %21 = vsyncpa [#allocation12], 0
    %22 = vsyncpa [#allocation4], 0
    // Predicated region
    $region2: #{tpu_custom_call.1} parent=1 // pred_check
      _
    $region3: #{tpu_custom_call.1} parent=1 // pred_check_branch
      %24 = sbr.rel (0) target = $region5
    $region4: #{tpu_custom_call.1} parent=1 // pred_region
      _
    $region5: #{tpu_custom_call.1} parent=1 // pred_fallthru
      _
    // Predicated region
    $region6: #{tpu_custom_call.1} parent=1 // pred_check
      _
    $region7: #{tpu_custom_call.1} parent=1 // pred_check_branch
      %26 = sbr.rel (0) target = $region9
    $region8: #{tpu_custom_call.1} parent=1 // pred_region
      %s28 = ssub.s32 256, 256
      %29 = vsyncadd [#allocation3], %s28
      %s30 = sshll.u32 [#allocation2], 4
      %s31 = int_to_ptr.vmem [resolvable:$true] %s30
      %36 = dma.hbm_to_vmem [thread:$0]  %s1, 256, %s31, [#allocation3], 128, 128, 8
    $region9: #{tpu_custom_call.1} parent=1 // pred_fallthru
      _
    // Predicated region
    $region10: #{tpu_custom_call.1} parent=1 // pred_check
      _
    $region11: #{tpu_custom_call.1} parent=1 // pred_check_branch
      %38 = sbr.rel (0) target = $region13
    $region12: #{tpu_custom_call.1} parent=1 // pred_region
      %s40 = ssub.s32 1280, 1280
      %41 = vsyncadd [#allocation6], %s40
      %s42 = sshll.u32 [#allocation5], 4
      %s43 = int_to_ptr.vmem [resolvable:$true] %s42
      %48 = dma.hbm_to_vmem [thread:$0]  %s2, 1280, %s43, [#allocation6], 128, 128, 8
    $region13: #{tpu_custom_call.1} parent=1 // pred_fallthru
      _
    // Predicated region
    $region14: #{tpu_custom_call.1} parent=1 // pred_check
      _
    $region15: #{tpu_custom_call.1} parent=1 // pred_check_branch
      %50 = sbr.rel (0) target = $region17
    $region16: #{tpu_custom_call.1} parent=1 // pred_region
      %s52 = ssub.s32 16, 16
      %53 = vsyncadd [#allocation6], %s52
      %s55 = sshll.u32 [#allocation7], 4
      %s56 = int_to_ptr.vmem [resolvable:$true] %s55
      %58 = dma.hbm_to_vmem [thread:$0]  %s3, 16, %s56, [#allocation6]
    $region17: #{tpu_custom_call.1} parent=1 // pred_fallthru
      _
    // Predicated region
    $region18: #{tpu_custom_call.1} parent=1 // pred_check
      _
    $region19: #{tpu_custom_call.1} parent=1 // pred_check_branch
      %60 = sbr.rel (0) target = $region21
    $region20: #{tpu_custom_call.1} parent=1 // pred_region
      %s62 = ssub.s32 2560, 2560
      %63 = vsyncadd [#allocation9], %s62
      %s64 = sshll.u32 [#allocation8], 4
      %s65 = int_to_ptr.vmem [resolvable:$true] %s64
      %70 = dma.hbm_to_vmem [thread:$0]  %s4, 2560, %s65, [#allocation9], 256, 256, 16
    $region21: #{tpu_custom_call.1} parent=1 // pred_fallthru
      _
    // Predicated region
    $region22: #{tpu_custom_call.1} parent=1 // pred_check
      _
    $region23: #{tpu_custom_call.1} parent=1 // pred_check_branch
      %72 = sbr.rel (0) target = $region25
    $region24: #{tpu_custom_call.1} parent=1 // pred_region
      _
    $region25: #{tpu_custom_call.1} parent=1 // pred_fallthru
      _
    // Predicated region
    $region26: #{tpu_custom_call.1} parent=1 // pred_check
      _
    $region27: #{tpu_custom_call.1} parent=1 // pred_check_branch
      %74 = sbr.rel (0) target = $region29
    $region28: #{tpu_custom_call.1} parent=1 // pred_region
      %s76 = ssub.s32 7680, 7680
      %77 = vsyncadd [#allocation9], %s76
      %s78 = sshll.u32 [#allocation10], 4
      %s79 = int_to_ptr.vmem [resolvable:$true] %s78
      %84 = dma.hbm_to_vmem [thread:$0]  %s6, 7680, %s79, [#allocation9], 384, 384, 24
    $region29: #{tpu_custom_call.1} parent=1 // pred_fallthru
      _
    // Predicated region
    $region30: #{tpu_custom_call.1} parent=1 // pred_check
      _
    $region31: #{tpu_custom_call.1} parent=1 // pred_check_branch
      %86 = sbr.rel (0) target = $region33
    $region32: #{tpu_custom_call.1} parent=1 // pred_region
      _
    $region33: #{tpu_custom_call.1} parent=1 // pred_fallthru
      _
    // Predicated region
    $region34: #{tpu_custom_call.1} parent=1 // pred_check
      _
    $region35: #{tpu_custom_call.1} parent=1 // pred_check_branch
      %88 = sbr.rel (0) target = $region37
    $region36: #{tpu_custom_call.1} parent=1 // pred_region
      _
    $region37: #{tpu_custom_call.1} parent=1 // pred_fallthru
      _
    // Predicated region
    $region38: #{tpu_custom_call.1} parent=1 // pred_check
      _
    $region39: #{tpu_custom_call.1} parent=1 // pred_check_branch
      %90 = sbr.rel (0) target = $region41
    $region40: #{tpu_custom_call.1} parent=1 // pred_region
      %s92 = ssub.s32 19968, 19968
      %93 = vsyncadd [#allocation12], %s92
      %s94 = sshll.u32 [#allocation11], 4
      %s95 = int_to_ptr.vmem [resolvable:$true] %s94
      %100 = dma.hbm_to_vmem [thread:$0]  %s9, 19968, %s95, [#allocation12], 512, 512, 32
    $region41: #{tpu_custom_call.1} parent=1 // pred_fallthru
      _
    // Predicated region
    $region42: #{tpu_custom_call.1} parent=1 // pred_check
      _
    $region43: #{tpu_custom_call.1} parent=1 // pred_check_branch
      %102 = sbr.rel (0) target = $region45
    $region44: #{tpu_custom_call.1} parent=1 // pred_region
      _
    $region45: #{tpu_custom_call.1} parent=1 // pred_fallthru
      _
    // Predicated region
    $region46: #{tpu_custom_call.1} parent=1 // pred_check
      _
    $region47: #{tpu_custom_call.1} parent=1 // pred_check_branch
      %104 = sbr.rel (0) target = $region49
    $region48: #{tpu_custom_call.1} parent=1 // pred_region
      %s106 = ssub.s32 32768, 32768
      %107 = vsyncadd [#allocation12], %s106
      %s108 = sshll.u32 [#allocation13], 4
      %s109 = int_to_ptr.vmem [resolvable:$true] %s108
      %114 = dma.hbm_to_vmem [thread:$0]  %s11, 32768, %s109, [#allocation12], 256, 256, 16
    $region49: #{tpu_custom_call.1} parent=1 // pred_fallthru
      _
    // Predicated region
    $region50: #{tpu_custom_call.1} parent=1 // pred_check
      _
    $region51: #{tpu_custom_call.1} parent=1 // pred_check_branch
      %116 = sbr.rel (0) target = $region53
    $region52: #{tpu_custom_call.1} parent=1 // pred_region
      _
    $region53: #{tpu_custom_call.1} parent=1 // pred_fallthru
      _
    // Predicated region
    $region54: #{tpu_custom_call.1} parent=1 // pred_check
      _
    $region55: #{tpu_custom_call.1} parent=1 // pred_check_branch
      %118 = sbr.rel (0) target = $region57
    $region56: #{tpu_custom_call.1} parent=1 // pred_region
      %119 = dma.done [#allocation3], 256
    $region57: #{tpu_custom_call.1} parent=1 // pred_fallthru
      _
    // Predicated region
    $region58: #{tpu_custom_call.1} parent=1 // pred_check
      _
    $region59: #{tpu_custom_call.1} parent=1 // pred_check_branch
      %121 = sbr.rel (0) target = $region61
    $region60: #{tpu_custom_call.1} parent=1 // pred_region
      %122 = dma.done [#allocation6], 1280
    $region61: #{tpu_custom_call.1} parent=1 // pred_fallthru
      _
    // Predicated region
    $region62: #{tpu_custom_call.1} parent=1 // pred_check
      _
    $region63: #{tpu_custom_call.1} parent=1 // pred_check_branch
      %124 = sbr.rel (0) target = $region65
    $region64: #{tpu_custom_call.1} parent=1 // pred_region
      %125 = dma.done [#allocation6], 16
    $region65: #{tpu_custom_call.1} parent=1 // pred_fallthru
      _
    // Predicated region
    $region66: #{tpu_custom_call.1} parent=1 // pred_check
      _
    $region67: #{tpu_custom_call.1} parent=1 // pred_check_branch
      %127 = sbr.rel (0) target = $region69
    $region68: #{tpu_custom_call.1} parent=1 // pred_region
      %128 = dma.done [#allocation9], 2560
    $region69: #{tpu_custom_call.1} parent=1 // pred_fallthru
      _
    // Predicated region
    $region70: #{tpu_custom_call.1} parent=1 // pred_check
      _
    $region71: #{tpu_custom_call.1} parent=1 // pred_check_branch
      %130 = sbr.rel (0) target = $region73
    $region72: #{tpu_custom_call.1} parent=1 // pred_region
      %131 = dma.done [#allocation9], 7680
    $region73: #{tpu_custom_call.1} parent=1 // pred_fallthru
      _
    // Predicated region
    $region74: #{tpu_custom_call.1} parent=1 // pred_check
      _
    $region75: #{tpu_custom_call.1} parent=1 // pred_check_branch
      %133 = sbr.rel (0) target = $region77
    $region76: #{tpu_custom_call.1} parent=1 // pred_region
      %134 = dma.done [#allocation12], 19968
    $region77: #{tpu_custom_call.1} parent=1 // pred_fallthru
      _
    // Predicated region
    $region78: #{tpu_custom_call.1} parent=1 // pred_check
      _
    $region79: #{tpu_custom_call.1} parent=1 // pred_check_branch
      %136 = sbr.rel (0) target = $region81
    $region80: #{tpu_custom_call.1} parent=1 // pred_region
      %137 = dma.done [#allocation12], 32768
    $region81: #{tpu_custom_call.1} parent=1 // pred_fallthru
      _
    %v139 = vld [vmem:[%s0] sm:$0xff]
    %v140 = vld [vmem:[%s0 + $0x8] sm:$0xff]
    %v141 = vld [vmem:[#allocation2] sm:$0xff]
    %v142 = vld [vmem:[#allocation2 + $0x8] sm:$0xff]
    %v143 = vld [vmem:[#allocation5] sm:$0xff]
    %v144 = vld [vmem:[#allocation5 + $0x8] sm:$0xff]
    %v145 = vld [vmem:[#allocation5 + $0x10] sm:$0xff]
    %v146 = vld [vmem:[#allocation5 + $0x18] sm:$0xff]
    %v147 = vld [vmem:[#allocation5 + $0x20] sm:$0xff]
    %v148 = vld [vmem:[#allocation5 + $0x28] sm:$0xff]
    %v149 = vld [vmem:[#allocation5 + $0x30] sm:$0xff]
    %v150 = vld [vmem:[#allocation5 + $0x38] sm:$0xff]
    %v151 = vld [vmem:[#allocation5 + $0x40] sm:$0xff]
    %v152 = vld [vmem:[#allocation5 + $0x48] sm:$0x3f]
    %vm153 = vcmask 637952
    %v155 = vsel %vm153, %v141, 0
    %v158 = vsel %vm153, %v142, 0
    %vm160 = vcmask 1045504
    %v162 = vsel %vm160, %v152, 0
    %164 = vmatprep.subr.mxu0 0.0
    %165 = vmatpush1.msra.mxu0 %v143
    %166 = vmatprep.subr.mxu0 0.0
    %167 = vmatpush1.msra.mxu0 %v144
    %168 = vmatprep.subr.mxu0 0.0
    %169 = vmatpush1.msra.mxu0 %v145
    %170 = vmatprep.subr.mxu0 0.0
    %171 = vmatpush1.msra.mxu0 %v146
    %172 = vmatprep.subr.mxu0 0.0
    %173 = vmatpush1.msra.mxu0 %v147
    %174 = vmatprep.subr.mxu0 0.0
    %175 = vmatpush1.msra.mxu0 %v148
    %176 = vmatprep.subr.mxu0 0.0
    %177 = vmatpush1.msra.mxu0 %v149
    %178 = vmatprep.subr.mxu0 0.0
    %179 = vmatpush1.msra.mxu0 %v150
    %180 = vmatprep.subr.mxu0 0.0
    %181 = vmatpush1.msra.mxu0 %v151
    %182 = vmatprep.subr.mxu0 0.0
    %183 = vmatpush1.msra.mxu0 %v162
    %184 = vmatprep.subr.mxu0 0.0
    %185 = vmatpush1.msra.mxu0 0.0
    %186 = vmatprep.subr.mxu0 0.0
    %187 = vmatpush1.msra.mxu0 0.0
    %188 = vmatprep.subr.mxu0 0.0
    %189 = vmatpush1.msra.mxu0 0.0
    %190 = vmatprep.subr.mxu0 0.0
    %191 = vmatpush1.msra.mxu0 0.0
    %192 = vmatprep.subr.mxu0 0.0
    %193 = vmatpush1.msra.mxu0 0.0
    %194 = vmatprep.subr.mxu0 0.0
    %195 = vmatpush1.msra.mxu0 0.0
    %196 = vmatprep.subr.mxu0 0.0
    %197 = vmatpush1.msra.mxu0 0.0
    %198 = vmatprep.subr.mxu0 0.0
    %199 = vmatpush1.msra.mxu0 0.0
    %200 = vmatprep.subr.mxu0 0.0
    %201 = vmatpush1.msra.mxu0 0.0
    %202 = vmatprep.subr.mxu0 0.0
    %203 = vmatpush1.msra.mxu0 0.0
    %204 = vmatprep.subr.mxu0 0.0
    %205 = vmatpush1.msra.mxu0 0.0
    %206 = vmatprep.subr.mxu0 0.0
    %207 = vmatpush1.msra.mxu0 0.0
    %208 = vmatprep.subr.mxu0 0.0
    %209 = vmatpush1.msra.mxu0 0.0
    %210 = vmatprep.subr.mxu0 0.0
    %211 = vmatpush1.msra.mxu0 0.0
    %212 = vmatprep.subr.mxu0 0.0
    %213 = vmatpush1.msra.mxu0 0.0
    %214 = vmatprep.subr.mxu0 0.0
    %215 = vmatpush1.msra.mxu0 0.0
    %216 = vmatprep.subr.mxu0 0.0
    %217 = vmatpush1.msra.mxu0 0.0
    %218 = vmatprep.subr.mxu0 0.0
    %219 = vmatpush1.msra.mxu0 0.0
    %220 = vmatprep.subr.mxu0 0.0
    %221 = vmatpush1.msra.mxu0 0.0
    %222 = vmatprep.subr.mxu0 0.0
    %223 = vmatpush1.msra.mxu0 0.0
    %224 = vmatprep.subr.mxu0 0.0
    %225 = vmatpush1.msra.mxu0 0.0
    %226 = vmatprep.subr.mxu0 0.0
    %227 = vmatpush1.msra.mxu0 0.0
    %228 = vmatprep.mubr.f32.mxu0 0.0
    %229 = vmatmul.mubr.f32.gmra.mrb[0].mxu0 %v155
    %v230 = vpop.f32.mrb[0].mxu0
    %v231 = vadd.f32 0.0, %v230
    %v232 = vpop.f32.mrb[0].mxu0
    %233 = vmatprep.mubr.f32.mxu0 0.0
    %234 = vmatmul.mubr.f32.gmra.mrb[0].mxu0 %v158
    %v235 = vpop.f32.mrb[0].mxu0
    %v236 = vadd.f32 0.0, %v235
    %v237 = vpop.f32.mrb[0].mxu0
    %238 = vdwg.mxu0
    %v239 = vld [vmem:[#allocation7] sm:$0x1]
    %v241 = vlaneseq
    %v242 = vshrl.u32 %v241, 7
    %v243 = vsub.s32 0, %v242
    %v244 = vrot.slane %v239, %v243
    %vm246 = vcmask 130048
    %v248 = vsel %vm246, %v139, 0
    %v251 = vsel %vm246, %v140, 0
    %253 = vmatprep.subr.mxu0 0.0
    %254 = vmatpush1.msra.mxu0 %v231
    %255 = vmatprep.subr.mxu0 0.0
    %256 = vmatpush1.msra.mxu0 %v236
    %257 = vmatprep.subr.mxu0 0.0
    %258 = vmatpush1.msra.mxu0 0.0
    %259 = vmatprep.subr.mxu0 0.0
    %260 = vmatpush1.msra.mxu0 0.0
    %261 = vmatprep.subr.mxu0 0.0
    %262 = vmatpush1.msra.mxu0 0.0
    %263 = vmatprep.subr.mxu0 0.0
    %264 = vmatpush1.msra.mxu0 0.0
    %265 = vmatprep.subr.mxu0 0.0
    %266 = vmatpush1.msra.mxu0 0.0
    %267 = vmatprep.subr.mxu0 0.0
    %268 = vmatpush1.msra.mxu0 0.0
    %269 = vmatprep.subr.mxu0 0.0
    %270 = vmatpush1.msra.mxu0 0.0
    %271 = vmatprep.subr.mxu0 0.0
    %272 = vmatpush1.msra.mxu0 0.0
    %273 = vmatprep.subr.mxu0 0.0
    %274 = vmatpush1.msra.mxu0 0.0
    %275 = vmatprep.subr.mxu0 0.0
    %276 = vmatpush1.msra.mxu0 0.0
    %277 = vmatprep.subr.mxu0 0.0
    %278 = vmatpush1.msra.mxu0 0.0
    %279 = vmatprep.subr.mxu0 0.0
    %280 = vmatpush1.msra.mxu0 0.0
    %281 = vmatprep.subr.mxu0 0.0
    %282 = vmatpush1.msra.mxu0 0.0
    %283 = vmatprep.subr.mxu0 0.0
    %284 = vmatpush1.msra.mxu0 0.0
    %285 = vmatprep.subr.mxu0 0.0
    %286 = vmatpush1.msra.mxu0 0.0
    %287 = vmatprep.subr.mxu0 0.0
    %288 = vmatpush1.msra.mxu0 0.0
    %289 = vmatprep.subr.mxu0 0.0
    %290 = vmatpush1.msra.mxu0 0.0
    %291 = vmatprep.subr.mxu0 0.0
    %292 = vmatpush1.msra.mxu0 0.0
    %293 = vmatprep.subr.mxu0 0.0
    %294 = vmatpush1.msra.mxu0 0.0
    %295 = vmatprep.subr.mxu0 0.0
    %296 = vmatpush1.msra.mxu0 0.0
    %297 = vmatprep.subr.mxu0 0.0
    %298 = vmatpush1.msra.mxu0 0.0
    %299 = vmatprep.subr.mxu0 0.0
    %300 = vmatpush1.msra.mxu0 0.0
    %301 = vmatprep.subr.mxu0 0.0
    %302 = vmatpush1.msra.mxu0 0.0
    %303 = vmatprep.subr.mxu0 0.0
    %304 = vmatpush1.msra.mxu0 0.0
    %305 = vmatprep.subr.mxu0 0.0
    %306 = vmatpush1.msra.mxu0 0.0
    %307 = vmatprep.subr.mxu0 0.0
    %308 = vmatpush1.msra.mxu0 0.0
    %309 = vmatprep.subr.mxu0 0.0
    %310 = vmatpush1.msra.mxu0 0.0
    %311 = vmatprep.subr.mxu0 0.0
    %312 = vmatpush1.msra.mxu0 0.0
    %313 = vmatprep.subr.mxu0 0.0
    %314 = vmatpush1.msra.mxu0 0.0
    %315 = vmatprep.subr.mxu0 0.0
    %316 = vmatpush1.msra.mxu0 0.0
    %317 = vmatprep.mubr.f32.mxu0 0.0
    %318 = vmatmul.mubr.f32.gmra.mrb[0].mxu0 %v248
    %v319 = vpop.f32.mrb[0].mxu0
    %v320 = vadd.f32 %v244, %v319
    %v321 = vpop.f32.mrb[0].mxu0
    %322 = vmatprep.mubr.f32.mxu0 0.0
    %323 = vmatmul.mubr.f32.gmra.mrb[0].mxu0 %v251
    %v324 = vpop.f32.mrb[0].mxu0
    %v325 = vadd.f32 %v244, %v324
    %v326 = vpop.f32.mrb[0].mxu0
    %327 = vdwg.mxu0
    %v328 = vmax.f32 %v320, 0.0
    %v329 = vmax.f32 %v325, 0.0
    %v330 = vld [vmem:[#allocation8] sm:$0xff]
    %v331 = vld [vmem:[#allocation8 + $0x8] sm:$0xff]
    %v332 = vld [vmem:[#allocation8 + $0x10] sm:$0xff]
    %v333 = vld [vmem:[#allocation8 + $0x18] sm:$0xff]
    %v334 = vld [vmem:[#allocation8 + $0x20] sm:$0xff]
    %v335 = vld [vmem:[#allocation8 + $0x28] sm:$0xff]
    %v336 = vld [vmem:[#allocation8 + $0x30] sm:$0xff]
    %v337 = vld [vmem:[#allocation8 + $0x38] sm:$0xff]
    %v338 = vld [vmem:[#allocation8 + $0x40] sm:$0xff]
    %v339 = vld [vmem:[#allocation8 + $0x48] sm:$0xff]
    %v340 = vld [vmem:[#allocation8 + $0x50] sm:$0xff]
    %v341 = vld [vmem:[#allocation8 + $0x58] sm:$0xff]
    %v342 = vld [vmem:[#allocation8 + $0x60] sm:$0xff]
    %v343 = vld [vmem:[#allocation8 + $0x68] sm:$0xff]
    %v344 = vld [vmem:[#allocation8 + $0x70] sm:$0xff]
    %v345 = vld [vmem:[#allocation8 + $0x78] sm:$0xff]
    %v346 = vld [vmem:[#allocation8 + $0x80] sm:$0xff]
    %v347 = vld [vmem:[#allocation8 + $0x88] sm:$0xff]
    %v348 = vld [vmem:[#allocation8 + $0x90] sm:$0x3f]
    %v349 = vld [vmem:[#allocation8 + $0x98] sm:$0x3f]
    %v351 = vsel %vm153, %v328, 0
    %v354 = vsel %vm153, %v329, 0
    %v357 = vsel %vm160, %v348, 0
    %v360 = vsel %vm160, %v349, 0
    %362 = vmatprep.subr.mxu0 %v331
    %363 = vmatpush1.msra.mxu0 %v330
    %364 = vmatprep.subr.mxu0 %v333
    %365 = vmatpush1.msra.mxu0 %v332
    %366 = vmatprep.subr.mxu0 %v335
    %367 = vmatpush1.msra.mxu0 %v334
    %368 = vmatprep.subr.mxu0 %v337
    %369 = vmatpush1.msra.mxu0 %v336
    %370 = vmatprep.subr.mxu0 %v339
    %371 = vmatpush1.msra.mxu0 %v338
    %372 = vmatprep.subr.mxu0 %v341
    %373 = vmatpush1.msra.mxu0 %v340
    %374 = vmatprep.subr.mxu0 %v343
    %375 = vmatpush1.msra.mxu0 %v342
    %376 = vmatprep.subr.mxu0 %v345
    %377 = vmatpush1.msra.mxu0 %v344
    %378 = vmatprep.subr.mxu0 %v347
    %379 = vmatpush1.msra.mxu0 %v346
    %380 = vmatprep.subr.mxu0 %v360
    %381 = vmatpush1.msra.mxu0 %v357
    %382 = vmatprep.subr.mxu0 0.0
    %383 = vmatpush1.msra.mxu0 0.0
    %384 = vmatprep.subr.mxu0 0.0
    %385 = vmatpush1.msra.mxu0 0.0
    %386 = vmatprep.subr.mxu0 0.0
    %387 = vmatpush1.msra.mxu0 0.0
    %388 = vmatprep.subr.mxu0 0.0
    %389 = vmatpush1.msra.mxu0 0.0
    %390 = vmatprep.subr.mxu0 0.0
    %391 = vmatpush1.msra.mxu0 0.0
    %392 = vmatprep.subr.mxu0 0.0
    %393 = vmatpush1.msra.mxu0 0.0
    %394 = vmatprep.subr.mxu0 0.0
    %395 = vmatpush1.msra.mxu0 0.0
    %396 = vmatprep.subr.mxu0 0.0
    %397 = vmatpush1.msra.mxu0 0.0
    %398 = vmatprep.subr.mxu0 0.0
    %399 = vmatpush1.msra.mxu0 0.0
    %400 = vmatprep.subr.mxu0 0.0
    %401 = vmatpush1.msra.mxu0 0.0
    %402 = vmatprep.subr.mxu0 0.0
    %403 = vmatpush1.msra.mxu0 0.0
    %404 = vmatprep.subr.mxu0 0.0
    %405 = vmatpush1.msra.mxu0 0.0
    %406 = vmatprep.subr.mxu0 0.0
    %407 = vmatpush1.msra.mxu0 0.0
    %408 = vmatprep.subr.mxu0 0.0
    %409 = vmatpush1.msra.mxu0 0.0
    %410 = vmatprep.subr.mxu0 0.0
    %411 = vmatpush1.msra.mxu0 0.0
    %412 = vmatprep.subr.mxu0 0.0
    %413 = vmatpush1.msra.mxu0 0.0
    %414 = vmatprep.subr.mxu0 0.0
    %415 = vmatpush1.msra.mxu0 0.0
    %416 = vmatprep.subr.mxu0 0.0
    %417 = vmatpush1.msra.mxu0 0.0
    %418 = vmatprep.subr.mxu0 0.0
    %419 = vmatpush1.msra.mxu0 0.0
    %420 = vmatprep.subr.mxu0 0.0
    %421 = vmatpush1.msra.mxu0 0.0
    %422 = vmatprep.subr.mxu0 0.0
    %423 = vmatpush1.msra.mxu0 0.0
    %424 = vmatprep.subr.mxu0 0.0
    %425 = vmatpush1.msra.mxu0 0.0
    %426 = vmatprep.mubr.f32.mxu0 0.0
    %427 = vmatmul.mubr.f32.gmra.mrb[0].mxu0 %v351
    %v428 = vpop.f32.mrb[0].mxu0
    %v429 = vadd.f32 0.0, %v428
    %v430 = vpop.f32.mrb[0].mxu0
    %v431 = vadd.f32 0.0, %v430
    %432 = vmatprep.mubr.f32.mxu0 0.0
    %433 = vmatmul.mubr.f32.gmra.mrb[0].mxu0 %v354
    %v434 = vpop.f32.mrb[0].mxu0
    %v435 = vadd.f32 0.0, %v434
    %v436 = vpop.f32.mrb[0].mxu0
    %v437 = vadd.f32 0.0, %v436
    %438 = vdwg.mxu0
    %v439 = vld [vmem:[%s5] sm:$0x3]
    %v441 = vlaneseq
    %v442 = vshrl.u32 %v441, 7
    %v443 = vsub.s32 0, %v442
    %v444 = vrot.slane %v439, %v443
    %v445 = vlaneseq
    %v446 = vshrl.u32 %v445, 7
    %v447 = vsub.s32 1, %v446
    %v448 = vrot.slane %v439, %v447
    %451 = vmatprep.subr.mxu0 %v431
    %452 = vmatpush1.msra.mxu0 %v429
    %453 = vmatprep.subr.mxu0 %v437
    %454 = vmatpush1.msra.mxu0 %v435
    %455 = vmatprep.subr.mxu0 0.0
    %456 = vmatpush1.msra.mxu0 0.0
    %457 = vmatprep.subr.mxu0 0.0
    %458 = vmatpush1.msra.mxu0 0.0
    %459 = vmatprep.subr.mxu0 0.0
    %460 = vmatpush1.msra.mxu0 0.0
    %461 = vmatprep.subr.mxu0 0.0
    %462 = vmatpush1.msra.mxu0 0.0
    %463 = vmatprep.subr.mxu0 0.0
    %464 = vmatpush1.msra.mxu0 0.0
    %465 = vmatprep.subr.mxu0 0.0
    %466 = vmatpush1.msra.mxu0 0.0
    %467 = vmatprep.subr.mxu0 0.0
    %468 = vmatpush1.msra.mxu0 0.0
    %469 = vmatprep.subr.mxu0 0.0
    %470 = vmatpush1.msra.mxu0 0.0
    %471 = vmatprep.subr.mxu0 0.0
    %472 = vmatpush1.msra.mxu0 0.0
    %473 = vmatprep.subr.mxu0 0.0
    %474 = vmatpush1.msra.mxu0 0.0
    %475 = vmatprep.subr.mxu0 0.0
    %476 = vmatpush1.msra.mxu0 0.0
    %477 = vmatprep.subr.mxu0 0.0
    %478 = vmatpush1.msra.mxu0 0.0
    %479 = vmatprep.subr.mxu0 0.0
    %480 = vmatpush1.msra.mxu0 0.0
    %481 = vmatprep.subr.mxu0 0.0
    %482 = vmatpush1.msra.mxu0 0.0
    %483 = vmatprep.subr.mxu0 0.0
    %484 = vmatpush1.msra.mxu0 0.0
    %485 = vmatprep.subr.mxu0 0.0
    %486 = vmatpush1.msra.mxu0 0.0
    %487 = vmatprep.subr.mxu0 0.0
    %488 = vmatpush1.msra.mxu0 0.0
    %489 = vmatprep.subr.mxu0 0.0
    %490 = vmatpush1.msra.mxu0 0.0
    %491 = vmatprep.subr.mxu0 0.0
    %492 = vmatpush1.msra.mxu0 0.0
    %493 = vmatprep.subr.mxu0 0.0
    %494 = vmatpush1.msra.mxu0 0.0
    %495 = vmatprep.subr.mxu0 0.0
    %496 = vmatpush1.msra.mxu0 0.0
    %497 = vmatprep.subr.mxu0 0.0
    %498 = vmatpush1.msra.mxu0 0.0
    %499 = vmatprep.subr.mxu0 0.0
    %500 = vmatpush1.msra.mxu0 0.0
    %501 = vmatprep.subr.mxu0 0.0
    %502 = vmatpush1.msra.mxu0 0.0
    %503 = vmatprep.subr.mxu0 0.0
    %504 = vmatpush1.msra.mxu0 0.0
    %505 = vmatprep.subr.mxu0 0.0
    %506 = vmatpush1.msra.mxu0 0.0
    %507 = vmatprep.subr.mxu0 0.0
    %508 = vmatpush1.msra.mxu0 0.0
    %509 = vmatprep.subr.mxu0 0.0
    %510 = vmatpush1.msra.mxu0 0.0
    %511 = vmatprep.subr.mxu0 0.0
    %512 = vmatpush1.msra.mxu0 0.0
    %513 = vmatprep.subr.mxu0 0.0
    %514 = vmatpush1.msra.mxu0 0.0
    %515 = vmatprep.mubr.f32.mxu0 0.0
    %516 = vmatmul.mubr.f32.gmra.mrb[0].mxu0 %v248
    %v517 = vpop.f32.mrb[0].mxu0
    %v518 = vadd.f32 %v444, %v517
    %v519 = vpop.f32.mrb[0].mxu0
    %v520 = vadd.f32 %v448, %v519
    %521 = vmatprep.mubr.f32.mxu0 0.0
    %522 = vmatmul.mubr.f32.gmra.mrb[0].mxu0 %v251
    %v523 = vpop.f32.mrb[0].mxu0
    %v524 = vadd.f32 %v444, %v523
    %v525 = vpop.f32.mrb[0].mxu0
    %v526 = vadd.f32 %v448, %v525
    %527 = vdwg.mxu0
    %v528 = vmax.f32 %v518, 0.0
    %v529 = vmax.f32 %v520, 0.0
    %v530 = vmax.f32 %v524, 0.0
    %v531 = vmax.f32 %v526, 0.0
    %v532 = vld [vmem:[#allocation10] sm:$0xff]
    %v533 = vld [vmem:[#allocation10 + $0x8] sm:$0xff]
    %v534 = vld [vmem:[#allocation10 + $0x10] sm:$0xff]
    %v535 = vld [vmem:[#allocation10 + $0x18] sm:$0xff]
    %v536 = vld [vmem:[#allocation10 + $0x20] sm:$0xff]
    %v537 = vld [vmem:[#allocation10 + $0x28] sm:$0xff]
    %v538 = vld [vmem:[#allocation10 + $0x30] sm:$0xff]
    %v539 = vld [vmem:[#allocation10 + $0x38] sm:$0xff]
    %v540 = vld [vmem:[#allocation10 + $0x40] sm:$0xff]
    %v541 = vld [vmem:[#allocation10 + $0x48] sm:$0xff]
    %v542 = vld [vmem:[#allocation10 + $0x50] sm:$0xff]
    %v543 = vld [vmem:[#allocation10 + $0x58] sm:$0xff]
    %v544 = vld [vmem:[#allocation10 + $0x60] sm:$0xff]
    %v545 = vld [vmem:[#allocation10 + $0x68] sm:$0xff]
    %v546 = vld [vmem:[#allocation10 + $0x70] sm:$0xff]
    %v547 = vld [vmem:[#allocation10 + $0x78] sm:$0xff]
    %v548 = vld [vmem:[#allocation10 + $0x80] sm:$0xff]
    %v549 = vld [vmem:[#allocation10 + $0x88] sm:$0xff]
    %v550 = vld [vmem:[#allocation10 + $0x90] sm:$0xff]
    %v551 = vld [vmem:[#allocation10 + $0x98] sm:$0xff]
    %v552 = vld [vmem:[#allocation10 + $0xa0] sm:$0xff]
    %v553 = vld [vmem:[#allocation10 + $0xa8] sm:$0xff]
    %v554 = vld [vmem:[#allocation10 + $0xb0] sm:$0xff]
    %v555 = vld [vmem:[#allocation10 + $0xb8] sm:$0xff]
    %v556 = vld [vmem:[#allocation10 + $0xc0] sm:$0xff]
    %v557 = vld [vmem:[#allocation10 + $0xc8] sm:$0xff]
    %v558 = vld [vmem:[#allocation10 + $0xd0] sm:$0xff]
    %v559 = vld [vmem:[#allocation10 + $0xd8] sm:$0xff]
    %v560 = vld [vmem:[#allocation10 + $0xe0] sm:$0xff]
    %v561 = vld [vmem:[#allocation10 + $0xe8] sm:$0xff]
    %v562 = vld [vmem:[#allocation10 + $0xf0] sm:$0xff]
    %v563 = vld [vmem:[#allocation10 + $0xf8] sm:$0xff]
    %v564 = vld [vmem:[#allocation10 + $0x100] sm:$0xff]
    %v565 = vld [vmem:[#allocation10 + $0x108] sm:$0xff]
    %v566 = vld [vmem:[#allocation10 + $0x110] sm:$0xff]
    %v567 = vld [vmem:[#allocation10 + $0x118] sm:$0xff]
    %v568 = vld [vmem:[#allocation10 + $0x120] sm:$0xff]
    %v569 = vld [vmem:[#allocation10 + $0x128] sm:$0xff]
    %v570 = vld [vmem:[#allocation10 + $0x130] sm:$0xff]
    %v571 = vld [vmem:[#allocation10 + $0x138] sm:$0xff]
    %v572 = vld [vmem:[#allocation10 + $0x140] sm:$0xff]
    %v573 = vld [vmem:[#allocation10 + $0x148] sm:$0xff]
    %v574 = vld [vmem:[#allocation10 + $0x150] sm:$0xff]
    %v575 = vld [vmem:[#allocation10 + $0x158] sm:$0xff]
    %v576 = vld [vmem:[#allocation10 + $0x160] sm:$0xff]
    %v577 = vld [vmem:[#allocation10 + $0x168] sm:$0xff]
    %v578 = vld [vmem:[#allocation10 + $0x170] sm:$0xff]
    %v579 = vld [vmem:[#allocation10 + $0x178] sm:$0xff]
    %v580 = vld [vmem:[#allocation10 + $0x180] sm:$0xff]
    %v581 = vld [vmem:[#allocation10 + $0x188] sm:$0xff]
    %v582 = vld [vmem:[#allocation10 + $0x190] sm:$0xff]
    %v583 = vld [vmem:[#allocation10 + $0x198] sm:$0xff]
    %v584 = vld [vmem:[#allocation10 + $0x1a0] sm:$0xff]
    %v585 = vld [vmem:[#allocation10 + $0x1a8] sm:$0xff]
    %v586 = vld [vmem:[#allocation10 + $0x1b0] sm:$0xff]
    %v587 = vld [vmem:[#allocation10 + $0x1b8] sm:$0xff]
    %v588 = vld [vmem:[#allocation10 + $0x1c0] sm:$0xff]
    %v589 = vld [vmem:[#allocation10 + $0x1c8] sm:$0xf]
    %v590 = vld [vmem:[#allocation10 + $0x1d0] sm:$0xf]
    %v591 = vld [vmem:[#allocation10 + $0x1d8] sm:$0xf]
    %vm592 = vcmask 228352
    %v594 = vsel %vm592, %v529, 0
    %v597 = vsel %vm592, %v531, 0
    %vm599 = vcmask 1043456
    %v601 = vsel %vm599, %v589, 0
    %v604 = vsel %vm599, %v590, 0
    %v607 = vsel %vm599, %v591, 0
    %609 = vmatprep.subr.mxu0 %v533
    %610 = vmatpush1.msra.mxu0 %v532
    %611 = vmatprep.subr.mxu0 %v536
    %612 = vmatpush1.msra.mxu0 %v535
    %613 = vmatprep.subr.mxu0 %v539
    %614 = vmatpush1.msra.mxu0 %v538
    %615 = vmatprep.subr.mxu0 %v542
    %616 = vmatpush1.msra.mxu0 %v541
    %617 = vmatprep.subr.mxu0 %v545
    %618 = vmatpush1.msra.mxu0 %v544
    %619 = vmatprep.subr.mxu0 %v548
    %620 = vmatpush1.msra.mxu0 %v547
    %621 = vmatprep.subr.mxu0 %v551
    %622 = vmatpush1.msra.mxu0 %v550
    %623 = vmatprep.subr.mxu0 %v554
    %624 = vmatpush1.msra.mxu0 %v553
    %625 = vmatprep.subr.mxu0 %v557
    %626 = vmatpush1.msra.mxu0 %v556
    %627 = vmatprep.subr.mxu0 %v560
    %628 = vmatpush1.msra.mxu0 %v559
    %629 = vmatprep.subr.mxu0 %v563
    %630 = vmatpush1.msra.mxu0 %v562
    %631 = vmatprep.subr.mxu0 %v566
    %632 = vmatpush1.msra.mxu0 %v565
    %633 = vmatprep.subr.mxu0 %v569
    %634 = vmatpush1.msra.mxu0 %v568
    %635 = vmatprep.subr.mxu0 %v572
    %636 = vmatpush1.msra.mxu0 %v571
    %637 = vmatprep.subr.mxu0 %v575
    %638 = vmatpush1.msra.mxu0 %v574
    %639 = vmatprep.subr.mxu0 %v578
    %640 = vmatpush1.msra.mxu0 %v577
    %641 = vmatprep.subr.mxu0 %v581
    %642 = vmatpush1.msra.mxu0 %v580
    %643 = vmatprep.subr.mxu0 %v584
    %644 = vmatpush1.msra.mxu0 %v583
    %645 = vmatprep.subr.mxu0 %v587
    %646 = vmatpush1.msra.mxu0 %v586
    %647 = vmatprep.subr.mxu0 %v604
    %648 = vmatpush1.msra.mxu0 %v601
    %649 = vmatprep.subr.mxu0 0.0
    %650 = vmatpush1.msra.mxu0 0.0
    %651 = vmatprep.subr.mxu0 0.0
    %652 = vmatpush1.msra.mxu0 0.0
    %653 = vmatprep.subr.mxu0 0.0
    %654 = vmatpush1.msra.mxu0 0.0
    %655 = vmatprep.subr.mxu0 0.0
    %656 = vmatpush1.msra.mxu0 0.0
    %657 = vmatprep.subr.mxu0 0.0
    %658 = vmatpush1.msra.mxu0 0.0
    %659 = vmatprep.subr.mxu0 0.0
    %660 = vmatpush1.msra.mxu0 0.0
    %661 = vmatprep.subr.mxu0 0.0
    %662 = vmatpush1.msra.mxu0 0.0
    %663 = vmatprep.subr.mxu0 0.0
    %664 = vmatpush1.msra.mxu0 0.0
    %665 = vmatprep.subr.mxu0 0.0
    %666 = vmatpush1.msra.mxu0 0.0
    %667 = vmatprep.subr.mxu0 0.0
    %668 = vmatpush1.msra.mxu0 0.0
    %669 = vmatprep.subr.mxu0 0.0
    %670 = vmatpush1.msra.mxu0 0.0
    %671 = vmatprep.subr.mxu0 0.0
    %672 = vmatpush1.msra.mxu0 0.0
    %673 = vmatprep.mubr.f32.mxu0 %v594
    %674 = vmatmul.mubr.f32.gmra.mrb[0].mxu0 %v528
    %v675 = vpop.f32.mrb[0].mxu0
    %v676 = vadd.f32 0.0, %v675
    %v677 = vpop.f32.mrb[0].mxu0
    %v678 = vadd.f32 0.0, %v677
    %679 = vmatprep.mubr.f32.mxu0 %v597
    %680 = vmatmul.mubr.f32.gmra.mrb[0].mxu0 %v530
    %v681 = vpop.f32.mrb[0].mxu0
    %v682 = vadd.f32 0.0, %v681
    %v683 = vpop.f32.mrb[0].mxu0
    %v684 = vadd.f32 0.0, %v683
    %685 = vdwg.mxu0
    %686 = vmatprep.subr.mxu0 0.0
    %687 = vmatpush1.msra.mxu0 %v534
    %688 = vmatprep.subr.mxu0 0.0
    %689 = vmatpush1.msra.mxu0 %v537
    %690 = vmatprep.subr.mxu0 0.0
    %691 = vmatpush1.msra.mxu0 %v540
    %692 = vmatprep.subr.mxu0 0.0
    %693 = vmatpush1.msra.mxu0 %v543
    %694 = vmatprep.subr.mxu0 0.0
    %695 = vmatpush1.msra.mxu0 %v546
    %696 = vmatprep.subr.mxu0 0.0
    %697 = vmatpush1.msra.mxu0 %v549
    %698 = vmatprep.subr.mxu0 0.0
    %699 = vmatpush1.msra.mxu0 %v552
    %700 = vmatprep.subr.mxu0 0.0
    %701 = vmatpush1.msra.mxu0 %v555
    %702 = vmatprep.subr.mxu0 0.0
    %703 = vmatpush1.msra.mxu0 %v558
    %704 = vmatprep.subr.mxu0 0.0
    %705 = vmatpush1.msra.mxu0 %v561
    %706 = vmatprep.subr.mxu0 0.0
    %707 = vmatpush1.msra.mxu0 %v564
    %708 = vmatprep.subr.mxu0 0.0
    %709 = vmatpush1.msra.mxu0 %v567
    %710 = vmatprep.subr.mxu0 0.0
    %711 = vmatpush1.msra.mxu0 %v570
    %712 = vmatprep.subr.mxu0 0.0
    %713 = vmatpush1.msra.mxu0 %v573
    %714 = vmatprep.subr.mxu0 0.0
    %715 = vmatpush1.msra.mxu0 %v576
    %716 = vmatprep.subr.mxu0 0.0
    %717 = vmatpush1.msra.mxu0 %v579
    %718 = vmatprep.subr.mxu0 0.0
    %719 = vmatpush1.msra.mxu0 %v582
    %720 = vmatprep.subr.mxu0 0.0
    %721 = vmatpush1.msra.mxu0 %v585
    %722 = vmatprep.subr.mxu0 0.0
    %723 = vmatpush1.msra.mxu0 %v588
    %724 = vmatprep.subr.mxu0 0.0
    %725 = vmatpush1.msra.mxu0 %v607
    %726 = vmatprep.subr.mxu0 0.0
    %727 = vmatpush1.msra.mxu0 0.0
    %728 = vmatprep.subr.mxu0 0.0
    %729 = vmatpush1.msra.mxu0 0.0
    %730 = vmatprep.subr.mxu0 0.0
    %731 = vmatpush1.msra.mxu0 0.0
    %732 = vmatprep.subr.mxu0 0.0
    %733 = vmatpush1.msra.mxu0 0.0
    %734 = vmatprep.subr.mxu0 0.0
    %735 = vmatpush1.msra.mxu0 0.0
    %736 = vmatprep.subr.mxu0 0.0
    %737 = vmatpush1.msra.mxu0 0.0
    %738 = vmatprep.subr.mxu0 0.0
    %739 = vmatpush1.msra.mxu0 0.0
    %740 = vmatprep.subr.mxu0 0.0
    %741 = vmatpush1.msra.mxu0 0.0
    %742 = vmatprep.subr.mxu0 0.0
    %743 = vmatpush1.msra.mxu0 0.0
    %744 = vmatprep.subr.mxu0 0.0
    %745 = vmatpush1.msra.mxu0 0.0
    %746 = vmatprep.subr.mxu0 0.0
    %747 = vmatpush1.msra.mxu0 0.0
    %748 = vmatprep.subr.mxu0 0.0
    %749 = vmatpush1.msra.mxu0 0.0
    %750 = vmatprep.mubr.f32.mxu0 %v594
    %751 = vmatmul.mubr.f32.gmra.mrb[0].mxu0 %v528
    %v752 = vpop.f32.mrb[0].mxu0
    %v753 = vadd.f32 0.0, %v752
    %v754 = vpop.f32.mrb[0].mxu0
    %755 = vmatprep.mubr.f32.mxu0 %v597
    %756 = vmatmul.mubr.f32.gmra.mrb[0].mxu0 %v530
    %v757 = vpop.f32.mrb[0].mxu0
    %v758 = vadd.f32 0.0, %v757
    %v759 = vpop.f32.mrb[0].mxu0
    %760 = vdwg.mxu0
    %v761 = vld [vmem:[%s7] sm:$0x7]
    %v763 = vlaneseq
    %v764 = vshrl.u32 %v763, 7
    %v765 = vsub.s32 0, %v764
    %v766 = vrot.slane %v761, %v765
    %v767 = vlaneseq
    %v768 = vshrl.u32 %v767, 7
    %v769 = vsub.s32 1, %v768
    %v770 = vrot.slane %v761, %v769
    %v771 = vlaneseq
    %v772 = vshrl.u32 %v771, 7
    %v773 = vsub.s32 2, %v772
    %v774 = vrot.slane %v761, %v773
    %778 = vmatprep.subr.mxu0 %v678
    %779 = vmatpush1.msra.mxu0 %v676
    %780 = vmatprep.subr.mxu0 %v684
    %781 = vmatpush1.msra.mxu0 %v682
    %782 = vmatprep.subr.mxu0 0.0
    %783 = vmatpush1.msra.mxu0 0.0
    %784 = vmatprep.subr.mxu0 0.0
    %785 = vmatpush1.msra.mxu0 0.0
    %786 = vmatprep.subr.mxu0 0.0
    %787 = vmatpush1.msra.mxu0 0.0
    %788 = vmatprep.subr.mxu0 0.0
    %789 = vmatpush1.msra.mxu0 0.0
    %790 = vmatprep.subr.mxu0 0.0
    %791 = vmatpush1.msra.mxu0 0.0
    %792 = vmatprep.subr.mxu0 0.0
    %793 = vmatpush1.msra.mxu0 0.0
    %794 = vmatprep.subr.mxu0 0.0
    %795 = vmatpush1.msra.mxu0 0.0
    %796 = vmatprep.subr.mxu0 0.0
    %797 = vmatpush1.msra.mxu0 0.0
    %798 = vmatprep.subr.mxu0 0.0
    %799 = vmatpush1.msra.mxu0 0.0
    %800 = vmatprep.subr.mxu0 0.0
    %801 = vmatpush1.msra.mxu0 0.0
    %802 = vmatprep.subr.mxu0 0.0
    %803 = vmatpush1.msra.mxu0 0.0
    %804 = vmatprep.subr.mxu0 0.0
    %805 = vmatpush1.msra.mxu0 0.0
    %806 = vmatprep.subr.mxu0 0.0
    %807 = vmatpush1.msra.mxu0 0.0
    %808 = vmatprep.subr.mxu0 0.0
    %809 = vmatpush1.msra.mxu0 0.0
    %810 = vmatprep.subr.mxu0 0.0
    %811 = vmatpush1.msra.mxu0 0.0
    %812 = vmatprep.subr.mxu0 0.0
    %813 = vmatpush1.msra.mxu0 0.0
    %814 = vmatprep.subr.mxu0 0.0
    %815 = vmatpush1.msra.mxu0 0.0
    %816 = vmatprep.subr.mxu0 0.0
    %817 = vmatpush1.msra.mxu0 0.0
    %818 = vmatprep.subr.mxu0 0.0
    %819 = vmatpush1.msra.mxu0 0.0
    %820 = vmatprep.subr.mxu0 0.0
    %821 = vmatpush1.msra.mxu0 0.0
    %822 = vmatprep.subr.mxu0 0.0
    %823 = vmatpush1.msra.mxu0 0.0
    %824 = vmatprep.subr.mxu0 0.0
    %825 = vmatpush1.msra.mxu0 0.0
    %826 = vmatprep.subr.mxu0 0.0
    %827 = vmatpush1.msra.mxu0 0.0
    %828 = vmatprep.subr.mxu0 0.0
    %829 = vmatpush1.msra.mxu0 0.0
    %830 = vmatprep.subr.mxu0 0.0
    %831 = vmatpush1.msra.mxu0 0.0
    %832 = vmatprep.subr.mxu0 0.0
    %833 = vmatpush1.msra.mxu0 0.0
    %834 = vmatprep.subr.mxu0 0.0
    %835 = vmatpush1.msra.mxu0 0.0
    %836 = vmatprep.subr.mxu0 0.0
    %837 = vmatpush1.msra.mxu0 0.0
    %838 = vmatprep.subr.mxu0 0.0
    %839 = vmatpush1.msra.mxu0 0.0
    %840 = vmatprep.subr.mxu0 0.0
    %841 = vmatpush1.msra.mxu0 0.0
    %842 = vmatprep.mubr.f32.mxu0 0.0
    %843 = vmatmul.mubr.f32.gmra.mrb[0].mxu0 %v248
    %v844 = vpop.f32.mrb[0].mxu0
    %v845 = vadd.f32 %v766, %v844
    %v846 = vpop.f32.mrb[0].mxu0
    %v847 = vadd.f32 %v770, %v846
    %848 = vmatprep.mubr.f32.mxu0 0.0
    %849 = vmatmul.mubr.f32.gmra.mrb[0].mxu0 %v251
    %v850 = vpop.f32.mrb[0].mxu0
    %v851 = vadd.f32 %v766, %v850
    %v852 = vpop.f32.mrb[0].mxu0
    %v853 = vadd.f32 %v770, %v852
    %854 = vdwg.mxu0
    %855 = vmatprep.subr.mxu0 0.0
    %856 = vmatpush1.msra.mxu0 %v753
    %857 = vmatprep.subr.mxu0 0.0
    %858 = vmatpush1.msra.mxu0 %v758
    %859 = vmatprep.subr.mxu0 0.0
    %860 = vmatpush1.msra.mxu0 0.0
    %861 = vmatprep.subr.mxu0 0.0
    %862 = vmatpush1.msra.mxu0 0.0
    %863 = vmatprep.subr.mxu0 0.0
    %864 = vmatpush1.msra.mxu0 0.0
    %865 = vmatprep.subr.mxu0 0.0
    %866 = vmatpush1.msra.mxu0 0.0
    %867 = vmatprep.subr.mxu0 0.0
    %868 = vmatpush1.msra.mxu0 0.0
    %869 = vmatprep.subr.mxu0 0.0
    %870 = vmatpush1.msra.mxu0 0.0
    %871 = vmatprep.subr.mxu0 0.0
    %872 = vmatpush1.msra.mxu0 0.0
    %873 = vmatprep.subr.mxu0 0.0
    %874 = vmatpush1.msra.mxu0 0.0
    %875 = vmatprep.subr.mxu0 0.0
    %876 = vmatpush1.msra.mxu0 0.0
    %877 = vmatprep.subr.mxu0 0.0
    %878 = vmatpush1.msra.mxu0 0.0
    %879 = vmatprep.subr.mxu0 0.0
    %880 = vmatpush1.msra.mxu0 0.0
    %881 = vmatprep.subr.mxu0 0.0
    %882 = vmatpush1.msra.mxu0 0.0
    %883 = vmatprep.subr.mxu0 0.0
    %884 = vmatpush1.msra.mxu0 0.0
    %885 = vmatprep.subr.mxu0 0.0
    %886 = vmatpush1.msra.mxu0 0.0
    %887 = vmatprep.subr.mxu0 0.0
    %888 = vmatpush1.msra.mxu0 0.0
    %889 = vmatprep.subr.mxu0 0.0
    %890 = vmatpush1.msra.mxu0 0.0
    %891 = vmatprep.subr.mxu0 0.0
    %892 = vmatpush1.msra.mxu0 0.0
    %893 = vmatprep.subr.mxu0 0.0
    %894 = vmatpush1.msra.mxu0 0.0
    %895 = vmatprep.subr.mxu0 0.0
    %896 = vmatpush1.msra.mxu0 0.0
    %897 = vmatprep.subr.mxu0 0.0
    %898 = vmatpush1.msra.mxu0 0.0
    %899 = vmatprep.subr.mxu0 0.0
    %900 = vmatpush1.msra.mxu0 0.0
    %901 = vmatprep.subr.mxu0 0.0
    %902 = vmatpush1.msra.mxu0 0.0
    %903 = vmatprep.subr.mxu0 0.0
    %904 = vmatpush1.msra.mxu0 0.0
    %905 = vmatprep.subr.mxu0 0.0
    %906 = vmatpush1.msra.mxu0 0.0
    %907 = vmatprep.subr.mxu0 0.0
    %908 = vmatpush1.msra.mxu0 0.0
    %909 = vmatprep.subr.mxu0 0.0
    %910 = vmatpush1.msra.mxu0 0.0
    %911 = vmatprep.subr.mxu0 0.0
    %912 = vmatpush1.msra.mxu0 0.0
    %913 = vmatprep.subr.mxu0 0.0
    %914 = vmatpush1.msra.mxu0 0.0
    %915 = vmatprep.subr.mxu0 0.0
    %916 = vmatpush1.msra.mxu0 0.0
    %917 = vmatprep.subr.mxu0 0.0
    %918 = vmatpush1.msra.mxu0 0.0
    %919 = vmatprep.mubr.f32.mxu0 0.0
    %920 = vmatmul.mubr.f32.gmra.mrb[0].mxu0 %v248
    %v921 = vpop.f32.mrb[0].mxu0
    %v922 = vadd.f32 %v774, %v921
    %v923 = vpop.f32.mrb[0].mxu0
    %924 = vmatprep.mubr.f32.mxu0 0.0
    %925 = vmatmul.mubr.f32.gmra.mrb[0].mxu0 %v251
    %v926 = vpop.f32.mrb[0].mxu0
    %v927 = vadd.f32 %v774, %v926
    %v928 = vpop.f32.mrb[0].mxu0
    %929 = vdwg.mxu0
    %v930 = vmax.f32 %v845, 0.0
    %v931 = vmax.f32 %v847, 0.0
    %v932 = vmax.f32 %v922, 0.0
    %v933 = vmax.f32 %v851, 0.0
    %v934 = vmax.f32 %v853, 0.0
    %v935 = vmax.f32 %v927, 0.0
    %v936 = vld [vmem:[%s8] sm:$0xff]
    %v937 = vld [vmem:[%s8 + $0x8] sm:$0xff]
    %v938 = vlaneseq
    %v939 = vshrl.u32 %v938, 7
    %v940 = vsub.s32 0, %v939
    %v941 = vrot.slane %v936, %v940
    %943 = vbcast.lane.b32.xlu0 %v941, 256
    %v944 = vpop.permute.xlu0 %943
    %v945 = vlaneseq
    %v946 = vshrl.u32 %v945, 7
    %v947 = vsub.s32 1, %v946
    %v948 = vrot.slane %v936, %v947
    %950 = vbcast.lane.b32.xlu0 %v948, 256
    %v951 = vpop.permute.xlu0 %950
    %v952 = vlaneseq
    %v953 = vshrl.u32 %v952, 7
    %v954 = vsub.s32 2, %v953
    %v955 = vrot.slane %v936, %v954
    %957 = vbcast.lane.b32.xlu0 %v955, 256
    %v958 = vpop.permute.xlu0 %957
    %v959 = vlaneseq
    %v960 = vshrl.u32 %v959, 7
    %v961 = vsub.s32 3, %v960
    %v962 = vrot.slane %v936, %v961
    %964 = vbcast.lane.b32.xlu0 %v962, 256
    %v965 = vpop.permute.xlu0 %964
    %v966 = vlaneseq
    %v967 = vshrl.u32 %v966, 7
    %v968 = vsub.s32 4, %v967
    %v969 = vrot.slane %v936, %v968
    %971 = vbcast.lane.b32.xlu0 %v969, 256
    %v972 = vpop.permute.xlu0 %971
    %v973 = vlaneseq
    %v974 = vshrl.u32 %v973, 7
    %v975 = vsub.s32 5, %v974
    %v976 = vrot.slane %v936, %v975
    %978 = vbcast.lane.b32.xlu0 %v976, 256
    %v979 = vpop.permute.xlu0 %978
    %v980 = vlaneseq
    %v981 = vshrl.u32 %v980, 7
    %v982 = vsub.s32 6, %v981
    %v983 = vrot.slane %v936, %v982
    %985 = vbcast.lane.b32.xlu0 %v983, 256
    %v986 = vpop.permute.xlu0 %985
    %v987 = vlaneseq
    %v988 = vshrl.u32 %v987, 7
    %v989 = vsub.s32 7, %v988
    %v990 = vrot.slane %v936, %v989
    %992 = vbcast.lane.b32.xlu0 %v990, 256
    %v993 = vpop.permute.xlu0 %992
    %v994 = vlaneseq
    %v995 = vshrl.u32 %v994, 7
    %v996 = vsub.s32 0, %v995
    %v997 = vrot.slane %v937, %v996
    %999 = vbcast.lane.b32.xlu0 %v997, 256
    %v1000 = vpop.permute.xlu0 %999
    %v1001 = vlaneseq
    %v1002 = vshrl.u32 %v1001, 7
    %v1003 = vsub.s32 1, %v1002
    %v1004 = vrot.slane %v937, %v1003
    %1006 = vbcast.lane.b32.xlu0 %v1004, 256
    %v1007 = vpop.permute.xlu0 %1006
    %v1008 = vlaneseq
    %v1009 = vshrl.u32 %v1008, 7
    %v1010 = vsub.s32 2, %v1009
    %v1011 = vrot.slane %v937, %v1010
    %1013 = vbcast.lane.b32.xlu0 %v1011, 256
    %v1014 = vpop.permute.xlu0 %1013
    %v1015 = vlaneseq
    %v1016 = vshrl.u32 %v1015, 7
    %v1017 = vsub.s32 3, %v1016
    %v1018 = vrot.slane %v937, %v1017
    %1020 = vbcast.lane.b32.xlu0 %v1018, 256
    %v1021 = vpop.permute.xlu0 %1020
    %v1022 = vlaneseq
    %v1023 = vshrl.u32 %v1022, 7
    %v1024 = vsub.s32 4, %v1023
    %v1025 = vrot.slane %v937, %v1024
    %1027 = vbcast.lane.b32.xlu0 %v1025, 256
    %v1028 = vpop.permute.xlu0 %1027
    %v1029 = vlaneseq
    %v1030 = vshrl.u32 %v1029, 7
    %v1031 = vsub.s32 5, %v1030
    %v1032 = vrot.slane %v937, %v1031
    %1034 = vbcast.lane.b32.xlu0 %v1032, 256
    %v1035 = vpop.permute.xlu0 %1034
    %v1036 = vlaneseq
    %v1037 = vshrl.u32 %v1036, 7
    %v1038 = vsub.s32 6, %v1037
    %v1039 = vrot.slane %v937, %v1038
    %1041 = vbcast.lane.b32.xlu0 %v1039, 256
    %v1042 = vpop.permute.xlu0 %1041
    %v1043 = vlaneseq
    %v1044 = vshrl.u32 %v1043, 7
    %v1045 = vsub.s32 7, %v1044
    %v1046 = vrot.slane %v937, %v1045
    %1048 = vbcast.lane.b32.xlu0 %v1046, 256
    %v1049 = vpop.permute.xlu0 %1048
    %vm1050 = vcmp.gt.f32.partialorder %v944, 0.0
    %vm1051 = vcmp.gt.f32.partialorder %v951, 0.0
    %vm1052 = vcmp.gt.f32.partialorder %v958, 0.0
    %vm1053 = vcmp.gt.f32.partialorder %v965, 0.0
    %vm1054 = vcmp.gt.f32.partialorder %v972, 0.0
    %vm1055 = vcmp.gt.f32.partialorder %v979, 0.0
    %vm1056 = vcmp.gt.f32.partialorder %v986, 0.0
    %vm1057 = vcmp.gt.f32.partialorder %v993, 0.0
    %vm1058 = vcmp.gt.f32.partialorder %v1000, 0.0
    %vm1059 = vcmp.gt.f32.partialorder %v1007, 0.0
    %vm1060 = vcmp.gt.f32.partialorder %v1014, 0.0
    %vm1061 = vcmp.gt.f32.partialorder %v1021, 0.0
    %vm1062 = vcmp.gt.f32.partialorder %v1028, 0.0
    %vm1063 = vcmp.gt.f32.partialorder %v1035, 0.0
    %vm1064 = vcmp.gt.f32.partialorder %v1042, 0.0
    %vm1065 = vcmp.gt.f32.partialorder %v1049, 0.0
    %v1072 = vcombine.low %v930, %v931
    %v1073 = vcombine.high %v930, %v931
    %v1074 = vcombine.high %v932, %v932
    %v1076 = vunpack.c.l.s4 1966171168
    %v1077 = vunpack.c.0.s8 %v1076
    %v1078 = vlaneseq
    %v1079 = vshrl.u32 %v1078, 7
    %v1080 = vsub.s32 %v1077, %v1079
    %v1081 = vrot.slane %v1072, %v1080
    %v1083 = vunpack.c.l.s4 1966171168
    %v1084 = vunpack.c.0.s8 %v1083
    %v1085 = vlaneseq
    %v1086 = vshrl.u32 %v1085, 7
    %v1087 = vsub.s32 %v1084, %v1086
    %v1088 = vrot.slane %v1073, %v1087
    %v1090 = vunpack.c.l.s4 1966171168
    %v1091 = vunpack.c.0.s8 %v1090
    %v1092 = vlaneseq
    %v1093 = vshrl.u32 %v1092, 7
    %v1094 = vsub.s32 %v1091, %v1093
    %v1095 = vrot.slane %v932, %v1094
    %v1097 = vunpack.c.l.s4 1966171168
    %v1098 = vunpack.c.0.s8 %v1097
    %v1099 = vlaneseq
    %v1100 = vshrl.u32 %v1099, 7
    %v1101 = vsub.s32 %v1098, %v1100
    %v1102 = vrot.slane %v1074, %v1101
    %v1103 = vcombine.low %v1081, %v1095
    %v1104 = vcombine.high %v1081, %v1095
    %v1105 = vcombine.low %v1088, %v1102
    %v1106 = vcombine.high %v1088, %v1102
    %v1108 = vunpack.c.l.s4 1966171168
    %v1109 = vunpack.c.0.s8 %v1108
    %v1110 = vlaneseq
    %v1111 = vshrl.u32 %v1110, 7
    %v1112 = vsub.s32 %v1109, %v1111
    %v1113 = vrot.slane %v1103, %v1112
    %v1115 = vunpack.c.l.s4 1966171168
    %v1116 = vunpack.c.0.s8 %v1115
    %v1117 = vlaneseq
    %v1118 = vshrl.u32 %v1117, 7
    %v1119 = vsub.s32 %v1116, %v1118
    %v1120 = vrot.slane %v1105, %v1119
    %v1122 = vunpack.c.l.s4 1966171168
    %v1123 = vunpack.c.0.s8 %v1122
    %v1124 = vlaneseq
    %v1125 = vshrl.u32 %v1124, 7
    %v1126 = vsub.s32 %v1123, %v1125
    %v1127 = vrot.slane %v1104, %v1126
    %v1129 = vunpack.c.l.s4 1966171168
    %v1130 = vunpack.c.0.s8 %v1129
    %v1131 = vlaneseq
    %v1132 = vshrl.u32 %v1131, 7
    %v1133 = vsub.s32 %v1130, %v1132
    %v1134 = vrot.slane %v1106, %v1133
    %v1135 = vcombine.high %v1113, %v1113
    %v1136 = vcombine.high %v1120, %v1120
    %v1137 = vcombine.high %v1127, %v1127
    %v1138 = vcombine.high %v1134, %v1134
    %v1139 = vcombine.low %v933, %v934
    %v1140 = vcombine.high %v933, %v934
    %v1141 = vcombine.high %v935, %v935
    %v1143 = vunpack.c.l.s4 1966171168
    %v1144 = vunpack.c.0.s8 %v1143
    %v1145 = vlaneseq
    %v1146 = vshrl.u32 %v1145, 7
    %v1147 = vsub.s32 %v1144, %v1146
    %v1148 = vrot.slane %v1139, %v1147
    %v1150 = vunpack.c.l.s4 1966171168
    %v1151 = vunpack.c.0.s8 %v1150
    %v1152 = vlaneseq
    %v1153 = vshrl.u32 %v1152, 7
    %v1154 = vsub.s32 %v1151, %v1153
    %v1155 = vrot.slane %v1140, %v1154
    %v1157 = vunpack.c.l.s4 1966171168
    %v1158 = vunpack.c.0.s8 %v1157
    %v1159 = vlaneseq
    %v1160 = vshrl.u32 %v1159, 7
    %v1161 = vsub.s32 %v1158, %v1160
    %v1162 = vrot.slane %v935, %v1161
    %v1164 = vunpack.c.l.s4 1966171168
    %v1165 = vunpack.c.0.s8 %v1164
    %v1166 = vlaneseq
    %v1167 = vshrl.u32 %v1166, 7
    %v1168 = vsub.s32 %v1165, %v1167
    %v1169 = vrot.slane %v1141, %v1168
    %v1170 = vcombine.low %v1148, %v1162
    %v1171 = vcombine.high %v1148, %v1162
    %v1172 = vcombine.low %v1155, %v1169
    %v1173 = vcombine.high %v1155, %v1169
    %v1175 = vunpack.c.l.s4 1966171168
    %v1176 = vunpack.c.0.s8 %v1175
    %v1177 = vlaneseq
    %v1178 = vshrl.u32 %v1177, 7
    %v1179 = vsub.s32 %v1176, %v1178
    %v1180 = vrot.slane %v1170, %v1179
    %v1182 = vunpack.c.l.s4 1966171168
    %v1183 = vunpack.c.0.s8 %v1182
    %v1184 = vlaneseq
    %v1185 = vshrl.u32 %v1184, 7
    %v1186 = vsub.s32 %v1183, %v1185
    %v1187 = vrot.slane %v1172, %v1186
    %v1189 = vunpack.c.l.s4 1966171168
    %v1190 = vunpack.c.0.s8 %v1189
    %v1191 = vlaneseq
    %v1192 = vshrl.u32 %v1191, 7
    %v1193 = vsub.s32 %v1190, %v1192
    %v1194 = vrot.slane %v1171, %v1193
    %v1196 = vunpack.c.l.s4 1966171168
    %v1197 = vunpack.c.0.s8 %v1196
    %v1198 = vlaneseq
    %v1199 = vshrl.u32 %v1198, 7
    %v1200 = vsub.s32 %v1197, %v1199
    %v1201 = vrot.slane %v1173, %v1200
    %v1202 = vcombine.high %v1180, %v1180
    %v1203 = vcombine.high %v1187, %v1187
    %v1204 = vcombine.high %v1194, %v1194
    %v1205 = vcombine.high %v1201, %v1201
    %v1206 = vsel %vm1050, 1, 0
    %v1207 = vsel %vm1051, 1, 0
    %v1208 = vsel %vm1052, 1, 0
    %v1209 = vsel %vm1053, 1, 0
    %v1210 = vsel %vm1054, 1, 0
    %v1211 = vsel %vm1055, 1, 0
    %v1212 = vsel %vm1056, 1, 0
    %v1213 = vsel %vm1057, 1, 0
    %v1214 = vsel %vm1058, 1, 0
    %v1215 = vsel %vm1059, 1, 0
    %v1216 = vsel %vm1060, 1, 0
    %v1217 = vsel %vm1061, 1, 0
    %v1218 = vsel %vm1062, 1, 0
    %v1219 = vsel %vm1063, 1, 0
    %v1220 = vsel %vm1064, 1, 0
    %v1221 = vsel %vm1065, 1, 0
    %vm1222 = vcmp.eq.s32.totalorder %v1206, 1
    %vm1223 = vcmp.eq.s32.totalorder %v1207, 1
    %vm1224 = vcmp.eq.s32.totalorder %v1208, 1
    %vm1225 = vcmp.eq.s32.totalorder %v1209, 1
    %vm1226 = vcmp.eq.s32.totalorder %v1210, 1
    %vm1227 = vcmp.eq.s32.totalorder %v1211, 1
    %vm1228 = vcmp.eq.s32.totalorder %v1212, 1
    %vm1229 = vcmp.eq.s32.totalorder %v1213, 1
    %vm1230 = vcmp.eq.s32.totalorder %v1214, 1
    %vm1231 = vcmp.eq.s32.totalorder %v1215, 1
    %vm1232 = vcmp.eq.s32.totalorder %v1216, 1
    %vm1233 = vcmp.eq.s32.totalorder %v1217, 1
    %vm1234 = vcmp.eq.s32.totalorder %v1218, 1
    %vm1235 = vcmp.eq.s32.totalorder %v1219, 1
    %vm1236 = vcmp.eq.s32.totalorder %v1220, 1
    %vm1237 = vcmp.eq.s32.totalorder %v1221, 1
    %v1238 = vlaneseq
    %v1239 = vshrl.u32 %v1238, 7
    %v1240 = vsub.s32 0, %v1239
    %v1241 = vrot.slane %v1113, %v1240
    %v1242 = vlaneseq
    %v1243 = vshrl.u32 %v1242, 7
    %v1244 = vsub.s32 1, %v1243
    %v1245 = vrot.slane %v1113, %v1244
    %v1246 = vlaneseq
    %v1247 = vshrl.u32 %v1246, 7
    %v1248 = vsub.s32 2, %v1247
    %v1249 = vrot.slane %v1113, %v1248
    %v1250 = vlaneseq
    %v1251 = vshrl.u32 %v1250, 7
    %v1252 = vsub.s32 0, %v1251
    %v1253 = vrot.slane %v1127, %v1252
    %v1254 = vlaneseq
    %v1255 = vshrl.u32 %v1254, 7
    %v1256 = vsub.s32 1, %v1255
    %v1257 = vrot.slane %v1127, %v1256
    %v1258 = vlaneseq
    %v1259 = vshrl.u32 %v1258, 7
    %v1260 = vsub.s32 2, %v1259
    %v1261 = vrot.slane %v1127, %v1260
    %v1262 = vlaneseq
    %v1263 = vshrl.u32 %v1262, 7
    %v1264 = vsub.s32 0, %v1263
    %v1265 = vrot.slane %v1135, %v1264
    %v1266 = vlaneseq
    %v1267 = vshrl.u32 %v1266, 7
    %v1268 = vsub.s32 1, %v1267
    %v1269 = vrot.slane %v1135, %v1268
    %v1270 = vlaneseq
    %v1271 = vshrl.u32 %v1270, 7
    %v1272 = vsub.s32 2, %v1271
    %v1273 = vrot.slane %v1135, %v1272
    %v1274 = vlaneseq
    %v1275 = vshrl.u32 %v1274, 7
    %v1276 = vsub.s32 0, %v1275
    %v1277 = vrot.slane %v1137, %v1276
    %v1278 = vlaneseq
    %v1279 = vshrl.u32 %v1278, 7
    %v1280 = vsub.s32 1, %v1279
    %v1281 = vrot.slane %v1137, %v1280
    %v1282 = vlaneseq
    %v1283 = vshrl.u32 %v1282, 7
    %v1284 = vsub.s32 2, %v1283
    %v1285 = vrot.slane %v1137, %v1284
    %v1286 = vlaneseq
    %v1287 = vshrl.u32 %v1286, 7
    %v1288 = vsub.s32 0, %v1287
    %v1289 = vrot.slane %v1120, %v1288
    %v1290 = vlaneseq
    %v1291 = vshrl.u32 %v1290, 7
    %v1292 = vsub.s32 1, %v1291
    %v1293 = vrot.slane %v1120, %v1292
    %v1294 = vlaneseq
    %v1295 = vshrl.u32 %v1294, 7
    %v1296 = vsub.s32 2, %v1295
    %v1297 = vrot.slane %v1120, %v1296
    %v1298 = vlaneseq
    %v1299 = vshrl.u32 %v1298, 7
    %v1300 = vsub.s32 0, %v1299
    %v1301 = vrot.slane %v1134, %v1300
    %v1302 = vlaneseq
    %v1303 = vshrl.u32 %v1302, 7
    %v1304 = vsub.s32 1, %v1303
    %v1305 = vrot.slane %v1134, %v1304
    %v1306 = vlaneseq
    %v1307 = vshrl.u32 %v1306, 7
    %v1308 = vsub.s32 2, %v1307
    %v1309 = vrot.slane %v1134, %v1308
    %v1310 = vlaneseq
    %v1311 = vshrl.u32 %v1310, 7
    %v1312 = vsub.s32 0, %v1311
    %v1313 = vrot.slane %v1136, %v1312
    %v1314 = vlaneseq
    %v1315 = vshrl.u32 %v1314, 7
    %v1316 = vsub.s32 1, %v1315
    %v1317 = vrot.slane %v1136, %v1316
    %v1318 = vlaneseq
    %v1319 = vshrl.u32 %v1318, 7
    %v1320 = vsub.s32 2, %v1319
    %v1321 = vrot.slane %v1136, %v1320
    %v1322 = vlaneseq
    %v1323 = vshrl.u32 %v1322, 7
    %v1324 = vsub.s32 0, %v1323
    %v1325 = vrot.slane %v1138, %v1324
    %v1326 = vlaneseq
    %v1327 = vshrl.u32 %v1326, 7
    %v1328 = vsub.s32 1, %v1327
    %v1329 = vrot.slane %v1138, %v1328
    %v1330 = vlaneseq
    %v1331 = vshrl.u32 %v1330, 7
    %v1332 = vsub.s32 2, %v1331
    %v1333 = vrot.slane %v1138, %v1332
    %v1334 = vlaneseq
    %v1335 = vshrl.u32 %v1334, 7
    %v1336 = vsub.s32 0, %v1335
    %v1337 = vrot.slane %v1180, %v1336
    %v1338 = vlaneseq
    %v1339 = vshrl.u32 %v1338, 7
    %v1340 = vsub.s32 1, %v1339
    %v1341 = vrot.slane %v1180, %v1340
    %v1342 = vlaneseq
    %v1343 = vshrl.u32 %v1342, 7
    %v1344 = vsub.s32 2, %v1343
    %v1345 = vrot.slane %v1180, %v1344
    %v1346 = vlaneseq
    %v1347 = vshrl.u32 %v1346, 7
    %v1348 = vsub.s32 0, %v1347
    %v1349 = vrot.slane %v1194, %v1348
    %v1350 = vlaneseq
    %v1351 = vshrl.u32 %v1350, 7
    %v1352 = vsub.s32 1, %v1351
    %v1353 = vrot.slane %v1194, %v1352
    %v1354 = vlaneseq
    %v1355 = vshrl.u32 %v1354, 7
    %v1356 = vsub.s32 2, %v1355
    %v1357 = vrot.slane %v1194, %v1356
    %v1358 = vlaneseq
    %v1359 = vshrl.u32 %v1358, 7
    %v1360 = vsub.s32 0, %v1359
    %v1361 = vrot.slane %v1202, %v1360
    %v1362 = vlaneseq
    %v1363 = vshrl.u32 %v1362, 7
    %v1364 = vsub.s32 1, %v1363
    %v1365 = vrot.slane %v1202, %v1364
    %v1366 = vlaneseq
    %v1367 = vshrl.u32 %v1366, 7
    %v1368 = vsub.s32 2, %v1367
    %v1369 = vrot.slane %v1202, %v1368
    %v1370 = vlaneseq
    %v1371 = vshrl.u32 %v1370, 7
    %v1372 = vsub.s32 0, %v1371
    %v1373 = vrot.slane %v1204, %v1372
    %v1374 = vlaneseq
    %v1375 = vshrl.u32 %v1374, 7
    %v1376 = vsub.s32 1, %v1375
    %v1377 = vrot.slane %v1204, %v1376
    %v1378 = vlaneseq
    %v1379 = vshrl.u32 %v1378, 7
    %v1380 = vsub.s32 2, %v1379
    %v1381 = vrot.slane %v1204, %v1380
    %v1382 = vlaneseq
    %v1383 = vshrl.u32 %v1382, 7
    %v1384 = vsub.s32 0, %v1383
    %v1385 = vrot.slane %v1187, %v1384
    %v1386 = vlaneseq
    %v1387 = vshrl.u32 %v1386, 7
    %v1388 = vsub.s32 1, %v1387
    %v1389 = vrot.slane %v1187, %v1388
    %v1390 = vlaneseq
    %v1391 = vshrl.u32 %v1390, 7
    %v1392 = vsub.s32 2, %v1391
    %v1393 = vrot.slane %v1187, %v1392
    %v1394 = vlaneseq
    %v1395 = vshrl.u32 %v1394, 7
    %v1396 = vsub.s32 0, %v1395
    %v1397 = vrot.slane %v1201, %v1396
    %v1398 = vlaneseq
    %v1399 = vshrl.u32 %v1398, 7
    %v1400 = vsub.s32 1, %v1399
    %v1401 = vrot.slane %v1201, %v1400
    %v1402 = vlaneseq
    %v1403 = vshrl.u32 %v1402, 7
    %v1404 = vsub.s32 2, %v1403
    %v1405 = vrot.slane %v1201, %v1404
    %v1406 = vlaneseq
    %v1407 = vshrl.u32 %v1406, 7
    %v1408 = vsub.s32 0, %v1407
    %v1409 = vrot.slane %v1203, %v1408
    %v1410 = vlaneseq
    %v1411 = vshrl.u32 %v1410, 7
    %v1412 = vsub.s32 1, %v1411
    %v1413 = vrot.slane %v1203, %v1412
    %v1414 = vlaneseq
    %v1415 = vshrl.u32 %v1414, 7
    %v1416 = vsub.s32 2, %v1415
    %v1417 = vrot.slane %v1203, %v1416
    %v1418 = vlaneseq
    %v1419 = vshrl.u32 %v1418, 7
    %v1420 = vsub.s32 0, %v1419
    %v1421 = vrot.slane %v1205, %v1420
    %v1422 = vlaneseq
    %v1423 = vshrl.u32 %v1422, 7
    %v1424 = vsub.s32 1, %v1423
    %v1425 = vrot.slane %v1205, %v1424
    %v1426 = vlaneseq
    %v1427 = vshrl.u32 %v1426, 7
    %v1428 = vsub.s32 2, %v1427
    %v1429 = vrot.slane %v1205, %v1428
    %v1478 = vsel %vm1222, %v1241, -1e+30
    %v1479 = vsel %vm1222, %v1245, -1e+30
    %v1480 = vsel %vm1222, %v1249, -1e+30
    %v1481 = vsel %vm1223, %v1253, -1e+30
    %v1482 = vsel %vm1223, %v1257, -1e+30
    %v1483 = vsel %vm1223, %v1261, -1e+30
    %v1484 = vsel %vm1224, %v1265, -1e+30
    %v1485 = vsel %vm1224, %v1269, -1e+30
    %v1486 = vsel %vm1224, %v1273, -1e+30
    %v1487 = vsel %vm1225, %v1277, -1e+30
    %v1488 = vsel %vm1225, %v1281, -1e+30
    %v1489 = vsel %vm1225, %v1285, -1e+30
    %v1490 = vsel %vm1226, %v1289, -1e+30
    %v1491 = vsel %vm1226, %v1293, -1e+30
    %v1492 = vsel %vm1226, %v1297, -1e+30
    %v1493 = vsel %vm1227, %v1301, -1e+30
    %v1494 = vsel %vm1227, %v1305, -1e+30
    %v1495 = vsel %vm1227, %v1309, -1e+30
    %v1496 = vsel %vm1228, %v1313, -1e+30
    %v1497 = vsel %vm1228, %v1317, -1e+30
    %v1498 = vsel %vm1228, %v1321, -1e+30
    %v1499 = vsel %vm1229, %v1325, -1e+30
    %v1500 = vsel %vm1229, %v1329, -1e+30
    %v1501 = vsel %vm1229, %v1333, -1e+30
    %v1502 = vsel %vm1230, %v1337, -1e+30
    %v1503 = vsel %vm1230, %v1341, -1e+30
    %v1504 = vsel %vm1230, %v1345, -1e+30
    %v1505 = vsel %vm1231, %v1349, -1e+30
    %v1506 = vsel %vm1231, %v1353, -1e+30
    %v1507 = vsel %vm1231, %v1357, -1e+30
    %v1508 = vsel %vm1232, %v1361, -1e+30
    %v1509 = vsel %vm1232, %v1365, -1e+30
    %v1510 = vsel %vm1232, %v1369, -1e+30
    %v1511 = vsel %vm1233, %v1373, -1e+30
    %v1512 = vsel %vm1233, %v1377, -1e+30
    %v1513 = vsel %vm1233, %v1381, -1e+30
    %v1514 = vsel %vm1234, %v1385, -1e+30
    %v1515 = vsel %vm1234, %v1389, -1e+30
    %v1516 = vsel %vm1234, %v1393, -1e+30
    %v1517 = vsel %vm1235, %v1397, -1e+30
    %v1518 = vsel %vm1235, %v1401, -1e+30
    %v1519 = vsel %vm1235, %v1405, -1e+30
    %v1520 = vsel %vm1236, %v1409, -1e+30
    %v1521 = vsel %vm1236, %v1413, -1e+30
    %v1522 = vsel %vm1236, %v1417, -1e+30
    %v1523 = vsel %vm1237, %v1421, -1e+30
    %v1524 = vsel %vm1237, %v1425, -1e+30
    %v1525 = vsel %vm1237, %v1429, -1e+30
    %vm1526 = vcmask 1041408
    %v1527 = vsel %vm1526, %v1478, -inf
    %v1528 = vsel %vm1526, %v1481, -inf
    %v1529 = vsel %vm1526, %v1484, -inf
    %v1530 = vmax.f32 %v1527, %v1529
    %v1531 = vsel %vm1526, %v1487, -inf
    %v1532 = vmax.f32 %v1528, %v1531
    %v1533 = vsel %vm1526, %v1490, -inf
    %v1534 = vmax.f32 %v1530, %v1533
    %v1535 = vsel %vm1526, %v1493, -inf
    %v1536 = vmax.f32 %v1532, %v1535
    %v1537 = vsel %vm1526, %v1496, -inf
    %v1538 = vmax.f32 %v1534, %v1537
    %v1539 = vsel %vm1526, %v1499, -inf
    %v1540 = vmax.f32 %v1536, %v1539
    %v1541 = vsel %vm1526, %v1502, -inf
    %v1542 = vmax.f32 %v1538, %v1541
    %v1543 = vsel %vm1526, %v1505, -inf
    %v1544 = vmax.f32 %v1540, %v1543
    %v1545 = vsel %vm1526, %v1508, -inf
    %v1546 = vmax.f32 %v1542, %v1545
    %v1547 = vsel %vm1526, %v1511, -inf
    %v1548 = vmax.f32 %v1544, %v1547
    %v1549 = vsel %vm1526, %v1514, -inf
    %v1550 = vmax.f32 %v1546, %v1549
    %v1551 = vsel %vm1526, %v1517, -inf
    %v1552 = vmax.f32 %v1548, %v1551
    %v1553 = vsel %vm1526, %v1520, -inf
    %v1554 = vmax.f32 %v1550, %v1553
    %v1555 = vsel %vm1526, %v1523, -inf
    %v1556 = vmax.f32 %v1552, %v1555
    %v1557 = vmax.f32 %v1554, %v1556
    %v1558 = vsel %vm1526, %v1479, -inf
    %v1559 = vsel %vm1526, %v1482, -inf
    %v1560 = vsel %vm1526, %v1485, -inf
    %v1561 = vmax.f32 %v1558, %v1560
    %v1562 = vsel %vm1526, %v1488, -inf
    %v1563 = vmax.f32 %v1559, %v1562
    %v1564 = vsel %vm1526, %v1491, -inf
    %v1565 = vmax.f32 %v1561, %v1564
    %v1566 = vsel %vm1526, %v1494, -inf
    %v1567 = vmax.f32 %v1563, %v1566
    %v1568 = vsel %vm1526, %v1497, -inf
    %v1569 = vmax.f32 %v1565, %v1568
    %v1570 = vsel %vm1526, %v1500, -inf
    %v1571 = vmax.f32 %v1567, %v1570
    %v1572 = vsel %vm1526, %v1503, -inf
    %v1573 = vmax.f32 %v1569, %v1572
    %v1574 = vsel %vm1526, %v1506, -inf
    %v1575 = vmax.f32 %v1571, %v1574
    %v1576 = vsel %vm1526, %v1509, -inf
    %v1577 = vmax.f32 %v1573, %v1576
    %v1578 = vsel %vm1526, %v1512, -inf
    %v1579 = vmax.f32 %v1575, %v1578
    %v1580 = vsel %vm1526, %v1515, -inf
    %v1581 = vmax.f32 %v1577, %v1580
    %v1582 = vsel %vm1526, %v1518, -inf
    %v1583 = vmax.f32 %v1579, %v1582
    %v1584 = vsel %vm1526, %v1521, -inf
    %v1585 = vmax.f32 %v1581, %v1584
    %v1586 = vsel %vm1526, %v1524, -inf
    %v1587 = vmax.f32 %v1583, %v1586
    %v1588 = vmax.f32 %v1585, %v1587
    %vm1589 = vcmask 451584
    %v1590 = vsel %vm1589, %v1480, -inf
    %v1591 = vsel %vm1589, %v1483, -inf
    %v1592 = vsel %vm1589, %v1486, -inf
    %v1593 = vmax.f32 %v1590, %v1592
    %v1594 = vsel %vm1589, %v1489, -inf
    %v1595 = vmax.f32 %v1591, %v1594
    %v1596 = vsel %vm1589, %v1492, -inf
    %v1597 = vmax.f32 %v1593, %v1596
    %v1598 = vsel %vm1589, %v1495, -inf
    %v1599 = vmax.f32 %v1595, %v1598
    %v1600 = vsel %vm1589, %v1498, -inf
    %v1601 = vmax.f32 %v1597, %v1600
    %v1602 = vsel %vm1589, %v1501, -inf
    %v1603 = vmax.f32 %v1599, %v1602
    %v1604 = vsel %vm1589, %v1504, -inf
    %v1605 = vmax.f32 %v1601, %v1604
    %v1606 = vsel %vm1589, %v1507, -inf
    %v1607 = vmax.f32 %v1603, %v1606
    %v1608 = vsel %vm1589, %v1510, -inf
    %v1609 = vmax.f32 %v1605, %v1608
    %v1610 = vsel %vm1589, %v1513, -inf
    %v1611 = vmax.f32 %v1607, %v1610
    %v1612 = vsel %vm1589, %v1516, -inf
    %v1613 = vmax.f32 %v1609, %v1612
    %v1614 = vsel %vm1589, %v1519, -inf
    %v1615 = vmax.f32 %v1611, %v1614
    %v1616 = vsel %vm1589, %v1522, -inf
    %v1617 = vmax.f32 %v1613, %v1616
    %v1618 = vsel %vm1589, %v1525, -inf
    %v1619 = vmax.f32 %v1615, %v1618
    %v1620 = vmax.f32 %v1617, %v1619
    %v1621 = vpack.c.bf16 %v1557, %v1557
    %v1622 = vpack.c.bf16 %v1588, %v1588
    %v1623 = vpack.c.bf16 %v1620, %v1620
    %v1624 = vld [vmem:[#allocation11] sm:$0xff]
    %v1625 = vld [vmem:[#allocation11 + $0x8] sm:$0xff]
    %v1626 = vld [vmem:[#allocation11 + $0x10] sm:$0xff]
    %v1627 = vld [vmem:[#allocation11 + $0x18] sm:$0xff]
    %v1628 = vld [vmem:[#allocation11 + $0x20] sm:$0xff]
    %v1629 = vld [vmem:[#allocation11 + $0x28] sm:$0xff]
    %v1630 = vld [vmem:[#allocation11 + $0x30] sm:$0xff]
    %v1631 = vld [vmem:[#allocation11 + $0x38] sm:$0xff]
    %v1632 = vld [vmem:[#allocation11 + $0x40] sm:$0xff]
    %v1633 = vld [vmem:[#allocation11 + $0x48] sm:$0xff]
    %v1634 = vld [vmem:[#allocation11 + $0x50] sm:$0xff]
    %v1635 = vld [vmem:[#allocation11 + $0x58] sm:$0xff]
    %v1636 = vld [vmem:[#allocation11 + $0x60] sm:$0xff]
    %v1637 = vld [vmem:[#allocation11 + $0x68] sm:$0xff]
    %v1638 = vld [vmem:[#allocation11 + $0x70] sm:$0xff]
    %v1639 = vld [vmem:[#allocation11 + $0x78] sm:$0xff]
    %v1640 = vld [vmem:[#allocation11 + $0x80] sm:$0xff]
    %v1641 = vld [vmem:[#allocation11 + $0x88] sm:$0xff]
    %v1642 = vld [vmem:[#allocation11 + $0x90] sm:$0xff]
    %v1643 = vld [vmem:[#allocation11 + $0x98] sm:$0xff]
    %v1644 = vld [vmem:[#allocation11 + $0xa0] sm:$0xff]
    %v1645 = vld [vmem:[#allocation11 + $0xa8] sm:$0xff]
    %v1646 = vld [vmem:[#allocation11 + $0xb0] sm:$0xff]
    %v1647 = vld [vmem:[#allocation11 + $0xb8] sm:$0xff]
    %v1648 = vld [vmem:[#allocation11 + $0xc0] sm:$0xff]
    %v1649 = vld [vmem:[#allocation11 + $0xc8] sm:$0xff]
    %v1650 = vld [vmem:[#allocation11 + $0xd0] sm:$0xff]
    %v1651 = vld [vmem:[#allocation11 + $0xd8] sm:$0xff]
    %v1652 = vld [vmem:[#allocation11 + $0xe0] sm:$0xff]
    %v1653 = vld [vmem:[#allocation11 + $0xe8] sm:$0xff]
    %v1654 = vld [vmem:[#allocation11 + $0xf0] sm:$0xff]
    %v1655 = vld [vmem:[#allocation11 + $0xf8] sm:$0xff]
    %v1656 = vld [vmem:[#allocation11 + $0x100] sm:$0xff]
    %v1657 = vld [vmem:[#allocation11 + $0x108] sm:$0xff]
    %v1658 = vld [vmem:[#allocation11 + $0x110] sm:$0xff]
    %v1659 = vld [vmem:[#allocation11 + $0x118] sm:$0xff]
    %v1660 = vld [vmem:[#allocation11 + $0x120] sm:$0xff]
    %v1661 = vld [vmem:[#allocation11 + $0x128] sm:$0xff]
    %v1662 = vld [vmem:[#allocation11 + $0x130] sm:$0xff]
    %v1663 = vld [vmem:[#allocation11 + $0x138] sm:$0xff]
    %v1664 = vld [vmem:[#allocation11 + $0x140] sm:$0xff]
    %v1665 = vld [vmem:[#allocation11 + $0x148] sm:$0xff]
    %v1666 = vld [vmem:[#allocation11 + $0x150] sm:$0xff]
    %v1667 = vld [vmem:[#allocation11 + $0x158] sm:$0xff]
    %v1668 = vld [vmem:[#allocation11 + $0x160] sm:$0xff]
    %v1669 = vld [vmem:[#allocation11 + $0x168] sm:$0xff]
    %v1670 = vld [vmem:[#allocation11 + $0x170] sm:$0xff]
    %v1671 = vld [vmem:[#allocation11 + $0x178] sm:$0xff]
    %v1672 = vld [vmem:[#allocation11 + $0x180] sm:$0xff]
    %v1673 = vld [vmem:[#allocation11 + $0x188] sm:$0xff]
    %v1674 = vld [vmem:[#allocation11 + $0x190] sm:$0xff]
    %v1675 = vld [vmem:[#allocation11 + $0x198] sm:$0xff]
    %v1676 = vld [vmem:[#allocation11 + $0x1a0] sm:$0xff]
    %v1677 = vld [vmem:[#allocation11 + $0x1a8] sm:$0xff]
    %v1678 = vld [vmem:[#allocation11 + $0x1b0] sm:$0xff]
    %v1679 = vld [vmem:[#allocation11 + $0x1b8] sm:$0xff]
    %v1680 = vld [vmem:[#allocation11 + $0x1c0] sm:$0xff]
    %v1681 = vld [vmem:[#allocation11 + $0x1c8] sm:$0xff]
    %v1682 = vld [vmem:[#allocation11 + $0x1d0] sm:$0xff]
    %v1683 = vld [vmem:[#allocation11 + $0x1d8] sm:$0xff]
    %v1684 = vld [vmem:[#allocation11 + $0x1e0] sm:$0xff]
    %v1685 = vld [vmem:[#allocation11 + $0x1e8] sm:$0xff]
    %v1686 = vld [vmem:[#allocation11 + $0x1f0] sm:$0xff]
    %v1687 = vld [vmem:[#allocation11 + $0x1f8] sm:$0xff]
    %v1688 = vld [vmem:[#allocation11 + $0x200] sm:$0xff]
    %v1689 = vld [vmem:[#allocation11 + $0x208] sm:$0xff]
    %v1690 = vld [vmem:[#allocation11 + $0x210] sm:$0xff]
    %v1691 = vld [vmem:[#allocation11 + $0x218] sm:$0xff]
    %v1692 = vld [vmem:[#allocation11 + $0x220] sm:$0xff]
    %v1693 = vld [vmem:[#allocation11 + $0x228] sm:$0xff]
    %v1694 = vld [vmem:[#allocation11 + $0x230] sm:$0xff]
    %v1695 = vld [vmem:[#allocation11 + $0x238] sm:$0xff]
    %v1696 = vld [vmem:[#allocation11 + $0x240] sm:$0xff]
    %v1697 = vld [vmem:[#allocation11 + $0x248] sm:$0xff]
    %v1698 = vld [vmem:[#allocation11 + $0x250] sm:$0xff]
    %v1699 = vld [vmem:[#allocation11 + $0x258] sm:$0xff]
    %v1700 = vld [vmem:[#allocation11 + $0x260] sm:$0xff]
    %v1701 = vld [vmem:[#allocation11 + $0x268] sm:$0xff]
    %v1702 = vld [vmem:[#allocation11 + $0x270] sm:$0xff]
    %v1703 = vld [vmem:[#allocation11 + $0x278] sm:$0xff]
    %v1704 = vld [vmem:[#allocation11 + $0x280] sm:$0xff]
    %v1705 = vld [vmem:[#allocation11 + $0x288] sm:$0xff]
    %v1706 = vld [vmem:[#allocation11 + $0x290] sm:$0xff]
    %v1707 = vld [vmem:[#allocation11 + $0x298] sm:$0xff]
    %v1708 = vld [vmem:[#allocation11 + $0x2a0] sm:$0xff]
    %v1709 = vld [vmem:[#allocation11 + $0x2a8] sm:$0xff]
    %v1710 = vld [vmem:[#allocation11 + $0x2b0] sm:$0xff]
    %v1711 = vld [vmem:[#allocation11 + $0x2b8] sm:$0xff]
    %v1712 = vld [vmem:[#allocation11 + $0x2c0] sm:$0xff]
    %v1713 = vld [vmem:[#allocation11 + $0x2c8] sm:$0xff]
    %v1714 = vld [vmem:[#allocation11 + $0x2d0] sm:$0xff]
    %v1715 = vld [vmem:[#allocation11 + $0x2d8] sm:$0xff]
    %v1716 = vld [vmem:[#allocation11 + $0x2e0] sm:$0xff]
    %v1717 = vld [vmem:[#allocation11 + $0x2e8] sm:$0xff]
    %v1718 = vld [vmem:[#allocation11 + $0x2f0] sm:$0xff]
    %v1719 = vld [vmem:[#allocation11 + $0x2f8] sm:$0xff]
    %v1720 = vld [vmem:[#allocation11 + $0x300] sm:$0xff]
    %v1721 = vld [vmem:[#allocation11 + $0x308] sm:$0xff]
    %v1722 = vld [vmem:[#allocation11 + $0x310] sm:$0xff]
    %v1723 = vld [vmem:[#allocation11 + $0x318] sm:$0xff]
    %v1724 = vld [vmem:[#allocation11 + $0x320] sm:$0xff]
    %v1725 = vld [vmem:[#allocation11 + $0x328] sm:$0xff]
    %v1726 = vld [vmem:[#allocation11 + $0x330] sm:$0xff]
    %v1727 = vld [vmem:[#allocation11 + $0x338] sm:$0xff]
    %v1728 = vld [vmem:[#allocation11 + $0x340] sm:$0xff]
    %v1729 = vld [vmem:[#allocation11 + $0x348] sm:$0xff]
    %v1730 = vld [vmem:[#allocation11 + $0x350] sm:$0xff]
    %v1731 = vld [vmem:[#allocation11 + $0x358] sm:$0xff]
    %v1732 = vld [vmem:[#allocation11 + $0x360] sm:$0xff]
    %v1733 = vld [vmem:[#allocation11 + $0x368] sm:$0xff]
    %v1734 = vld [vmem:[#allocation11 + $0x370] sm:$0xff]
    %v1735 = vld [vmem:[#allocation11 + $0x378] sm:$0xff]
    %v1736 = vld [vmem:[#allocation11 + $0x380] sm:$0xff]
    %v1737 = vld [vmem:[#allocation11 + $0x388] sm:$0xff]
    %v1738 = vld [vmem:[#allocation11 + $0x390] sm:$0xff]
    %v1739 = vld [vmem:[#allocation11 + $0x398] sm:$0xff]
    %v1740 = vld [vmem:[#allocation11 + $0x3a0] sm:$0xff]
    %v1741 = vld [vmem:[#allocation11 + $0x3a8] sm:$0xff]
    %v1742 = vld [vmem:[#allocation11 + $0x3b0] sm:$0xff]
    %v1743 = vld [vmem:[#allocation11 + $0x3b8] sm:$0xff]
    %v1744 = vld [vmem:[#allocation11 + $0x3c0] sm:$0xff]
    %v1745 = vld [vmem:[#allocation11 + $0x3c8] sm:$0xff]
    %v1746 = vld [vmem:[#allocation11 + $0x3d0] sm:$0xff]
    %v1747 = vld [vmem:[#allocation11 + $0x3d8] sm:$0xff]
    %v1748 = vld [vmem:[#allocation11 + $0x3e0] sm:$0xff]
    %v1749 = vld [vmem:[#allocation11 + $0x3e8] sm:$0xff]
    %v1750 = vld [vmem:[#allocation11 + $0x3f0] sm:$0xff]
    %v1751 = vld [vmem:[#allocation11 + $0x3f8] sm:$0xff]
    %v1752 = vld [vmem:[#allocation11 + $0x400] sm:$0xff]
    %v1753 = vld [vmem:[#allocation11 + $0x408] sm:$0xff]
    %v1754 = vld [vmem:[#allocation11 + $0x410] sm:$0xff]
    %v1755 = vld [vmem:[#allocation11 + $0x418] sm:$0xff]
    %v1756 = vld [vmem:[#allocation11 + $0x420] sm:$0xff]
    %v1757 = vld [vmem:[#allocation11 + $0x428] sm:$0xff]
    %v1758 = vld [vmem:[#allocation11 + $0x430] sm:$0xff]
    %v1759 = vld [vmem:[#allocation11 + $0x438] sm:$0xff]
    %v1760 = vld [vmem:[#allocation11 + $0x440] sm:$0xff]
    %v1761 = vld [vmem:[#allocation11 + $0x448] sm:$0xff]
    %v1762 = vld [vmem:[#allocation11 + $0x450] sm:$0xff]
    %v1763 = vld [vmem:[#allocation11 + $0x458] sm:$0xff]
    %v1764 = vld [vmem:[#allocation11 + $0x460] sm:$0xff]
    %v1765 = vld [vmem:[#allocation11 + $0x468] sm:$0xff]
    %v1766 = vld [vmem:[#allocation11 + $0x470] sm:$0xff]
    %v1767 = vld [vmem:[#allocation11 + $0x478] sm:$0xff]
    %v1768 = vld [vmem:[#allocation11 + $0x480] sm:$0xff]
    %v1769 = vld [vmem:[#allocation11 + $0x488] sm:$0xff]
    %v1770 = vld [vmem:[#allocation11 + $0x490] sm:$0xff]
    %v1771 = vld [vmem:[#allocation11 + $0x498] sm:$0xff]
    %v1772 = vld [vmem:[#allocation11 + $0x4a0] sm:$0xff]
    %v1773 = vld [vmem:[#allocation11 + $0x4a8] sm:$0xff]
    %v1774 = vld [vmem:[#allocation11 + $0x4b0] sm:$0xff]
    %v1775 = vld [vmem:[#allocation11 + $0x4b8] sm:$0xff]
    %v1776 = vld [vmem:[#allocation11 + $0x4c0] sm:$0xff]
    %v1777 = vld [vmem:[#allocation11 + $0x4c8] sm:$0xff]
    %v1778 = vld [vmem:[#allocation11 + $0x4d0] sm:$0xff]
    %v1779 = vld [vmem:[#allocation11 + $0x4d8] sm:$0xff]
    %v1780 = vld [vmem:[%s10] sm:$0xff]
    %v1782 = vlaneseq
    %v1783 = vshrl.u32 %v1782, 7
    %v1784 = vsub.s32 0, %v1783
    %v1785 = vrot.slane %v1780, %v1784
    %v1786 = vlaneseq
    %v1787 = vshrl.u32 %v1786, 7
    %v1788 = vsub.s32 1, %v1787
    %v1789 = vrot.slane %v1780, %v1788
    %v1790 = vlaneseq
    %v1791 = vshrl.u32 %v1790, 7
    %v1792 = vsub.s32 2, %v1791
    %v1793 = vrot.slane %v1780, %v1792
    %v1794 = vlaneseq
    %v1795 = vshrl.u32 %v1794, 7
    %v1796 = vsub.s32 3, %v1795
    %v1797 = vrot.slane %v1780, %v1796
    %v1798 = vlaneseq
    %v1799 = vshrl.u32 %v1798, 7
    %v1800 = vsub.s32 4, %v1799
    %v1801 = vrot.slane %v1780, %v1800
    %v1802 = vlaneseq
    %v1803 = vshrl.u32 %v1802, 7
    %v1804 = vsub.s32 5, %v1803
    %v1805 = vrot.slane %v1780, %v1804
    %v1806 = vlaneseq
    %v1807 = vshrl.u32 %v1806, 7
    %v1808 = vsub.s32 6, %v1807
    %v1809 = vrot.slane %v1780, %v1808
    %v1810 = vlaneseq
    %v1811 = vshrl.u32 %v1810, 7
    %v1812 = vsub.s32 7, %v1811
    %v1813 = vrot.slane %v1780, %v1812
    %v1978 = vunpack.c.l.b16 %v1624
    %v1979 = vunpack.c.h.b16 %v1624
    %v1980 = vunpack.c.l.b16 %v1625
    %v1981 = vunpack.c.h.b16 %v1625
    %v1982 = vunpack.c.l.b16 %v1626
    %v1983 = vunpack.c.h.b16 %v1626
    %v1984 = vunpack.c.l.b16 %v1627
    %v1985 = vunpack.c.h.b16 %v1627
    %v1986 = vunpack.c.l.b16 %v1628
    %v1987 = vunpack.c.h.b16 %v1628
    %v1988 = vunpack.c.l.b16 %v1629
    %v1989 = vunpack.c.h.b16 %v1629
    %v1990 = vunpack.c.l.b16 %v1630
    %v1991 = vunpack.c.h.b16 %v1630
    %v1992 = vunpack.c.l.b16 %v1631
    %v1993 = vunpack.c.h.b16 %v1631
    %v1994 = vunpack.c.l.b16 %v1632
    %v1995 = vunpack.c.h.b16 %v1632
    %v1996 = vunpack.c.l.b16 %v1633
    %v1997 = vunpack.c.h.b16 %v1633
    %v1998 = vunpack.c.l.b16 %v1634
    %v1999 = vunpack.c.h.b16 %v1634
    %v2000 = vunpack.c.l.b16 %v1635
    %v2001 = vunpack.c.h.b16 %v1635
    %v2002 = vunpack.c.l.b16 %v1636
    %v2003 = vunpack.c.h.b16 %v1636
    %v2004 = vunpack.c.l.b16 %v1637
    %v2005 = vunpack.c.h.b16 %v1637
    %v2006 = vunpack.c.l.b16 %v1638
    %v2007 = vunpack.c.h.b16 %v1638
    %v2008 = vunpack.c.l.b16 %v1639
    %v2009 = vunpack.c.h.b16 %v1639
    %v2010 = vunpack.c.l.b16 %v1640
    %v2011 = vunpack.c.h.b16 %v1640
    %v2012 = vunpack.c.l.b16 %v1641
    %v2013 = vunpack.c.h.b16 %v1641
    %v2014 = vunpack.c.l.b16 %v1642
    %v2015 = vunpack.c.h.b16 %v1642
    %v2016 = vunpack.c.l.b16 %v1643
    %v2017 = vunpack.c.h.b16 %v1643
    %v2018 = vunpack.c.l.b16 %v1644
    %v2019 = vunpack.c.h.b16 %v1644
    %v2020 = vunpack.c.l.b16 %v1645
    %v2021 = vunpack.c.h.b16 %v1645
    %v2022 = vunpack.c.l.b16 %v1646
    %v2023 = vunpack.c.h.b16 %v1646
    %v2024 = vunpack.c.l.b16 %v1647
    %v2025 = vunpack.c.h.b16 %v1647
    %v2026 = vunpack.c.l.b16 %v1648
    %v2027 = vunpack.c.h.b16 %v1648
    %v2028 = vunpack.c.l.b16 %v1649
    %v2029 = vunpack.c.h.b16 %v1649
    %v2030 = vunpack.c.l.b16 %v1650
    %v2031 = vunpack.c.h.b16 %v1650
    %v2032 = vunpack.c.l.b16 %v1651
    %v2033 = vunpack.c.h.b16 %v1651
    %v2034 = vunpack.c.l.b16 %v1652
    %v2035 = vunpack.c.h.b16 %v1652
    %v2036 = vunpack.c.l.b16 %v1653
    %v2037 = vunpack.c.h.b16 %v1653
    %v2038 = vunpack.c.l.b16 %v1654
    %v2039 = vunpack.c.h.b16 %v1654
    %v2040 = vunpack.c.l.b16 %v1655
    %v2041 = vunpack.c.h.b16 %v1655
    %v2042 = vunpack.c.l.b16 %v1656
    %v2043 = vunpack.c.h.b16 %v1656
    %v2044 = vunpack.c.l.b16 %v1657
    %v2045 = vunpack.c.h.b16 %v1657
    %v2046 = vunpack.c.l.b16 %v1658
    %v2047 = vunpack.c.h.b16 %v1658
    %v2048 = vunpack.c.l.b16 %v1659
    %v2049 = vunpack.c.h.b16 %v1659
    %v2050 = vunpack.c.l.b16 %v1660
    %v2051 = vunpack.c.h.b16 %v1660
    %v2052 = vunpack.c.l.b16 %v1661
    %v2053 = vunpack.c.h.b16 %v1661
    %v2054 = vunpack.c.l.b16 %v1662
    %v2055 = vunpack.c.h.b16 %v1662
    %v2056 = vunpack.c.l.b16 %v1663
    %v2057 = vunpack.c.h.b16 %v1663
    %v2058 = vunpack.c.l.b16 %v1664
    %v2059 = vunpack.c.h.b16 %v1664
    %v2060 = vunpack.c.l.b16 %v1665
    %v2061 = vunpack.c.h.b16 %v1665
    %v2062 = vunpack.c.l.b16 %v1666
    %v2063 = vunpack.c.h.b16 %v1666
    %v2064 = vunpack.c.l.b16 %v1667
    %v2065 = vunpack.c.h.b16 %v1667
    %v2066 = vunpack.c.l.b16 %v1668
    %v2067 = vunpack.c.h.b16 %v1668
    %v2068 = vunpack.c.l.b16 %v1669
    %v2069 = vunpack.c.h.b16 %v1669
    %v2070 = vunpack.c.l.b16 %v1670
    %v2071 = vunpack.c.h.b16 %v1670
    %v2072 = vunpack.c.l.b16 %v1671
    %v2073 = vunpack.c.h.b16 %v1671
    %v2074 = vunpack.c.l.b16 %v1672
    %v2075 = vunpack.c.h.b16 %v1672
    %v2076 = vunpack.c.l.b16 %v1673
    %v2077 = vunpack.c.h.b16 %v1673
    %v2078 = vunpack.c.l.b16 %v1674
    %v2079 = vunpack.c.h.b16 %v1674
    %v2080 = vunpack.c.l.b16 %v1675
    %v2081 = vunpack.c.h.b16 %v1675
    %v2082 = vunpack.c.l.b16 %v1676
    %v2083 = vunpack.c.h.b16 %v1676
    %v2084 = vunpack.c.l.b16 %v1677
    %v2085 = vunpack.c.h.b16 %v1677
    %v2086 = vunpack.c.l.b16 %v1678
    %v2087 = vunpack.c.h.b16 %v1678
    %v2088 = vunpack.c.l.b16 %v1679
    %v2089 = vunpack.c.h.b16 %v1679
    %v2090 = vunpack.c.l.b16 %v1680
    %v2091 = vunpack.c.h.b16 %v1680
    %v2092 = vunpack.c.l.b16 %v1681
    %v2093 = vunpack.c.h.b16 %v1681
    %v2094 = vunpack.c.l.b16 %v1682
    %v2095 = vunpack.c.h.b16 %v1682
    %v2096 = vunpack.c.l.b16 %v1683
    %v2097 = vunpack.c.h.b16 %v1683
    %v2098 = vunpack.c.l.b16 %v1684
    %v2099 = vunpack.c.h.b16 %v1684
    %v2100 = vunpack.c.l.b16 %v1685
    %v2101 = vunpack.c.h.b16 %v1685
    %v2102 = vunpack.c.l.b16 %v1686
    %v2103 = vunpack.c.h.b16 %v1686
    %v2104 = vunpack.c.l.b16 %v1687
    %v2105 = vunpack.c.h.b16 %v1687
    %v2106 = vunpack.c.l.b16 %v1688
    %v2107 = vunpack.c.h.b16 %v1688
    %v2108 = vunpack.c.l.b16 %v1689
    %v2109 = vunpack.c.h.b16 %v1689
    %v2110 = vunpack.c.l.b16 %v1690
    %v2111 = vunpack.c.h.b16 %v1690
    %v2112 = vunpack.c.l.b16 %v1691
    %v2113 = vunpack.c.h.b16 %v1691
    %v2114 = vunpack.c.l.b16 %v1692
    %v2115 = vunpack.c.h.b16 %v1692
    %v2116 = vunpack.c.l.b16 %v1693
    %v2117 = vunpack.c.h.b16 %v1693
    %v2118 = vunpack.c.l.b16 %v1694
    %v2119 = vunpack.c.h.b16 %v1694
    %v2120 = vunpack.c.l.b16 %v1695
    %v2121 = vunpack.c.h.b16 %v1695
    %v2122 = vunpack.c.l.b16 %v1696
    %v2123 = vunpack.c.h.b16 %v1696
    %v2124 = vunpack.c.l.b16 %v1697
    %v2125 = vunpack.c.h.b16 %v1697
    %v2126 = vunpack.c.l.b16 %v1698
    %v2127 = vunpack.c.h.b16 %v1698
    %v2128 = vunpack.c.l.b16 %v1699
    %v2129 = vunpack.c.h.b16 %v1699
    %v2130 = vunpack.c.l.b16 %v1700
    %v2131 = vunpack.c.h.b16 %v1700
    %v2132 = vunpack.c.l.b16 %v1701
    %v2133 = vunpack.c.h.b16 %v1701
    %v2134 = vunpack.c.l.b16 %v1702
    %v2135 = vunpack.c.h.b16 %v1702
    %v2136 = vunpack.c.l.b16 %v1703
    %v2137 = vunpack.c.h.b16 %v1703
    %v2138 = vunpack.c.l.b16 %v1704
    %v2139 = vunpack.c.h.b16 %v1704
    %v2140 = vunpack.c.l.b16 %v1705
    %v2141 = vunpack.c.h.b16 %v1705
    %v2142 = vunpack.c.l.b16 %v1706
    %v2143 = vunpack.c.h.b16 %v1706
    %v2144 = vunpack.c.l.b16 %v1707
    %v2145 = vunpack.c.h.b16 %v1707
    %v2146 = vunpack.c.l.b16 %v1708
    %v2147 = vunpack.c.h.b16 %v1708
    %v2148 = vunpack.c.l.b16 %v1709
    %v2149 = vunpack.c.h.b16 %v1709
    %v2150 = vunpack.c.l.b16 %v1710
    %v2151 = vunpack.c.h.b16 %v1710
    %v2152 = vunpack.c.l.b16 %v1711
    %v2153 = vunpack.c.h.b16 %v1711
    %v2154 = vunpack.c.l.b16 %v1712
    %v2155 = vunpack.c.h.b16 %v1712
    %v2156 = vunpack.c.l.b16 %v1713
    %v2157 = vunpack.c.h.b16 %v1713
    %v2158 = vunpack.c.l.b16 %v1714
    %v2159 = vunpack.c.h.b16 %v1714
    %v2160 = vunpack.c.l.b16 %v1715
    %v2161 = vunpack.c.h.b16 %v1715
    %v2162 = vunpack.c.l.b16 %v1716
    %v2163 = vunpack.c.h.b16 %v1716
    %v2164 = vunpack.c.l.b16 %v1717
    %v2165 = vunpack.c.h.b16 %v1717
    %v2166 = vunpack.c.l.b16 %v1718
    %v2167 = vunpack.c.h.b16 %v1718
    %v2168 = vunpack.c.l.b16 %v1719
    %v2169 = vunpack.c.h.b16 %v1719
    %v2170 = vunpack.c.l.b16 %v1720
    %v2171 = vunpack.c.h.b16 %v1720
    %v2172 = vunpack.c.l.b16 %v1721
    %v2173 = vunpack.c.h.b16 %v1721
    %v2174 = vunpack.c.l.b16 %v1722
    %v2175 = vunpack.c.h.b16 %v1722
    %v2176 = vunpack.c.l.b16 %v1723
    %v2177 = vunpack.c.h.b16 %v1723
    %v2178 = vunpack.c.l.b16 %v1724
    %v2179 = vunpack.c.h.b16 %v1724
    %v2180 = vunpack.c.l.b16 %v1725
    %v2181 = vunpack.c.h.b16 %v1725
    %v2182 = vunpack.c.l.b16 %v1726
    %v2183 = vunpack.c.h.b16 %v1726
    %v2184 = vunpack.c.l.b16 %v1727
    %v2185 = vunpack.c.h.b16 %v1727
    %v2186 = vunpack.c.l.b16 %v1728
    %v2187 = vunpack.c.h.b16 %v1728
    %v2188 = vunpack.c.l.b16 %v1729
    %v2189 = vunpack.c.h.b16 %v1729
    %v2190 = vunpack.c.l.b16 %v1730
    %v2191 = vunpack.c.h.b16 %v1730
    %v2192 = vunpack.c.l.b16 %v1731
    %v2193 = vunpack.c.h.b16 %v1731
    %v2194 = vunpack.c.l.b16 %v1732
    %v2195 = vunpack.c.h.b16 %v1732
    %v2196 = vunpack.c.l.b16 %v1733
    %v2197 = vunpack.c.h.b16 %v1733
    %v2198 = vunpack.c.l.b16 %v1734
    %v2199 = vunpack.c.h.b16 %v1734
    %v2200 = vunpack.c.l.b16 %v1735
    %v2201 = vunpack.c.h.b16 %v1735
    %v2202 = vunpack.c.l.b16 %v1736
    %v2203 = vunpack.c.h.b16 %v1736
    %v2204 = vunpack.c.l.b16 %v1737
    %v2205 = vunpack.c.h.b16 %v1737
    %v2206 = vunpack.c.l.b16 %v1738
    %v2207 = vunpack.c.h.b16 %v1738
    %v2208 = vunpack.c.l.b16 %v1739
    %v2209 = vunpack.c.h.b16 %v1739
    %v2210 = vunpack.c.l.b16 %v1740
    %v2211 = vunpack.c.h.b16 %v1740
    %v2212 = vunpack.c.l.b16 %v1741
    %v2213 = vunpack.c.h.b16 %v1741
    %v2214 = vunpack.c.l.b16 %v1742
    %v2215 = vunpack.c.h.b16 %v1742
    %v2216 = vunpack.c.l.b16 %v1743
    %v2217 = vunpack.c.h.b16 %v1743
    %v2218 = vunpack.c.l.b16 %v1744
    %v2219 = vunpack.c.h.b16 %v1744
    %v2220 = vunpack.c.l.b16 %v1745
    %v2221 = vunpack.c.h.b16 %v1745
    %v2222 = vunpack.c.l.b16 %v1746
    %v2223 = vunpack.c.h.b16 %v1746
    %v2224 = vunpack.c.l.b16 %v1747
    %v2225 = vunpack.c.h.b16 %v1747
    %v2226 = vunpack.c.l.b16 %v1748
    %v2227 = vunpack.c.h.b16 %v1748
    %v2228 = vunpack.c.l.b16 %v1749
    %v2229 = vunpack.c.h.b16 %v1749
    %v2230 = vunpack.c.l.b16 %v1750
    %v2231 = vunpack.c.h.b16 %v1750
    %v2232 = vunpack.c.l.b16 %v1751
    %v2233 = vunpack.c.h.b16 %v1751
    %v2234 = vunpack.c.l.b16 %v1752
    %v2235 = vunpack.c.h.b16 %v1752
    %v2236 = vunpack.c.l.b16 %v1753
    %v2237 = vunpack.c.h.b16 %v1753
    %v2238 = vunpack.c.l.b16 %v1754
    %v2239 = vunpack.c.h.b16 %v1754
    %v2240 = vunpack.c.l.b16 %v1755
    %v2241 = vunpack.c.h.b16 %v1755
    %v2242 = vunpack.c.l.b16 %v1756
    %v2243 = vunpack.c.h.b16 %v1756
    %v2244 = vunpack.c.l.b16 %v1757
    %v2245 = vunpack.c.h.b16 %v1757
    %v2246 = vunpack.c.l.b16 %v1758
    %v2247 = vunpack.c.h.b16 %v1758
    %v2248 = vunpack.c.l.b16 %v1759
    %v2249 = vunpack.c.h.b16 %v1759
    %v2250 = vunpack.c.l.b16 %v1760
    %v2251 = vunpack.c.h.b16 %v1760
    %v2252 = vunpack.c.l.b16 %v1761
    %v2253 = vunpack.c.h.b16 %v1761
    %v2254 = vunpack.c.l.b16 %v1762
    %v2255 = vunpack.c.h.b16 %v1762
    %v2256 = vunpack.c.l.b16 %v1763
    %v2257 = vunpack.c.h.b16 %v1763
    %v2258 = vunpack.c.l.b16 %v1764
    %v2259 = vunpack.c.h.b16 %v1764
    %v2260 = vunpack.c.l.b16 %v1765
    %v2261 = vunpack.c.h.b16 %v1765
    %v2262 = vunpack.c.l.b16 %v1766
    %v2263 = vunpack.c.h.b16 %v1766
    %v2264 = vunpack.c.l.b16 %v1767
    %v2265 = vunpack.c.h.b16 %v1767
    %v2266 = vunpack.c.l.b16 %v1768
    %v2267 = vunpack.c.h.b16 %v1768
    %v2268 = vunpack.c.l.b16 %v1769
    %v2269 = vunpack.c.h.b16 %v1769
    %v2270 = vunpack.c.l.b16 %v1770
    %v2271 = vunpack.c.h.b16 %v1770
    %v2272 = vunpack.c.l.b16 %v1771
    %v2273 = vunpack.c.h.b16 %v1771
    %v2274 = vunpack.c.l.b16 %v1772
    %v2275 = vunpack.c.h.b16 %v1772
    %v2276 = vunpack.c.l.b16 %v1773
    %v2277 = vunpack.c.h.b16 %v1773
    %v2278 = vunpack.c.l.b16 %v1774
    %v2279 = vunpack.c.h.b16 %v1774
    %v2280 = vunpack.c.l.b16 %v1775
    %v2281 = vunpack.c.h.b16 %v1775
    %v2282 = vunpack.c.l.b16 %v1776
    %v2283 = vunpack.c.h.b16 %v1776
    %v2284 = vunpack.c.l.b16 %v1777
    %v2285 = vunpack.c.h.b16 %v1777
    %v2286 = vunpack.c.l.b16 %v1778
    %v2287 = vunpack.c.h.b16 %v1778
    %v2288 = vunpack.c.l.b16 %v1779
    %v2289 = vunpack.c.h.b16 %v1779
    %v2290 = vpack.c.b16 %v1986, %v1978
    %v2291 = vpack.c.b16 %v1987, %v1979
    %v2292 = vpack.c.b16 %v1988, %v1980
    %v2293 = vpack.c.b16 %v1989, %v1981
    %v2294 = vpack.c.b16 %v1990, %v1982
    %v2295 = vpack.c.b16 %v1991, %v1983
    %v2296 = vpack.c.b16 %v1992, %v1984
    %v2297 = vpack.c.b16 %v1993, %v1985
    %v2298 = vpack.c.b16 %v2002, %v1994
    %v2299 = vpack.c.b16 %v2003, %v1995
    %v2300 = vpack.c.b16 %v2004, %v1996
    %v2301 = vpack.c.b16 %v2005, %v1997
    %v2302 = vpack.c.b16 %v2006, %v1998
    %v2303 = vpack.c.b16 %v2007, %v1999
    %v2304 = vpack.c.b16 %v2008, %v2000
    %v2305 = vpack.c.b16 %v2009, %v2001
    %v2306 = vpack.c.b16 %v2018, %v2010
    %v2307 = vpack.c.b16 %v2019, %v2011
    %v2308 = vpack.c.b16 %v2020, %v2012
    %v2309 = vpack.c.b16 %v2021, %v2013
    %v2310 = vpack.c.b16 %v2022, %v2014
    %v2311 = vpack.c.b16 %v2023, %v2015
    %v2312 = vpack.c.b16 %v2024, %v2016
    %v2313 = vpack.c.b16 %v2025, %v2017
    %v2314 = vpack.c.b16 %v2034, %v2026
    %v2315 = vpack.c.b16 %v2035, %v2027
    %v2316 = vpack.c.b16 %v2036, %v2028
    %v2317 = vpack.c.b16 %v2037, %v2029
    %v2318 = vpack.c.b16 %v2038, %v2030
    %v2319 = vpack.c.b16 %v2039, %v2031
    %v2320 = vpack.c.b16 %v2040, %v2032
    %v2321 = vpack.c.b16 %v2041, %v2033
    %v2322 = vpack.c.b16 %v2050, %v2042
    %v2323 = vpack.c.b16 %v2051, %v2043
    %v2324 = vpack.c.b16 %v2052, %v2044
    %v2325 = vpack.c.b16 %v2053, %v2045
    %v2326 = vpack.c.b16 %v2054, %v2046
    %v2327 = vpack.c.b16 %v2055, %v2047
    %v2328 = vpack.c.b16 %v2056, %v2048
    %v2329 = vpack.c.b16 %v2057, %v2049
    %v2330 = vpack.c.b16 %v2066, %v2058
    %v2331 = vpack.c.b16 %v2067, %v2059
    %v2332 = vpack.c.b16 %v2068, %v2060
    %v2333 = vpack.c.b16 %v2069, %v2061
    %v2334 = vpack.c.b16 %v2070, %v2062
    %v2335 = vpack.c.b16 %v2071, %v2063
    %v2336 = vpack.c.b16 %v2072, %v2064
    %v2337 = vpack.c.b16 %v2073, %v2065
    %v2338 = vpack.c.b16 %v2082, %v2074
    %v2339 = vpack.c.b16 %v2083, %v2075
    %v2340 = vpack.c.b16 %v2084, %v2076
    %v2341 = vpack.c.b16 %v2085, %v2077
    %v2342 = vpack.c.b16 %v2086, %v2078
    %v2343 = vpack.c.b16 %v2087, %v2079
    %v2344 = vpack.c.b16 %v2088, %v2080
    %v2345 = vpack.c.b16 %v2089, %v2081
    %v2346 = vpack.c.b16 %v2098, %v2090
    %v2347 = vpack.c.b16 %v2099, %v2091
    %v2348 = vpack.c.b16 %v2100, %v2092
    %v2349 = vpack.c.b16 %v2101, %v2093
    %v2350 = vpack.c.b16 %v2102, %v2094
    %v2351 = vpack.c.b16 %v2103, %v2095
    %v2352 = vpack.c.b16 %v2104, %v2096
    %v2353 = vpack.c.b16 %v2105, %v2097
    %v2354 = vpack.c.b16 %v2114, %v2106
    %v2355 = vpack.c.b16 %v2115, %v2107
    %v2356 = vpack.c.b16 %v2116, %v2108
    %v2357 = vpack.c.b16 %v2117, %v2109
    %v2358 = vpack.c.b16 %v2118, %v2110
    %v2359 = vpack.c.b16 %v2119, %v2111
    %v2360 = vpack.c.b16 %v2120, %v2112
    %v2361 = vpack.c.b16 %v2121, %v2113
    %v2362 = vpack.c.b16 %v2130, %v2122
    %v2363 = vpack.c.b16 %v2131, %v2123
    %v2364 = vpack.c.b16 %v2132, %v2124
    %v2365 = vpack.c.b16 %v2133, %v2125
    %v2366 = vpack.c.b16 %v2134, %v2126
    %v2367 = vpack.c.b16 %v2135, %v2127
    %v2368 = vpack.c.b16 %v2136, %v2128
    %v2369 = vpack.c.b16 %v2137, %v2129
    %v2370 = vpack.c.b16 %v2146, %v2138
    %v2371 = vpack.c.b16 %v2147, %v2139
    %v2372 = vpack.c.b16 %v2148, %v2140
    %v2373 = vpack.c.b16 %v2149, %v2141
    %v2374 = vpack.c.b16 %v2150, %v2142
    %v2375 = vpack.c.b16 %v2151, %v2143
    %v2376 = vpack.c.b16 %v2152, %v2144
    %v2377 = vpack.c.b16 %v2153, %v2145
    %v2378 = vpack.c.b16 %v2162, %v2154
    %v2379 = vpack.c.b16 %v2163, %v2155
    %v2380 = vpack.c.b16 %v2164, %v2156
    %v2381 = vpack.c.b16 %v2165, %v2157
    %v2382 = vpack.c.b16 %v2166, %v2158
    %v2383 = vpack.c.b16 %v2167, %v2159
    %v2384 = vpack.c.b16 %v2168, %v2160
    %v2385 = vpack.c.b16 %v2169, %v2161
    %v2386 = vpack.c.b16 %v2178, %v2170
    %v2387 = vpack.c.b16 %v2179, %v2171
    %v2388 = vpack.c.b16 %v2180, %v2172
    %v2389 = vpack.c.b16 %v2181, %v2173
    %v2390 = vpack.c.b16 %v2182, %v2174
    %v2391 = vpack.c.b16 %v2183, %v2175
    %v2392 = vpack.c.b16 %v2184, %v2176
    %v2393 = vpack.c.b16 %v2185, %v2177
    %v2394 = vpack.c.b16 %v2194, %v2186
    %v2395 = vpack.c.b16 %v2195, %v2187
    %v2396 = vpack.c.b16 %v2196, %v2188
    %v2397 = vpack.c.b16 %v2197, %v2189
    %v2398 = vpack.c.b16 %v2198, %v2190
    %v2399 = vpack.c.b16 %v2199, %v2191
    %v2400 = vpack.c.b16 %v2200, %v2192
    %v2401 = vpack.c.b16 %v2201, %v2193
    %v2402 = vpack.c.b16 %v2210, %v2202
    %v2403 = vpack.c.b16 %v2211, %v2203
    %v2404 = vpack.c.b16 %v2212, %v2204
    %v2405 = vpack.c.b16 %v2213, %v2205
    %v2406 = vpack.c.b16 %v2214, %v2206
    %v2407 = vpack.c.b16 %v2215, %v2207
    %v2408 = vpack.c.b16 %v2216, %v2208
    %v2409 = vpack.c.b16 %v2217, %v2209
    %v2410 = vpack.c.b16 %v2226, %v2218
    %v2411 = vpack.c.b16 %v2227, %v2219
    %v2412 = vpack.c.b16 %v2228, %v2220
    %v2413 = vpack.c.b16 %v2229, %v2221
    %v2414 = vpack.c.b16 %v2230, %v2222
    %v2415 = vpack.c.b16 %v2231, %v2223
    %v2416 = vpack.c.b16 %v2232, %v2224
    %v2417 = vpack.c.b16 %v2233, %v2225
    %v2418 = vpack.c.b16 %v2242, %v2234
    %v2419 = vpack.c.b16 %v2243, %v2235
    %v2420 = vpack.c.b16 %v2244, %v2236
    %v2421 = vpack.c.b16 %v2245, %v2237
    %v2422 = vpack.c.b16 %v2246, %v2238
    %v2423 = vpack.c.b16 %v2247, %v2239
    %v2424 = vpack.c.b16 %v2248, %v2240
    %v2425 = vpack.c.b16 %v2249, %v2241
    %v2426 = vpack.c.b16 %v2258, %v2250
    %v2427 = vpack.c.b16 %v2259, %v2251
    %v2428 = vpack.c.b16 %v2260, %v2252
    %v2429 = vpack.c.b16 %v2261, %v2253
    %v2430 = vpack.c.b16 %v2262, %v2254
    %v2431 = vpack.c.b16 %v2263, %v2255
    %v2432 = vpack.c.b16 %v2264, %v2256
    %v2433 = vpack.c.b16 %v2265, %v2257
    %v2434 = vpack.c.b16 %v2274, %v2266
    %v2435 = vpack.c.b16 %v2275, %v2267
    %v2436 = vpack.c.b16 %v2276, %v2268
    %v2437 = vpack.c.b16 %v2277, %v2269
    %v2438 = vpack.c.b16 %v2278, %v2270
    %v2439 = vpack.c.b16 %v2279, %v2271
    %v2440 = vpack.c.b16 %v2280, %v2272
    %v2441 = vpack.c.b16 %v2281, %v2273
    %v2442 = vpack.c.b16 %v2282, %v2282
    %v2443 = vpack.c.b16 %v2283, %v2283
    %v2444 = vpack.c.b16 %v2284, %v2284
    %v2445 = vpack.c.b16 %v2285, %v2285
    %v2446 = vpack.c.b16 %v2286, %v2286
    %v2447 = vpack.c.b16 %v2287, %v2287
    %v2448 = vpack.c.b16 %v2288, %v2288
    %v2449 = vpack.c.b16 %v2289, %v2289
    %vm2602 = vcmask 457728
    %v2604 = vsel %vm2602, %v1623, 0
    %v2607 = vsel %vm599, %v2442, 0
    %v2610 = vsel %vm599, %v2443, 0
    %v2613 = vsel %vm599, %v2444, 0
    %v2616 = vsel %vm599, %v2445, 0
    %v2619 = vsel %vm599, %v2446, 0
    %v2622 = vsel %vm599, %v2447, 0
    %v2625 = vsel %vm599, %v2448, 0
    %v2628 = vsel %vm599, %v2449, 0
    %2630 = vmatprep.subr.bf16.mxu0 %v2291
    %2631 = vmatpush1.bf16.msra.mxu0 %v2290
    %2632 = vmatprep.subr.bf16.mxu0 %v2299
    %2633 = vmatpush1.bf16.msra.mxu0 %v2298
    %2634 = vmatprep.subr.bf16.mxu0 %v2307
    %2635 = vmatpush1.bf16.msra.mxu0 %v2306
    %2636 = vmatprep.subr.bf16.mxu0 %v2315
    %2637 = vmatpush1.bf16.msra.mxu0 %v2314
    %2638 = vmatprep.subr.bf16.mxu0 %v2323
    %2639 = vmatpush1.bf16.msra.mxu0 %v2322
    %2640 = vmatprep.subr.bf16.mxu0 %v2331
    %2641 = vmatpush1.bf16.msra.mxu0 %v2330
    %2642 = vmatprep.subr.bf16.mxu0 %v2339
    %2643 = vmatpush1.bf16.msra.mxu0 %v2338
    %2644 = vmatprep.subr.bf16.mxu0 %v2347
    %2645 = vmatpush1.bf16.msra.mxu0 %v2346
    %2646 = vmatprep.subr.bf16.mxu0 %v2355
    %2647 = vmatpush1.bf16.msra.mxu0 %v2354
    %2648 = vmatprep.subr.bf16.mxu0 %v2363
    %2649 = vmatpush1.bf16.msra.mxu0 %v2362
    %2650 = vmatprep.subr.bf16.mxu0 %v2371
    %2651 = vmatpush1.bf16.msra.mxu0 %v2370
    %2652 = vmatprep.subr.bf16.mxu0 %v2379
    %2653 = vmatpush1.bf16.msra.mxu0 %v2378
    %2654 = vmatprep.subr.bf16.mxu0 %v2387
    %2655 = vmatpush1.bf16.msra.mxu0 %v2386
    %2656 = vmatprep.subr.bf16.mxu0 %v2395
    %2657 = vmatpush1.bf16.msra.mxu0 %v2394
    %2658 = vmatprep.subr.bf16.mxu0 %v2403
    %2659 = vmatpush1.bf16.msra.mxu0 %v2402
    %2660 = vmatprep.subr.bf16.mxu0 %v2411
    %2661 = vmatpush1.bf16.msra.mxu0 %v2410
    %2662 = vmatprep.mubr.bf16.mxu0 %v1622
    %2663 = vmatmul.mubr.bf16.gmra.mrb[0].mxu0 %v1621
    %v2664 = vpop.f32.mrb[0].mxu0
    %v2665 = vadd.f32 %v1785, %v2664
    %v2666 = vpop.f32.mrb[0].mxu0
    %v2667 = vadd.f32 %v1789, %v2666
    %v2668 = vpop.f32.mrb[0].mxu0
    %v2669 = vpop.f32.mrb[0].mxu0
    %2670 = vdwg.mxu0
    %2671 = vmatprep.subr.bf16.mxu0 %v2419
    %2672 = vmatpush1.bf16.msra.mxu0 %v2418
    %2673 = vmatprep.subr.bf16.mxu0 %v2427
    %2674 = vmatpush1.bf16.msra.mxu0 %v2426
    %2675 = vmatprep.subr.bf16.mxu0 %v2435
    %2676 = vmatpush1.bf16.msra.mxu0 %v2434
    %2677 = vmatprep.subr.bf16.mxu0 %v2610
    %2678 = vmatpush1.bf16.msra.mxu0 %v2607
    %2679 = vmatprep.subr.bf16.mxu0 0
    %2680 = vmatpush1.bf16.msra.mxu0 0
    %2681 = vmatprep.subr.bf16.mxu0 0
    %2682 = vmatpush1.bf16.msra.mxu0 0
    %2683 = vmatprep.subr.bf16.mxu0 0
    %2684 = vmatpush1.bf16.msra.mxu0 0
    %2685 = vmatprep.subr.bf16.mxu0 0
    %2686 = vmatpush1.bf16.msra.mxu0 0
    %2687 = vmatprep.subr.bf16.mxu0 0
    %2688 = vmatpush1.bf16.msra.mxu0 0
    %2689 = vmatprep.subr.bf16.mxu0 0
    %2690 = vmatpush1.bf16.msra.mxu0 0
    %2691 = vmatprep.subr.bf16.mxu0 0
    %2692 = vmatpush1.bf16.msra.mxu0 0
    %2693 = vmatprep.subr.bf16.mxu0 0
    %2694 = vmatpush1.bf16.msra.mxu0 0
    %2695 = vmatprep.subr.bf16.mxu0 0
    %2696 = vmatpush1.bf16.msra.mxu0 0
    %2697 = vmatprep.subr.bf16.mxu0 0
    %2698 = vmatpush1.bf16.msra.mxu0 0
    %2699 = vmatprep.subr.bf16.mxu0 0
    %2700 = vmatpush1.bf16.msra.mxu0 0
    %2701 = vmatprep.subr.bf16.mxu0 0
    %2702 = vmatpush1.bf16.msra.mxu0 0
    %2703 = vmatprep.mubr.bf16.mxu0 0
    %2704 = vmatmul.mubr.bf16.gmra.mrb[0].mxu0 %v2604
    %v2705 = vpop.f32.mrb[0].mxu0
    %v2706 = vadd.f32 %v2665, %v2705
    %v2707 = vpop.f32.mrb[0].mxu0
    %v2708 = vadd.f32 %v2667, %v2707
    %v2709 = vpop.f32.mrb[0].mxu0
    %v2710 = vpop.f32.mrb[0].mxu0
    %2711 = vdwg.mxu0
    %2712 = vmatprep.subr.bf16.mxu0 %v2293
    %2713 = vmatpush1.bf16.msra.mxu0 %v2292
    %2714 = vmatprep.subr.bf16.mxu0 %v2301
    %2715 = vmatpush1.bf16.msra.mxu0 %v2300
    %2716 = vmatprep.subr.bf16.mxu0 %v2309
    %2717 = vmatpush1.bf16.msra.mxu0 %v2308
    %2718 = vmatprep.subr.bf16.mxu0 %v2317
    %2719 = vmatpush1.bf16.msra.mxu0 %v2316
    %2720 = vmatprep.subr.bf16.mxu0 %v2325
    %2721 = vmatpush1.bf16.msra.mxu0 %v2324
    %2722 = vmatprep.subr.bf16.mxu0 %v2333
    %2723 = vmatpush1.bf16.msra.mxu0 %v2332
    %2724 = vmatprep.subr.bf16.mxu0 %v2341
    %2725 = vmatpush1.bf16.msra.mxu0 %v2340
    %2726 = vmatprep.subr.bf16.mxu0 %v2349
    %2727 = vmatpush1.bf16.msra.mxu0 %v2348
    %2728 = vmatprep.subr.bf16.mxu0 %v2357
    %2729 = vmatpush1.bf16.msra.mxu0 %v2356
    %2730 = vmatprep.subr.bf16.mxu0 %v2365
    %2731 = vmatpush1.bf16.msra.mxu0 %v2364
    %2732 = vmatprep.subr.bf16.mxu0 %v2373
    %2733 = vmatpush1.bf16.msra.mxu0 %v2372
    %2734 = vmatprep.subr.bf16.mxu0 %v2381
    %2735 = vmatpush1.bf16.msra.mxu0 %v2380
    %2736 = vmatprep.subr.bf16.mxu0 %v2389
    %2737 = vmatpush1.bf16.msra.mxu0 %v2388
    %2738 = vmatprep.subr.bf16.mxu0 %v2397
    %2739 = vmatpush1.bf16.msra.mxu0 %v2396
    %2740 = vmatprep.subr.bf16.mxu0 %v2405
    %2741 = vmatpush1.bf16.msra.mxu0 %v2404
    %2742 = vmatprep.subr.bf16.mxu0 %v2413
    %2743 = vmatpush1.bf16.msra.mxu0 %v2412
    %2744 = vmatprep.mubr.bf16.mxu0 %v1622
    %2745 = vmatmul.mubr.bf16.gmra.mrb[0].mxu0 %v1621
    %v2746 = vpop.f32.mrb[0].mxu0
    %v2747 = vadd.f32 %v1793, %v2746
    %v2748 = vpop.f32.mrb[0].mxu0
    %v2749 = vadd.f32 %v1797, %v2748
    %v2750 = vpop.f32.mrb[0].mxu0
    %v2751 = vpop.f32.mrb[0].mxu0
    %2752 = vdwg.mxu0
    %2753 = vmatprep.subr.bf16.mxu0 %v2421
    %2754 = vmatpush1.bf16.msra.mxu0 %v2420
    %2755 = vmatprep.subr.bf16.mxu0 %v2429
    %2756 = vmatpush1.bf16.msra.mxu0 %v2428
    %2757 = vmatprep.subr.bf16.mxu0 %v2437
    %2758 = vmatpush1.bf16.msra.mxu0 %v2436
    %2759 = vmatprep.subr.bf16.mxu0 %v2616
    %2760 = vmatpush1.bf16.msra.mxu0 %v2613
    %2761 = vmatprep.subr.bf16.mxu0 0
    %2762 = vmatpush1.bf16.msra.mxu0 0
    %2763 = vmatprep.subr.bf16.mxu0 0
    %2764 = vmatpush1.bf16.msra.mxu0 0
    %2765 = vmatprep.subr.bf16.mxu0 0
    %2766 = vmatpush1.bf16.msra.mxu0 0
    %2767 = vmatprep.subr.bf16.mxu0 0
    %2768 = vmatpush1.bf16.msra.mxu0 0
    %2769 = vmatprep.subr.bf16.mxu0 0
    %2770 = vmatpush1.bf16.msra.mxu0 0
    %2771 = vmatprep.subr.bf16.mxu0 0
    %2772 = vmatpush1.bf16.msra.mxu0 0
    %2773 = vmatprep.subr.bf16.mxu0 0
    %2774 = vmatpush1.bf16.msra.mxu0 0
    %2775 = vmatprep.subr.bf16.mxu0 0
    %2776 = vmatpush1.bf16.msra.mxu0 0
    %2777 = vmatprep.subr.bf16.mxu0 0
    %2778 = vmatpush1.bf16.msra.mxu0 0
    %2779 = vmatprep.subr.bf16.mxu0 0
    %2780 = vmatpush1.bf16.msra.mxu0 0
    %2781 = vmatprep.subr.bf16.mxu0 0
    %2782 = vmatpush1.bf16.msra.mxu0 0
    %2783 = vmatprep.subr.bf16.mxu0 0
    %2784 = vmatpush1.bf16.msra.mxu0 0
    %2785 = vmatprep.mubr.bf16.mxu0 0
    %2786 = vmatmul.mubr.bf16.gmra.mrb[0].mxu0 %v2604
    %v2787 = vpop.f32.mrb[0].mxu0
    %v2788 = vadd.f32 %v2747, %v2787
    %v2789 = vpop.f32.mrb[0].mxu0
    %v2790 = vadd.f32 %v2749, %v2789
    %v2791 = vpop.f32.mrb[0].mxu0
    %v2792 = vpop.f32.mrb[0].mxu0
    %2793 = vdwg.mxu0
    %2794 = vmatprep.subr.bf16.mxu0 %v2295
    %2795 = vmatpush1.bf16.msra.mxu0 %v2294
    %2796 = vmatprep.subr.bf16.mxu0 %v2303
    %2797 = vmatpush1.bf16.msra.mxu0 %v2302
    %2798 = vmatprep.subr.bf16.mxu0 %v2311
    %2799 = vmatpush1.bf16.msra.mxu0 %v2310
    %2800 = vmatprep.subr.bf16.mxu0 %v2319
    %2801 = vmatpush1.bf16.msra.mxu0 %v2318
    %2802 = vmatprep.subr.bf16.mxu0 %v2327
    %2803 = vmatpush1.bf16.msra.mxu0 %v2326
    %2804 = vmatprep.subr.bf16.mxu0 %v2335
    %2805 = vmatpush1.bf16.msra.mxu0 %v2334
    %2806 = vmatprep.subr.bf16.mxu0 %v2343
    %2807 = vmatpush1.bf16.msra.mxu0 %v2342
    %2808 = vmatprep.subr.bf16.mxu0 %v2351
    %2809 = vmatpush1.bf16.msra.mxu0 %v2350
    %2810 = vmatprep.subr.bf16.mxu0 %v2359
    %2811 = vmatpush1.bf16.msra.mxu0 %v2358
    %2812 = vmatprep.subr.bf16.mxu0 %v2367
    %2813 = vmatpush1.bf16.msra.mxu0 %v2366
    %2814 = vmatprep.subr.bf16.mxu0 %v2375
    %2815 = vmatpush1.bf16.msra.mxu0 %v2374
    %2816 = vmatprep.subr.bf16.mxu0 %v2383
    %2817 = vmatpush1.bf16.msra.mxu0 %v2382
    %2818 = vmatprep.subr.bf16.mxu0 %v2391
    %2819 = vmatpush1.bf16.msra.mxu0 %v2390
    %2820 = vmatprep.subr.bf16.mxu0 %v2399
    %2821 = vmatpush1.bf16.msra.mxu0 %v2398
    %2822 = vmatprep.subr.bf16.mxu0 %v2407
    %2823 = vmatpush1.bf16.msra.mxu0 %v2406
    %2824 = vmatprep.subr.bf16.mxu0 %v2415
    %2825 = vmatpush1.bf16.msra.mxu0 %v2414
    %2826 = vmatprep.mubr.bf16.mxu0 %v1622
    %2827 = vmatmul.mubr.bf16.gmra.mrb[0].mxu0 %v1621
    %v2828 = vpop.f32.mrb[0].mxu0
    %v2829 = vadd.f32 %v1801, %v2828
    %v2830 = vpop.f32.mrb[0].mxu0
    %v2831 = vadd.f32 %v1805, %v2830
    %v2832 = vpop.f32.mrb[0].mxu0
    %v2833 = vpop.f32.mrb[0].mxu0
    %2834 = vdwg.mxu0
    %2835 = vmatprep.subr.bf16.mxu0 %v2423
    %2836 = vmatpush1.bf16.msra.mxu0 %v2422
    %2837 = vmatprep.subr.bf16.mxu0 %v2431
    %2838 = vmatpush1.bf16.msra.mxu0 %v2430
    %2839 = vmatprep.subr.bf16.mxu0 %v2439
    %2840 = vmatpush1.bf16.msra.mxu0 %v2438
    %2841 = vmatprep.subr.bf16.mxu0 %v2622
    %2842 = vmatpush1.bf16.msra.mxu0 %v2619
    %2843 = vmatprep.subr.bf16.mxu0 0
    %2844 = vmatpush1.bf16.msra.mxu0 0
    %2845 = vmatprep.subr.bf16.mxu0 0
    %2846 = vmatpush1.bf16.msra.mxu0 0
    %2847 = vmatprep.subr.bf16.mxu0 0
    %2848 = vmatpush1.bf16.msra.mxu0 0
    %2849 = vmatprep.subr.bf16.mxu0 0
    %2850 = vmatpush1.bf16.msra.mxu0 0
    %2851 = vmatprep.subr.bf16.mxu0 0
    %2852 = vmatpush1.bf16.msra.mxu0 0
    %2853 = vmatprep.subr.bf16.mxu0 0
    %2854 = vmatpush1.bf16.msra.mxu0 0
    %2855 = vmatprep.subr.bf16.mxu0 0
    %2856 = vmatpush1.bf16.msra.mxu0 0
    %2857 = vmatprep.subr.bf16.mxu0 0
    %2858 = vmatpush1.bf16.msra.mxu0 0
    %2859 = vmatprep.subr.bf16.mxu0 0
    %2860 = vmatpush1.bf16.msra.mxu0 0
    %2861 = vmatprep.subr.bf16.mxu0 0
    %2862 = vmatpush1.bf16.msra.mxu0 0
    %2863 = vmatprep.subr.bf16.mxu0 0
    %2864 = vmatpush1.bf16.msra.mxu0 0
    %2865 = vmatprep.subr.bf16.mxu0 0
    %2866 = vmatpush1.bf16.msra.mxu0 0
    %2867 = vmatprep.mubr.bf16.mxu0 0
    %2868 = vmatmul.mubr.bf16.gmra.mrb[0].mxu0 %v2604
    %v2869 = vpop.f32.mrb[0].mxu0
    %v2870 = vadd.f32 %v2829, %v2869
    %v2871 = vpop.f32.mrb[0].mxu0
    %v2872 = vadd.f32 %v2831, %v2871
    %v2873 = vpop.f32.mrb[0].mxu0
    %v2874 = vpop.f32.mrb[0].mxu0
    %2875 = vdwg.mxu0
    %2876 = vmatprep.subr.bf16.mxu0 %v2297
    %2877 = vmatpush1.bf16.msra.mxu0 %v2296
    %2878 = vmatprep.subr.bf16.mxu0 %v2305
    %2879 = vmatpush1.bf16.msra.mxu0 %v2304
    %2880 = vmatprep.subr.bf16.mxu0 %v2313
    %2881 = vmatpush1.bf16.msra.mxu0 %v2312
    %2882 = vmatprep.subr.bf16.mxu0 %v2321
    %2883 = vmatpush1.bf16.msra.mxu0 %v2320
    %2884 = vmatprep.subr.bf16.mxu0 %v2329
    %2885 = vmatpush1.bf16.msra.mxu0 %v2328
    %2886 = vmatprep.subr.bf16.mxu0 %v2337
    %2887 = vmatpush1.bf16.msra.mxu0 %v2336
    %2888 = vmatprep.subr.bf16.mxu0 %v2345
    %2889 = vmatpush1.bf16.msra.mxu0 %v2344
    %2890 = vmatprep.subr.bf16.mxu0 %v2353
    %2891 = vmatpush1.bf16.msra.mxu0 %v2352
    %2892 = vmatprep.subr.bf16.mxu0 %v2361
    %2893 = vmatpush1.bf16.msra.mxu0 %v2360
    %2894 = vmatprep.subr.bf16.mxu0 %v2369
    %2895 = vmatpush1.bf16.msra.mxu0 %v2368
    %2896 = vmatprep.subr.bf16.mxu0 %v2377
    %2897 = vmatpush1.bf16.msra.mxu0 %v2376
    %2898 = vmatprep.subr.bf16.mxu0 %v2385
    %2899 = vmatpush1.bf16.msra.mxu0 %v2384
    %2900 = vmatprep.subr.bf16.mxu0 %v2393
    %2901 = vmatpush1.bf16.msra.mxu0 %v2392
    %2902 = vmatprep.subr.bf16.mxu0 %v2401
    %2903 = vmatpush1.bf16.msra.mxu0 %v2400
    %2904 = vmatprep.subr.bf16.mxu0 %v2409
    %2905 = vmatpush1.bf16.msra.mxu0 %v2408
    %2906 = vmatprep.subr.bf16.mxu0 %v2417
    %2907 = vmatpush1.bf16.msra.mxu0 %v2416
    %2908 = vmatprep.mubr.bf16.mxu0 %v1622
    %2909 = vmatmul.mubr.bf16.gmra.mrb[0].mxu0 %v1621
    %v2910 = vpop.f32.mrb[0].mxu0
    %v2911 = vadd.f32 %v1809, %v2910
    %v2912 = vpop.f32.mrb[0].mxu0
    %v2913 = vadd.f32 %v1813, %v2912
    %v2914 = vpop.f32.mrb[0].mxu0
    %v2915 = vpop.f32.mrb[0].mxu0
    %2916 = vdwg.mxu0
    %2917 = vmatprep.subr.bf16.mxu0 %v2425
    %2918 = vmatpush1.bf16.msra.mxu0 %v2424
    %2919 = vmatprep.subr.bf16.mxu0 %v2433
    %2920 = vmatpush1.bf16.msra.mxu0 %v2432
    %2921 = vmatprep.subr.bf16.mxu0 %v2441
    %2922 = vmatpush1.bf16.msra.mxu0 %v2440
    %2923 = vmatprep.subr.bf16.mxu0 %v2628
    %2924 = vmatpush1.bf16.msra.mxu0 %v2625
    %2925 = vmatprep.subr.bf16.mxu0 0
    %2926 = vmatpush1.bf16.msra.mxu0 0
    %2927 = vmatprep.subr.bf16.mxu0 0
    %2928 = vmatpush1.bf16.msra.mxu0 0
    %2929 = vmatprep.subr.bf16.mxu0 0
    %2930 = vmatpush1.bf16.msra.mxu0 0
    %2931 = vmatprep.subr.bf16.mxu0 0
    %2932 = vmatpush1.bf16.msra.mxu0 0
    %2933 = vmatprep.subr.bf16.mxu0 0
    %2934 = vmatpush1.bf16.msra.mxu0 0
    %2935 = vmatprep.subr.bf16.mxu0 0
    %2936 = vmatpush1.bf16.msra.mxu0 0
    %2937 = vmatprep.subr.bf16.mxu0 0
    %2938 = vmatpush1.bf16.msra.mxu0 0
    %2939 = vmatprep.subr.bf16.mxu0 0
    %2940 = vmatpush1.bf16.msra.mxu0 0
    %2941 = vmatprep.subr.bf16.mxu0 0
    %2942 = vmatpush1.bf16.msra.mxu0 0
    %2943 = vmatprep.subr.bf16.mxu0 0
    %2944 = vmatpush1.bf16.msra.mxu0 0
    %2945 = vmatprep.subr.bf16.mxu0 0
    %2946 = vmatpush1.bf16.msra.mxu0 0
    %2947 = vmatprep.subr.bf16.mxu0 0
    %2948 = vmatpush1.bf16.msra.mxu0 0
    %2949 = vmatprep.mubr.bf16.mxu0 0
    %2950 = vmatmul.mubr.bf16.gmra.mrb[0].mxu0 %v2604
    %v2951 = vpop.f32.mrb[0].mxu0
    %v2952 = vadd.f32 %v2911, %v2951
    %v2953 = vpop.f32.mrb[0].mxu0
    %v2954 = vadd.f32 %v2913, %v2953
    %v2955 = vpop.f32.mrb[0].mxu0
    %v2956 = vpop.f32.mrb[0].mxu0
    %2957 = vdwg.mxu0
    %v2958 = vmax.f32 %v2706, 0.0
    %v2959 = vmax.f32 %v2708, 0.0
    %v2960 = vmax.f32 %v2788, 0.0
    %v2961 = vmax.f32 %v2790, 0.0
    %v2962 = vmax.f32 %v2870, 0.0
    %v2963 = vmax.f32 %v2872, 0.0
    %v2964 = vmax.f32 %v2952, 0.0
    %v2965 = vmax.f32 %v2954, 0.0
    %v2966 = vpack.c.bf16 %v2958, %v2958
    %v2967 = vpack.c.bf16 %v2959, %v2959
    %v2968 = vpack.c.bf16 %v2960, %v2960
    %v2969 = vpack.c.bf16 %v2961, %v2961
    %v2970 = vpack.c.bf16 %v2962, %v2962
    %v2971 = vpack.c.bf16 %v2963, %v2963
    %v2972 = vpack.c.bf16 %v2964, %v2964
    %v2973 = vpack.c.bf16 %v2965, %v2965
    %v2974 = vld [vmem:[#allocation13] sm:$0xff]
    %v2975 = vld [vmem:[#allocation13 + $0x8] sm:$0xff]
    %v2976 = vld [vmem:[#allocation13 + $0x10] sm:$0xff]
    %v2977 = vld [vmem:[#allocation13 + $0x18] sm:$0xff]
    %v2978 = vld [vmem:[#allocation13 + $0x20] sm:$0xff]
    %v2979 = vld [vmem:[#allocation13 + $0x28] sm:$0xff]
    %v2980 = vld [vmem:[#allocation13 + $0x30] sm:$0xff]
    %v2981 = vld [vmem:[#allocation13 + $0x38] sm:$0xff]
    %v2982 = vld [vmem:[#allocation13 + $0x40] sm:$0xff]
    %v2983 = vld [vmem:[#allocation13 + $0x48] sm:$0xff]
    %v2984 = vld [vmem:[#allocation13 + $0x50] sm:$0xff]
    %v2985 = vld [vmem:[#allocation13 + $0x58] sm:$0xff]
    %v2986 = vld [vmem:[#allocation13 + $0x60] sm:$0xff]
    %v2987 = vld [vmem:[#allocation13 + $0x68] sm:$0xff]
    %v2988 = vld [vmem:[#allocation13 + $0x70] sm:$0xff]
    %v2989 = vld [vmem:[#allocation13 + $0x78] sm:$0xff]
    %v2990 = vld [vmem:[#allocation13 + $0x80] sm:$0xff]
    %v2991 = vld [vmem:[#allocation13 + $0x88] sm:$0xff]
    %v2992 = vld [vmem:[#allocation13 + $0x90] sm:$0xff]
    %v2993 = vld [vmem:[#allocation13 + $0x98] sm:$0xff]
    %v2994 = vld [vmem:[#allocation13 + $0xa0] sm:$0xff]
    %v2995 = vld [vmem:[#allocation13 + $0xa8] sm:$0xff]
    %v2996 = vld [vmem:[#allocation13 + $0xb0] sm:$0xff]
    %v2997 = vld [vmem:[#allocation13 + $0xb8] sm:$0xff]
    %v2998 = vld [vmem:[#allocation13 + $0xc0] sm:$0xff]
    %v2999 = vld [vmem:[#allocation13 + $0xc8] sm:$0xff]
    %v3000 = vld [vmem:[#allocation13 + $0xd0] sm:$0xff]
    %v3001 = vld [vmem:[#allocation13 + $0xd8] sm:$0xff]
    %v3002 = vld [vmem:[#allocation13 + $0xe0] sm:$0xff]
    %v3003 = vld [vmem:[#allocation13 + $0xe8] sm:$0xff]
    %v3004 = vld [vmem:[#allocation13 + $0xf0] sm:$0xff]
    %v3005 = vld [vmem:[#allocation13 + $0xf8] sm:$0xff]
    %v3006 = vld [vmem:[#allocation13 + $0x100] sm:$0xff]
    %v3007 = vld [vmem:[#allocation13 + $0x108] sm:$0xff]
    %v3008 = vld [vmem:[#allocation13 + $0x110] sm:$0xff]
    %v3009 = vld [vmem:[#allocation13 + $0x118] sm:$0xff]
    %v3010 = vld [vmem:[#allocation13 + $0x120] sm:$0xff]
    %v3011 = vld [vmem:[#allocation13 + $0x128] sm:$0xff]
    %v3012 = vld [vmem:[#allocation13 + $0x130] sm:$0xff]
    %v3013 = vld [vmem:[#allocation13 + $0x138] sm:$0xff]
    %v3014 = vld [vmem:[#allocation13 + $0x140] sm:$0xff]
    %v3015 = vld [vmem:[#allocation13 + $0x148] sm:$0xff]
    %v3016 = vld [vmem:[#allocation13 + $0x150] sm:$0xff]
    %v3017 = vld [vmem:[#allocation13 + $0x158] sm:$0xff]
    %v3018 = vld [vmem:[#allocation13 + $0x160] sm:$0xff]
    %v3019 = vld [vmem:[#allocation13 + $0x168] sm:$0xff]
    %v3020 = vld [vmem:[#allocation13 + $0x170] sm:$0xff]
    %v3021 = vld [vmem:[#allocation13 + $0x178] sm:$0xff]
    %v3022 = vld [vmem:[#allocation13 + $0x180] sm:$0xff]
    %v3023 = vld [vmem:[#allocation13 + $0x188] sm:$0xff]
    %v3024 = vld [vmem:[#allocation13 + $0x190] sm:$0xff]
    %v3025 = vld [vmem:[#allocation13 + $0x198] sm:$0xff]
    %v3026 = vld [vmem:[#allocation13 + $0x1a0] sm:$0xff]
    %v3027 = vld [vmem:[#allocation13 + $0x1a8] sm:$0xff]
    %v3028 = vld [vmem:[#allocation13 + $0x1b0] sm:$0xff]
    %v3029 = vld [vmem:[#allocation13 + $0x1b8] sm:$0xff]
    %v3030 = vld [vmem:[#allocation13 + $0x1c0] sm:$0xff]
    %v3031 = vld [vmem:[#allocation13 + $0x1c8] sm:$0xff]
    %v3032 = vld [vmem:[#allocation13 + $0x1d0] sm:$0xff]
    %v3033 = vld [vmem:[#allocation13 + $0x1d8] sm:$0xff]
    %v3034 = vld [vmem:[#allocation13 + $0x1e0] sm:$0xff]
    %v3035 = vld [vmem:[#allocation13 + $0x1e8] sm:$0xff]
    %v3036 = vld [vmem:[#allocation13 + $0x1f0] sm:$0xff]
    %v3037 = vld [vmem:[#allocation13 + $0x1f8] sm:$0xff]
    %v3038 = vld [vmem:[#allocation13 + $0x200] sm:$0xff]
    %v3039 = vld [vmem:[#allocation13 + $0x208] sm:$0xff]
    %v3040 = vld [vmem:[#allocation13 + $0x210] sm:$0xff]
    %v3041 = vld [vmem:[#allocation13 + $0x218] sm:$0xff]
    %v3042 = vld [vmem:[#allocation13 + $0x220] sm:$0xff]
    %v3043 = vld [vmem:[#allocation13 + $0x228] sm:$0xff]
    %v3044 = vld [vmem:[#allocation13 + $0x230] sm:$0xff]
    %v3045 = vld [vmem:[#allocation13 + $0x238] sm:$0xff]
    %v3046 = vld [vmem:[#allocation13 + $0x240] sm:$0xff]
    %v3047 = vld [vmem:[#allocation13 + $0x248] sm:$0xff]
    %v3048 = vld [vmem:[#allocation13 + $0x250] sm:$0xff]
    %v3049 = vld [vmem:[#allocation13 + $0x258] sm:$0xff]
    %v3050 = vld [vmem:[#allocation13 + $0x260] sm:$0xff]
    %v3051 = vld [vmem:[#allocation13 + $0x268] sm:$0xff]
    %v3052 = vld [vmem:[#allocation13 + $0x270] sm:$0xff]
    %v3053 = vld [vmem:[#allocation13 + $0x278] sm:$0xff]
    %v3054 = vld [vmem:[#allocation13 + $0x280] sm:$0xff]
    %v3055 = vld [vmem:[#allocation13 + $0x288] sm:$0xff]
    %v3056 = vld [vmem:[#allocation13 + $0x290] sm:$0xff]
    %v3057 = vld [vmem:[#allocation13 + $0x298] sm:$0xff]
    %v3058 = vld [vmem:[#allocation13 + $0x2a0] sm:$0xff]
    %v3059 = vld [vmem:[#allocation13 + $0x2a8] sm:$0xff]
    %v3060 = vld [vmem:[#allocation13 + $0x2b0] sm:$0xff]
    %v3061 = vld [vmem:[#allocation13 + $0x2b8] sm:$0xff]
    %v3062 = vld [vmem:[#allocation13 + $0x2c0] sm:$0xff]
    %v3063 = vld [vmem:[#allocation13 + $0x2c8] sm:$0xff]
    %v3064 = vld [vmem:[#allocation13 + $0x2d0] sm:$0xff]
    %v3065 = vld [vmem:[#allocation13 + $0x2d8] sm:$0xff]
    %v3066 = vld [vmem:[#allocation13 + $0x2e0] sm:$0xff]
    %v3067 = vld [vmem:[#allocation13 + $0x2e8] sm:$0xff]
    %v3068 = vld [vmem:[#allocation13 + $0x2f0] sm:$0xff]
    %v3069 = vld [vmem:[#allocation13 + $0x2f8] sm:$0xff]
    %v3070 = vld [vmem:[#allocation13 + $0x300] sm:$0xff]
    %v3071 = vld [vmem:[#allocation13 + $0x308] sm:$0xff]
    %v3072 = vld [vmem:[#allocation13 + $0x310] sm:$0xff]
    %v3073 = vld [vmem:[#allocation13 + $0x318] sm:$0xff]
    %v3074 = vld [vmem:[#allocation13 + $0x320] sm:$0xff]
    %v3075 = vld [vmem:[#allocation13 + $0x328] sm:$0xff]
    %v3076 = vld [vmem:[#allocation13 + $0x330] sm:$0xff]
    %v3077 = vld [vmem:[#allocation13 + $0x338] sm:$0xff]
    %v3078 = vld [vmem:[#allocation13 + $0x340] sm:$0xff]
    %v3079 = vld [vmem:[#allocation13 + $0x348] sm:$0xff]
    %v3080 = vld [vmem:[#allocation13 + $0x350] sm:$0xff]
    %v3081 = vld [vmem:[#allocation13 + $0x358] sm:$0xff]
    %v3082 = vld [vmem:[#allocation13 + $0x360] sm:$0xff]
    %v3083 = vld [vmem:[#allocation13 + $0x368] sm:$0xff]
    %v3084 = vld [vmem:[#allocation13 + $0x370] sm:$0xff]
    %v3085 = vld [vmem:[#allocation13 + $0x378] sm:$0xff]
    %v3086 = vld [vmem:[#allocation13 + $0x380] sm:$0xff]
    %v3087 = vld [vmem:[#allocation13 + $0x388] sm:$0xff]
    %v3088 = vld [vmem:[#allocation13 + $0x390] sm:$0xff]
    %v3089 = vld [vmem:[#allocation13 + $0x398] sm:$0xff]
    %v3090 = vld [vmem:[#allocation13 + $0x3a0] sm:$0xff]
    %v3091 = vld [vmem:[#allocation13 + $0x3a8] sm:$0xff]
    %v3092 = vld [vmem:[#allocation13 + $0x3b0] sm:$0xff]
    %v3093 = vld [vmem:[#allocation13 + $0x3b8] sm:$0xff]
    %v3094 = vld [vmem:[#allocation13 + $0x3c0] sm:$0xff]
    %v3095 = vld [vmem:[#allocation13 + $0x3c8] sm:$0xff]
    %v3096 = vld [vmem:[#allocation13 + $0x3d0] sm:$0xff]
    %v3097 = vld [vmem:[#allocation13 + $0x3d8] sm:$0xff]
    %v3098 = vld [vmem:[#allocation13 + $0x3e0] sm:$0xff]
    %v3099 = vld [vmem:[#allocation13 + $0x3e8] sm:$0xff]
    %v3100 = vld [vmem:[#allocation13 + $0x3f0] sm:$0xff]
    %v3101 = vld [vmem:[#allocation13 + $0x3f8] sm:$0xff]
    %v3102 = vld [vmem:[#allocation13 + $0x400] sm:$0xff]
    %v3103 = vld [vmem:[#allocation13 + $0x408] sm:$0xff]
    %v3104 = vld [vmem:[#allocation13 + $0x410] sm:$0xff]
    %v3105 = vld [vmem:[#allocation13 + $0x418] sm:$0xff]
    %v3106 = vld [vmem:[#allocation13 + $0x420] sm:$0xff]
    %v3107 = vld [vmem:[#allocation13 + $0x428] sm:$0xff]
    %v3108 = vld [vmem:[#allocation13 + $0x430] sm:$0xff]
    %v3109 = vld [vmem:[#allocation13 + $0x438] sm:$0xff]
    %v3110 = vld [vmem:[#allocation13 + $0x440] sm:$0xff]
    %v3111 = vld [vmem:[#allocation13 + $0x448] sm:$0xff]
    %v3112 = vld [vmem:[#allocation13 + $0x450] sm:$0xff]
    %v3113 = vld [vmem:[#allocation13 + $0x458] sm:$0xff]
    %v3114 = vld [vmem:[#allocation13 + $0x460] sm:$0xff]
    %v3115 = vld [vmem:[#allocation13 + $0x468] sm:$0xff]
    %v3116 = vld [vmem:[#allocation13 + $0x470] sm:$0xff]
    %v3117 = vld [vmem:[#allocation13 + $0x478] sm:$0xff]
    %v3118 = vld [vmem:[#allocation13 + $0x480] sm:$0xff]
    %v3119 = vld [vmem:[#allocation13 + $0x488] sm:$0xff]
    %v3120 = vld [vmem:[#allocation13 + $0x490] sm:$0xff]
    %v3121 = vld [vmem:[#allocation13 + $0x498] sm:$0xff]
    %v3122 = vld [vmem:[#allocation13 + $0x4a0] sm:$0xff]
    %v3123 = vld [vmem:[#allocation13 + $0x4a8] sm:$0xff]
    %v3124 = vld [vmem:[#allocation13 + $0x4b0] sm:$0xff]
    %v3125 = vld [vmem:[#allocation13 + $0x4b8] sm:$0xff]
    %v3126 = vld [vmem:[#allocation13 + $0x4c0] sm:$0xff]
    %v3127 = vld [vmem:[#allocation13 + $0x4c8] sm:$0xff]
    %v3128 = vld [vmem:[#allocation13 + $0x4d0] sm:$0xff]
    %v3129 = vld [vmem:[#allocation13 + $0x4d8] sm:$0xff]
    %v3130 = vld [vmem:[#allocation13 + $0x4e0] sm:$0xff]
    %v3131 = vld [vmem:[#allocation13 + $0x4e8] sm:$0xff]
    %v3132 = vld [vmem:[#allocation13 + $0x4f0] sm:$0xff]
    %v3133 = vld [vmem:[#allocation13 + $0x4f8] sm:$0xff]
    %v3134 = vld [vmem:[#allocation13 + $0x500] sm:$0xff]
    %v3135 = vld [vmem:[#allocation13 + $0x508] sm:$0xff]
    %v3136 = vld [vmem:[#allocation13 + $0x510] sm:$0xff]
    %v3137 = vld [vmem:[#allocation13 + $0x518] sm:$0xff]
    %v3138 = vld [vmem:[#allocation13 + $0x520] sm:$0xff]
    %v3139 = vld [vmem:[#allocation13 + $0x528] sm:$0xff]
    %v3140 = vld [vmem:[#allocation13 + $0x530] sm:$0xff]
    %v3141 = vld [vmem:[#allocation13 + $0x538] sm:$0xff]
    %v3142 = vld [vmem:[#allocation13 + $0x540] sm:$0xff]
    %v3143 = vld [vmem:[#allocation13 + $0x548] sm:$0xff]
    %v3144 = vld [vmem:[#allocation13 + $0x550] sm:$0xff]
    %v3145 = vld [vmem:[#allocation13 + $0x558] sm:$0xff]
    %v3146 = vld [vmem:[#allocation13 + $0x560] sm:$0xff]
    %v3147 = vld [vmem:[#allocation13 + $0x568] sm:$0xff]
    %v3148 = vld [vmem:[#allocation13 + $0x570] sm:$0xff]
    %v3149 = vld [vmem:[#allocation13 + $0x578] sm:$0xff]
    %v3150 = vld [vmem:[#allocation13 + $0x580] sm:$0xff]
    %v3151 = vld [vmem:[#allocation13 + $0x588] sm:$0xff]
    %v3152 = vld [vmem:[#allocation13 + $0x590] sm:$0xff]
    %v3153 = vld [vmem:[#allocation13 + $0x598] sm:$0xff]
    %v3154 = vld [vmem:[#allocation13 + $0x5a0] sm:$0xff]
    %v3155 = vld [vmem:[#allocation13 + $0x5a8] sm:$0xff]
    %v3156 = vld [vmem:[#allocation13 + $0x5b0] sm:$0xff]
    %v3157 = vld [vmem:[#allocation13 + $0x5b8] sm:$0xff]
    %v3158 = vld [vmem:[#allocation13 + $0x5c0] sm:$0xff]
    %v3159 = vld [vmem:[#allocation13 + $0x5c8] sm:$0xff]
    %v3160 = vld [vmem:[#allocation13 + $0x5d0] sm:$0xff]
    %v3161 = vld [vmem:[#allocation13 + $0x5d8] sm:$0xff]
    %v3162 = vld [vmem:[#allocation13 + $0x5e0] sm:$0xff]
    %v3163 = vld [vmem:[#allocation13 + $0x5e8] sm:$0xff]
    %v3164 = vld [vmem:[#allocation13 + $0x5f0] sm:$0xff]
    %v3165 = vld [vmem:[#allocation13 + $0x5f8] sm:$0xff]
    %v3166 = vld [vmem:[#allocation13 + $0x600] sm:$0xff]
    %v3167 = vld [vmem:[#allocation13 + $0x608] sm:$0xff]
    %v3168 = vld [vmem:[#allocation13 + $0x610] sm:$0xff]
    %v3169 = vld [vmem:[#allocation13 + $0x618] sm:$0xff]
    %v3170 = vld [vmem:[#allocation13 + $0x620] sm:$0xff]
    %v3171 = vld [vmem:[#allocation13 + $0x628] sm:$0xff]
    %v3172 = vld [vmem:[#allocation13 + $0x630] sm:$0xff]
    %v3173 = vld [vmem:[#allocation13 + $0x638] sm:$0xff]
    %v3174 = vld [vmem:[#allocation13 + $0x640] sm:$0xff]
    %v3175 = vld [vmem:[#allocation13 + $0x648] sm:$0xff]
    %v3176 = vld [vmem:[#allocation13 + $0x650] sm:$0xff]
    %v3177 = vld [vmem:[#allocation13 + $0x658] sm:$0xff]
    %v3178 = vld [vmem:[#allocation13 + $0x660] sm:$0xff]
    %v3179 = vld [vmem:[#allocation13 + $0x668] sm:$0xff]
    %v3180 = vld [vmem:[#allocation13 + $0x670] sm:$0xff]
    %v3181 = vld [vmem:[#allocation13 + $0x678] sm:$0xff]
    %v3182 = vld [vmem:[#allocation13 + $0x680] sm:$0xff]
    %v3183 = vld [vmem:[#allocation13 + $0x688] sm:$0xff]
    %v3184 = vld [vmem:[#allocation13 + $0x690] sm:$0xff]
    %v3185 = vld [vmem:[#allocation13 + $0x698] sm:$0xff]
    %v3186 = vld [vmem:[#allocation13 + $0x6a0] sm:$0xff]
    %v3187 = vld [vmem:[#allocation13 + $0x6a8] sm:$0xff]
    %v3188 = vld [vmem:[#allocation13 + $0x6b0] sm:$0xff]
    %v3189 = vld [vmem:[#allocation13 + $0x6b8] sm:$0xff]
    %v3190 = vld [vmem:[#allocation13 + $0x6c0] sm:$0xff]
    %v3191 = vld [vmem:[#allocation13 + $0x6c8] sm:$0xff]
    %v3192 = vld [vmem:[#allocation13 + $0x6d0] sm:$0xff]
    %v3193 = vld [vmem:[#allocation13 + $0x6d8] sm:$0xff]
    %v3194 = vld [vmem:[#allocation13 + $0x6e0] sm:$0xff]
    %v3195 = vld [vmem:[#allocation13 + $0x6e8] sm:$0xff]
    %v3196 = vld [vmem:[#allocation13 + $0x6f0] sm:$0xff]
    %v3197 = vld [vmem:[#allocation13 + $0x6f8] sm:$0xff]
    %v3198 = vld [vmem:[#allocation13 + $0x700] sm:$0xff]
    %v3199 = vld [vmem:[#allocation13 + $0x708] sm:$0xff]
    %v3200 = vld [vmem:[#allocation13 + $0x710] sm:$0xff]
    %v3201 = vld [vmem:[#allocation13 + $0x718] sm:$0xff]
    %v3202 = vld [vmem:[#allocation13 + $0x720] sm:$0xff]
    %v3203 = vld [vmem:[#allocation13 + $0x728] sm:$0xff]
    %v3204 = vld [vmem:[#allocation13 + $0x730] sm:$0xff]
    %v3205 = vld [vmem:[#allocation13 + $0x738] sm:$0xff]
    %v3206 = vld [vmem:[#allocation13 + $0x740] sm:$0xff]
    %v3207 = vld [vmem:[#allocation13 + $0x748] sm:$0xff]
    %v3208 = vld [vmem:[#allocation13 + $0x750] sm:$0xff]
    %v3209 = vld [vmem:[#allocation13 + $0x758] sm:$0xff]
    %v3210 = vld [vmem:[#allocation13 + $0x760] sm:$0xff]
    %v3211 = vld [vmem:[#allocation13 + $0x768] sm:$0xff]
    %v3212 = vld [vmem:[#allocation13 + $0x770] sm:$0xff]
    %v3213 = vld [vmem:[#allocation13 + $0x778] sm:$0xff]
    %v3214 = vld [vmem:[#allocation13 + $0x780] sm:$0xff]
    %v3215 = vld [vmem:[#allocation13 + $0x788] sm:$0xff]
    %v3216 = vld [vmem:[#allocation13 + $0x790] sm:$0xff]
    %v3217 = vld [vmem:[#allocation13 + $0x798] sm:$0xff]
    %v3218 = vld [vmem:[#allocation13 + $0x7a0] sm:$0xff]
    %v3219 = vld [vmem:[#allocation13 + $0x7a8] sm:$0xff]
    %v3220 = vld [vmem:[#allocation13 + $0x7b0] sm:$0xff]
    %v3221 = vld [vmem:[#allocation13 + $0x7b8] sm:$0xff]
    %v3222 = vld [vmem:[#allocation13 + $0x7c0] sm:$0xff]
    %v3223 = vld [vmem:[#allocation13 + $0x7c8] sm:$0xff]
    %v3224 = vld [vmem:[#allocation13 + $0x7d0] sm:$0xff]
    %v3225 = vld [vmem:[#allocation13 + $0x7d8] sm:$0xff]
    %v3226 = vld [vmem:[#allocation13 + $0x7e0] sm:$0xff]
    %v3227 = vld [vmem:[#allocation13 + $0x7e8] sm:$0xff]
    %v3228 = vld [vmem:[#allocation13 + $0x7f0] sm:$0xff]
    %v3229 = vld [vmem:[#allocation13 + $0x7f8] sm:$0xff]
    %v3230 = vld [vmem:[%s12] sm:$0xf]
    %v3232 = vlaneseq
    %v3233 = vshrl.u32 %v3232, 7
    %v3234 = vsub.s32 0, %v3233
    %v3235 = vrot.slane %v3230, %v3234
    %v3236 = vlaneseq
    %v3237 = vshrl.u32 %v3236, 7
    %v3238 = vsub.s32 1, %v3237
    %v3239 = vrot.slane %v3230, %v3238
    %v3240 = vlaneseq
    %v3241 = vshrl.u32 %v3240, 7
    %v3242 = vsub.s32 2, %v3241
    %v3243 = vrot.slane %v3230, %v3242
    %v3244 = vlaneseq
    %v3245 = vshrl.u32 %v3244, 7
    %v3246 = vsub.s32 3, %v3245
    %v3247 = vrot.slane %v3230, %v3246
    %v3508 = vunpack.c.l.b16 %v2974
    %v3509 = vunpack.c.h.b16 %v2974
    %v3510 = vunpack.c.l.b16 %v2975
    %v3511 = vunpack.c.h.b16 %v2975
    %v3512 = vunpack.c.l.b16 %v2976
    %v3513 = vunpack.c.h.b16 %v2976
    %v3514 = vunpack.c.l.b16 %v2977
    %v3515 = vunpack.c.h.b16 %v2977
    %v3516 = vunpack.c.l.b16 %v2978
    %v3517 = vunpack.c.h.b16 %v2978
    %v3518 = vunpack.c.l.b16 %v2979
    %v3519 = vunpack.c.h.b16 %v2979
    %v3520 = vunpack.c.l.b16 %v2980
    %v3521 = vunpack.c.h.b16 %v2980
    %v3522 = vunpack.c.l.b16 %v2981
    %v3523 = vunpack.c.h.b16 %v2981
    %v3524 = vunpack.c.l.b16 %v2982
    %v3525 = vunpack.c.h.b16 %v2982
    %v3526 = vunpack.c.l.b16 %v2983
    %v3527 = vunpack.c.h.b16 %v2983
    %v3528 = vunpack.c.l.b16 %v2984
    %v3529 = vunpack.c.h.b16 %v2984
    %v3530 = vunpack.c.l.b16 %v2985
    %v3531 = vunpack.c.h.b16 %v2985
    %v3532 = vunpack.c.l.b16 %v2986
    %v3533 = vunpack.c.h.b16 %v2986
    %v3534 = vunpack.c.l.b16 %v2987
    %v3535 = vunpack.c.h.b16 %v2987
    %v3536 = vunpack.c.l.b16 %v2988
    %v3537 = vunpack.c.h.b16 %v2988
    %v3538 = vunpack.c.l.b16 %v2989
    %v3539 = vunpack.c.h.b16 %v2989
    %v3540 = vunpack.c.l.b16 %v2990
    %v3541 = vunpack.c.h.b16 %v2990
    %v3542 = vunpack.c.l.b16 %v2991
    %v3543 = vunpack.c.h.b16 %v2991
    %v3544 = vunpack.c.l.b16 %v2992
    %v3545 = vunpack.c.h.b16 %v2992
    %v3546 = vunpack.c.l.b16 %v2993
    %v3547 = vunpack.c.h.b16 %v2993
    %v3548 = vunpack.c.l.b16 %v2994
    %v3549 = vunpack.c.h.b16 %v2994
    %v3550 = vunpack.c.l.b16 %v2995
    %v3551 = vunpack.c.h.b16 %v2995
    %v3552 = vunpack.c.l.b16 %v2996
    %v3553 = vunpack.c.h.b16 %v2996
    %v3554 = vunpack.c.l.b16 %v2997
    %v3555 = vunpack.c.h.b16 %v2997
    %v3556 = vunpack.c.l.b16 %v2998
    %v3557 = vunpack.c.h.b16 %v2998
    %v3558 = vunpack.c.l.b16 %v2999
    %v3559 = vunpack.c.h.b16 %v2999
    %v3560 = vunpack.c.l.b16 %v3000
    %v3561 = vunpack.c.h.b16 %v3000
    %v3562 = vunpack.c.l.b16 %v3001
    %v3563 = vunpack.c.h.b16 %v3001
    %v3564 = vunpack.c.l.b16 %v3002
    %v3565 = vunpack.c.h.b16 %v3002
    %v3566 = vunpack.c.l.b16 %v3003
    %v3567 = vunpack.c.h.b16 %v3003
    %v3568 = vunpack.c.l.b16 %v3004
    %v3569 = vunpack.c.h.b16 %v3004
    %v3570 = vunpack.c.l.b16 %v3005
    %v3571 = vunpack.c.h.b16 %v3005
    %v3572 = vunpack.c.l.b16 %v3006
    %v3573 = vunpack.c.h.b16 %v3006
    %v3574 = vunpack.c.l.b16 %v3007
    %v3575 = vunpack.c.h.b16 %v3007
    %v3576 = vunpack.c.l.b16 %v3008
    %v3577 = vunpack.c.h.b16 %v3008
    %v3578 = vunpack.c.l.b16 %v3009
    %v3579 = vunpack.c.h.b16 %v3009
    %v3580 = vunpack.c.l.b16 %v3010
    %v3581 = vunpack.c.h.b16 %v3010
    %v3582 = vunpack.c.l.b16 %v3011
    %v3583 = vunpack.c.h.b16 %v3011
    %v3584 = vunpack.c.l.b16 %v3012
    %v3585 = vunpack.c.h.b16 %v3012
    %v3586 = vunpack.c.l.b16 %v3013
    %v3587 = vunpack.c.h.b16 %v3013
    %v3588 = vunpack.c.l.b16 %v3014
    %v3589 = vunpack.c.h.b16 %v3014
    %v3590 = vunpack.c.l.b16 %v3015
    %v3591 = vunpack.c.h.b16 %v3015
    %v3592 = vunpack.c.l.b16 %v3016
    %v3593 = vunpack.c.h.b16 %v3016
    %v3594 = vunpack.c.l.b16 %v3017
    %v3595 = vunpack.c.h.b16 %v3017
    %v3596 = vunpack.c.l.b16 %v3018
    %v3597 = vunpack.c.h.b16 %v3018
    %v3598 = vunpack.c.l.b16 %v3019
    %v3599 = vunpack.c.h.b16 %v3019
    %v3600 = vunpack.c.l.b16 %v3020
    %v3601 = vunpack.c.h.b16 %v3020
    %v3602 = vunpack.c.l.b16 %v3021
    %v3603 = vunpack.c.h.b16 %v3021
    %v3604 = vunpack.c.l.b16 %v3022
    %v3605 = vunpack.c.h.b16 %v3022
    %v3606 = vunpack.c.l.b16 %v3023
    %v3607 = vunpack.c.h.b16 %v3023
    %v3608 = vunpack.c.l.b16 %v3024
    %v3609 = vunpack.c.h.b16 %v3024
    %v3610 = vunpack.c.l.b16 %v3025
    %v3611 = vunpack.c.h.b16 %v3025
    %v3612 = vunpack.c.l.b16 %v3026
    %v3613 = vunpack.c.h.b16 %v3026
    %v3614 = vunpack.c.l.b16 %v3027
    %v3615 = vunpack.c.h.b16 %v3027
    %v3616 = vunpack.c.l.b16 %v3028
    %v3617 = vunpack.c.h.b16 %v3028
    %v3618 = vunpack.c.l.b16 %v3029
    %v3619 = vunpack.c.h.b16 %v3029
    %v3620 = vunpack.c.l.b16 %v3030
    %v3621 = vunpack.c.h.b16 %v3030
    %v3622 = vunpack.c.l.b16 %v3031
    %v3623 = vunpack.c.h.b16 %v3031
    %v3624 = vunpack.c.l.b16 %v3032
    %v3625 = vunpack.c.h.b16 %v3032
    %v3626 = vunpack.c.l.b16 %v3033
    %v3627 = vunpack.c.h.b16 %v3033
    %v3628 = vunpack.c.l.b16 %v3034
    %v3629 = vunpack.c.h.b16 %v3034
    %v3630 = vunpack.c.l.b16 %v3035
    %v3631 = vunpack.c.h.b16 %v3035
    %v3632 = vunpack.c.l.b16 %v3036
    %v3633 = vunpack.c.h.b16 %v3036
    %v3634 = vunpack.c.l.b16 %v3037
    %v3635 = vunpack.c.h.b16 %v3037
    %v3636 = vunpack.c.l.b16 %v3038
    %v3637 = vunpack.c.h.b16 %v3038
    %v3638 = vunpack.c.l.b16 %v3039
    %v3639 = vunpack.c.h.b16 %v3039
    %v3640 = vunpack.c.l.b16 %v3040
    %v3641 = vunpack.c.h.b16 %v3040
    %v3642 = vunpack.c.l.b16 %v3041
    %v3643 = vunpack.c.h.b16 %v3041
    %v3644 = vunpack.c.l.b16 %v3042
    %v3645 = vunpack.c.h.b16 %v3042
    %v3646 = vunpack.c.l.b16 %v3043
    %v3647 = vunpack.c.h.b16 %v3043
    %v3648 = vunpack.c.l.b16 %v3044
    %v3649 = vunpack.c.h.b16 %v3044
    %v3650 = vunpack.c.l.b16 %v3045
    %v3651 = vunpack.c.h.b16 %v3045
    %v3652 = vunpack.c.l.b16 %v3046
    %v3653 = vunpack.c.h.b16 %v3046
    %v3654 = vunpack.c.l.b16 %v3047
    %v3655 = vunpack.c.h.b16 %v3047
    %v3656 = vunpack.c.l.b16 %v3048
    %v3657 = vunpack.c.h.b16 %v3048
    %v3658 = vunpack.c.l.b16 %v3049
    %v3659 = vunpack.c.h.b16 %v3049
    %v3660 = vunpack.c.l.b16 %v3050
    %v3661 = vunpack.c.h.b16 %v3050
    %v3662 = vunpack.c.l.b16 %v3051
    %v3663 = vunpack.c.h.b16 %v3051
    %v3664 = vunpack.c.l.b16 %v3052
    %v3665 = vunpack.c.h.b16 %v3052
    %v3666 = vunpack.c.l.b16 %v3053
    %v3667 = vunpack.c.h.b16 %v3053
    %v3668 = vunpack.c.l.b16 %v3054
    %v3669 = vunpack.c.h.b16 %v3054
    %v3670 = vunpack.c.l.b16 %v3055
    %v3671 = vunpack.c.h.b16 %v3055
    %v3672 = vunpack.c.l.b16 %v3056
    %v3673 = vunpack.c.h.b16 %v3056
    %v3674 = vunpack.c.l.b16 %v3057
    %v3675 = vunpack.c.h.b16 %v3057
    %v3676 = vunpack.c.l.b16 %v3058
    %v3677 = vunpack.c.h.b16 %v3058
    %v3678 = vunpack.c.l.b16 %v3059
    %v3679 = vunpack.c.h.b16 %v3059
    %v3680 = vunpack.c.l.b16 %v3060
    %v3681 = vunpack.c.h.b16 %v3060
    %v3682 = vunpack.c.l.b16 %v3061
    %v3683 = vunpack.c.h.b16 %v3061
    %v3684 = vunpack.c.l.b16 %v3062
    %v3685 = vunpack.c.h.b16 %v3062
    %v3686 = vunpack.c.l.b16 %v3063
    %v3687 = vunpack.c.h.b16 %v3063
    %v3688 = vunpack.c.l.b16 %v3064
    %v3689 = vunpack.c.h.b16 %v3064
    %v3690 = vunpack.c.l.b16 %v3065
    %v3691 = vunpack.c.h.b16 %v3065
    %v3692 = vunpack.c.l.b16 %v3066
    %v3693 = vunpack.c.h.b16 %v3066
    %v3694 = vunpack.c.l.b16 %v3067
    %v3695 = vunpack.c.h.b16 %v3067
    %v3696 = vunpack.c.l.b16 %v3068
    %v3697 = vunpack.c.h.b16 %v3068
    %v3698 = vunpack.c.l.b16 %v3069
    %v3699 = vunpack.c.h.b16 %v3069
    %v3700 = vunpack.c.l.b16 %v3070
    %v3701 = vunpack.c.h.b16 %v3070
    %v3702 = vunpack.c.l.b16 %v3071
    %v3703 = vunpack.c.h.b16 %v3071
    %v3704 = vunpack.c.l.b16 %v3072
    %v3705 = vunpack.c.h.b16 %v3072
    %v3706 = vunpack.c.l.b16 %v3073
    %v3707 = vunpack.c.h.b16 %v3073
    %v3708 = vunpack.c.l.b16 %v3074
    %v3709 = vunpack.c.h.b16 %v3074
    %v3710 = vunpack.c.l.b16 %v3075
    %v3711 = vunpack.c.h.b16 %v3075
    %v3712 = vunpack.c.l.b16 %v3076
    %v3713 = vunpack.c.h.b16 %v3076
    %v3714 = vunpack.c.l.b16 %v3077
    %v3715 = vunpack.c.h.b16 %v3077
    %v3716 = vunpack.c.l.b16 %v3078
    %v3717 = vunpack.c.h.b16 %v3078
    %v3718 = vunpack.c.l.b16 %v3079
    %v3719 = vunpack.c.h.b16 %v3079
    %v3720 = vunpack.c.l.b16 %v3080
    %v3721 = vunpack.c.h.b16 %v3080
    %v3722 = vunpack.c.l.b16 %v3081
    %v3723 = vunpack.c.h.b16 %v3081
    %v3724 = vunpack.c.l.b16 %v3082
    %v3725 = vunpack.c.h.b16 %v3082
    %v3726 = vunpack.c.l.b16 %v3083
    %v3727 = vunpack.c.h.b16 %v3083
    %v3728 = vunpack.c.l.b16 %v3084
    %v3729 = vunpack.c.h.b16 %v3084
    %v3730 = vunpack.c.l.b16 %v3085
    %v3731 = vunpack.c.h.b16 %v3085
    %v3732 = vunpack.c.l.b16 %v3086
    %v3733 = vunpack.c.h.b16 %v3086
    %v3734 = vunpack.c.l.b16 %v3087
    %v3735 = vunpack.c.h.b16 %v3087
    %v3736 = vunpack.c.l.b16 %v3088
    %v3737 = vunpack.c.h.b16 %v3088
    %v3738 = vunpack.c.l.b16 %v3089
    %v3739 = vunpack.c.h.b16 %v3089
    %v3740 = vunpack.c.l.b16 %v3090
    %v3741 = vunpack.c.h.b16 %v3090
    %v3742 = vunpack.c.l.b16 %v3091
    %v3743 = vunpack.c.h.b16 %v3091
    %v3744 = vunpack.c.l.b16 %v3092
    %v3745 = vunpack.c.h.b16 %v3092
    %v3746 = vunpack.c.l.b16 %v3093
    %v3747 = vunpack.c.h.b16 %v3093
    %v3748 = vunpack.c.l.b16 %v3094
    %v3749 = vunpack.c.h.b16 %v3094
    %v3750 = vunpack.c.l.b16 %v3095
    %v3751 = vunpack.c.h.b16 %v3095
    %v3752 = vunpack.c.l.b16 %v3096
    %v3753 = vunpack.c.h.b16 %v3096
    %v3754 = vunpack.c.l.b16 %v3097
    %v3755 = vunpack.c.h.b16 %v3097
    %v3756 = vunpack.c.l.b16 %v3098
    %v3757 = vunpack.c.h.b16 %v3098
    %v3758 = vunpack.c.l.b16 %v3099
    %v3759 = vunpack.c.h.b16 %v3099
    %v3760 = vunpack.c.l.b16 %v3100
    %v3761 = vunpack.c.h.b16 %v3100
    %v3762 = vunpack.c.l.b16 %v3101
    %v3763 = vunpack.c.h.b16 %v3101
    %v3764 = vunpack.c.l.b16 %v3102
    %v3765 = vunpack.c.h.b16 %v3102
    %v3766 = vunpack.c.l.b16 %v3103
    %v3767 = vunpack.c.h.b16 %v3103
    %v3768 = vunpack.c.l.b16 %v3104
    %v3769 = vunpack.c.h.b16 %v3104
    %v3770 = vunpack.c.l.b16 %v3105
    %v3771 = vunpack.c.h.b16 %v3105
    %v3772 = vunpack.c.l.b16 %v3106
    %v3773 = vunpack.c.h.b16 %v3106
    %v3774 = vunpack.c.l.b16 %v3107
    %v3775 = vunpack.c.h.b16 %v3107
    %v3776 = vunpack.c.l.b16 %v3108
    %v3777 = vunpack.c.h.b16 %v3108
    %v3778 = vunpack.c.l.b16 %v3109
    %v3779 = vunpack.c.h.b16 %v3109
    %v3780 = vunpack.c.l.b16 %v3110
    %v3781 = vunpack.c.h.b16 %v3110
    %v3782 = vunpack.c.l.b16 %v3111
    %v3783 = vunpack.c.h.b16 %v3111
    %v3784 = vunpack.c.l.b16 %v3112
    %v3785 = vunpack.c.h.b16 %v3112
    %v3786 = vunpack.c.l.b16 %v3113
    %v3787 = vunpack.c.h.b16 %v3113
    %v3788 = vunpack.c.l.b16 %v3114
    %v3789 = vunpack.c.h.b16 %v3114
    %v3790 = vunpack.c.l.b16 %v3115
    %v3791 = vunpack.c.h.b16 %v3115
    %v3792 = vunpack.c.l.b16 %v3116
    %v3793 = vunpack.c.h.b16 %v3116
    %v3794 = vunpack.c.l.b16 %v3117
    %v3795 = vunpack.c.h.b16 %v3117
    %v3796 = vunpack.c.l.b16 %v3118
    %v3797 = vunpack.c.h.b16 %v3118
    %v3798 = vunpack.c.l.b16 %v3119
    %v3799 = vunpack.c.h.b16 %v3119
    %v3800 = vunpack.c.l.b16 %v3120
    %v3801 = vunpack.c.h.b16 %v3120
    %v3802 = vunpack.c.l.b16 %v3121
    %v3803 = vunpack.c.h.b16 %v3121
    %v3804 = vunpack.c.l.b16 %v3122
    %v3805 = vunpack.c.h.b16 %v3122
    %v3806 = vunpack.c.l.b16 %v3123
    %v3807 = vunpack.c.h.b16 %v3123
    %v3808 = vunpack.c.l.b16 %v3124
    %v3809 = vunpack.c.h.b16 %v3124
    %v3810 = vunpack.c.l.b16 %v3125
    %v3811 = vunpack.c.h.b16 %v3125
    %v3812 = vunpack.c.l.b16 %v3126
    %v3813 = vunpack.c.h.b16 %v3126
    %v3814 = vunpack.c.l.b16 %v3127
    %v3815 = vunpack.c.h.b16 %v3127
    %v3816 = vunpack.c.l.b16 %v3128
    %v3817 = vunpack.c.h.b16 %v3128
    %v3818 = vunpack.c.l.b16 %v3129
    %v3819 = vunpack.c.h.b16 %v3129
    %v3820 = vunpack.c.l.b16 %v3130
    %v3821 = vunpack.c.h.b16 %v3130
    %v3822 = vunpack.c.l.b16 %v3131
    %v3823 = vunpack.c.h.b16 %v3131
    %v3824 = vunpack.c.l.b16 %v3132
    %v3825 = vunpack.c.h.b16 %v3132
    %v3826 = vunpack.c.l.b16 %v3133
    %v3827 = vunpack.c.h.b16 %v3133
    %v3828 = vunpack.c.l.b16 %v3134
    %v3829 = vunpack.c.h.b16 %v3134
    %v3830 = vunpack.c.l.b16 %v3135
    %v3831 = vunpack.c.h.b16 %v3135
    %v3832 = vunpack.c.l.b16 %v3136
    %v3833 = vunpack.c.h.b16 %v3136
    %v3834 = vunpack.c.l.b16 %v3137
    %v3835 = vunpack.c.h.b16 %v3137
    %v3836 = vunpack.c.l.b16 %v3138
    %v3837 = vunpack.c.h.b16 %v3138
    %v3838 = vunpack.c.l.b16 %v3139
    %v3839 = vunpack.c.h.b16 %v3139
    %v3840 = vunpack.c.l.b16 %v3140
    %v3841 = vunpack.c.h.b16 %v3140
    %v3842 = vunpack.c.l.b16 %v3141
    %v3843 = vunpack.c.h.b16 %v3141
    %v3844 = vunpack.c.l.b16 %v3142
    %v3845 = vunpack.c.h.b16 %v3142
    %v3846 = vunpack.c.l.b16 %v3143
    %v3847 = vunpack.c.h.b16 %v3143
    %v3848 = vunpack.c.l.b16 %v3144
    %v3849 = vunpack.c.h.b16 %v3144
    %v3850 = vunpack.c.l.b16 %v3145
    %v3851 = vunpack.c.h.b16 %v3145
    %v3852 = vunpack.c.l.b16 %v3146
    %v3853 = vunpack.c.h.b16 %v3146
    %v3854 = vunpack.c.l.b16 %v3147
    %v3855 = vunpack.c.h.b16 %v3147
    %v3856 = vunpack.c.l.b16 %v3148
    %v3857 = vunpack.c.h.b16 %v3148
    %v3858 = vunpack.c.l.b16 %v3149
    %v3859 = vunpack.c.h.b16 %v3149
    %v3860 = vunpack.c.l.b16 %v3150
    %v3861 = vunpack.c.h.b16 %v3150
    %v3862 = vunpack.c.l.b16 %v3151
    %v3863 = vunpack.c.h.b16 %v3151
    %v3864 = vunpack.c.l.b16 %v3152
    %v3865 = vunpack.c.h.b16 %v3152
    %v3866 = vunpack.c.l.b16 %v3153
    %v3867 = vunpack.c.h.b16 %v3153
    %v3868 = vunpack.c.l.b16 %v3154
    %v3869 = vunpack.c.h.b16 %v3154
    %v3870 = vunpack.c.l.b16 %v3155
    %v3871 = vunpack.c.h.b16 %v3155
    %v3872 = vunpack.c.l.b16 %v3156
    %v3873 = vunpack.c.h.b16 %v3156
    %v3874 = vunpack.c.l.b16 %v3157
    %v3875 = vunpack.c.h.b16 %v3157
    %v3876 = vunpack.c.l.b16 %v3158
    %v3877 = vunpack.c.h.b16 %v3158
    %v3878 = vunpack.c.l.b16 %v3159
    %v3879 = vunpack.c.h.b16 %v3159
    %v3880 = vunpack.c.l.b16 %v3160
    %v3881 = vunpack.c.h.b16 %v3160
    %v3882 = vunpack.c.l.b16 %v3161
    %v3883 = vunpack.c.h.b16 %v3161
    %v3884 = vunpack.c.l.b16 %v3162
    %v3885 = vunpack.c.h.b16 %v3162
    %v3886 = vunpack.c.l.b16 %v3163
    %v3887 = vunpack.c.h.b16 %v3163
    %v3888 = vunpack.c.l.b16 %v3164
    %v3889 = vunpack.c.h.b16 %v3164
    %v3890 = vunpack.c.l.b16 %v3165
    %v3891 = vunpack.c.h.b16 %v3165
    %v3892 = vunpack.c.l.b16 %v3166
    %v3893 = vunpack.c.h.b16 %v3166
    %v3894 = vunpack.c.l.b16 %v3167
    %v3895 = vunpack.c.h.b16 %v3167
    %v3896 = vunpack.c.l.b16 %v3168
    %v3897 = vunpack.c.h.b16 %v3168
    %v3898 = vunpack.c.l.b16 %v3169
    %v3899 = vunpack.c.h.b16 %v3169
    %v3900 = vunpack.c.l.b16 %v3170
    %v3901 = vunpack.c.h.b16 %v3170
    %v3902 = vunpack.c.l.b16 %v3171
    %v3903 = vunpack.c.h.b16 %v3171
    %v3904 = vunpack.c.l.b16 %v3172
    %v3905 = vunpack.c.h.b16 %v3172
    %v3906 = vunpack.c.l.b16 %v3173
    %v3907 = vunpack.c.h.b16 %v3173
    %v3908 = vunpack.c.l.b16 %v3174
    %v3909 = vunpack.c.h.b16 %v3174
    %v3910 = vunpack.c.l.b16 %v3175
    %v3911 = vunpack.c.h.b16 %v3175
    %v3912 = vunpack.c.l.b16 %v3176
    %v3913 = vunpack.c.h.b16 %v3176
    %v3914 = vunpack.c.l.b16 %v3177
    %v3915 = vunpack.c.h.b16 %v3177
    %v3916 = vunpack.c.l.b16 %v3178
    %v3917 = vunpack.c.h.b16 %v3178
    %v3918 = vunpack.c.l.b16 %v3179
    %v3919 = vunpack.c.h.b16 %v3179
    %v3920 = vunpack.c.l.b16 %v3180
    %v3921 = vunpack.c.h.b16 %v3180
    %v3922 = vunpack.c.l.b16 %v3181
    %v3923 = vunpack.c.h.b16 %v3181
    %v3924 = vunpack.c.l.b16 %v3182
    %v3925 = vunpack.c.h.b16 %v3182
    %v3926 = vunpack.c.l.b16 %v3183
    %v3927 = vunpack.c.h.b16 %v3183
    %v3928 = vunpack.c.l.b16 %v3184
    %v3929 = vunpack.c.h.b16 %v3184
    %v3930 = vunpack.c.l.b16 %v3185
    %v3931 = vunpack.c.h.b16 %v3185
    %v3932 = vunpack.c.l.b16 %v3186
    %v3933 = vunpack.c.h.b16 %v3186
    %v3934 = vunpack.c.l.b16 %v3187
    %v3935 = vunpack.c.h.b16 %v3187
    %v3936 = vunpack.c.l.b16 %v3188
    %v3937 = vunpack.c.h.b16 %v3188
    %v3938 = vunpack.c.l.b16 %v3189
    %v3939 = vunpack.c.h.b16 %v3189
    %v3940 = vunpack.c.l.b16 %v3190
    %v3941 = vunpack.c.h.b16 %v3190
    %v3942 = vunpack.c.l.b16 %v3191
    %v3943 = vunpack.c.h.b16 %v3191
    %v3944 = vunpack.c.l.b16 %v3192
    %v3945 = vunpack.c.h.b16 %v3192
    %v3946 = vunpack.c.l.b16 %v3193
    %v3947 = vunpack.c.h.b16 %v3193
    %v3948 = vunpack.c.l.b16 %v3194
    %v3949 = vunpack.c.h.b16 %v3194
    %v3950 = vunpack.c.l.b16 %v3195
    %v3951 = vunpack.c.h.b16 %v3195
    %v3952 = vunpack.c.l.b16 %v3196
    %v3953 = vunpack.c.h.b16 %v3196
    %v3954 = vunpack.c.l.b16 %v3197
    %v3955 = vunpack.c.h.b16 %v3197
    %v3956 = vunpack.c.l.b16 %v3198
    %v3957 = vunpack.c.h.b16 %v3198
    %v3958 = vunpack.c.l.b16 %v3199
    %v3959 = vunpack.c.h.b16 %v3199
    %v3960 = vunpack.c.l.b16 %v3200
    %v3961 = vunpack.c.h.b16 %v3200
    %v3962 = vunpack.c.l.b16 %v3201
    %v3963 = vunpack.c.h.b16 %v3201
    %v3964 = vunpack.c.l.b16 %v3202
    %v3965 = vunpack.c.h.b16 %v3202
    %v3966 = vunpack.c.l.b16 %v3203
    %v3967 = vunpack.c.h.b16 %v3203
    %v3968 = vunpack.c.l.b16 %v3204
    %v3969 = vunpack.c.h.b16 %v3204
    %v3970 = vunpack.c.l.b16 %v3205
    %v3971 = vunpack.c.h.b16 %v3205
    %v3972 = vunpack.c.l.b16 %v3206
    %v3973 = vunpack.c.h.b16 %v3206
    %v3974 = vunpack.c.l.b16 %v3207
    %v3975 = vunpack.c.h.b16 %v3207
    %v3976 = vunpack.c.l.b16 %v3208
    %v3977 = vunpack.c.h.b16 %v3208
    %v3978 = vunpack.c.l.b16 %v3209
    %v3979 = vunpack.c.h.b16 %v3209
    %v3980 = vunpack.c.l.b16 %v3210
    %v3981 = vunpack.c.h.b16 %v3210
    %v3982 = vunpack.c.l.b16 %v3211
    %v3983 = vunpack.c.h.b16 %v3211
    %v3984 = vunpack.c.l.b16 %v3212
    %v3985 = vunpack.c.h.b16 %v3212
    %v3986 = vunpack.c.l.b16 %v3213
    %v3987 = vunpack.c.h.b16 %v3213
    %v3988 = vunpack.c.l.b16 %v3214
    %v3989 = vunpack.c.h.b16 %v3214
    %v3990 = vunpack.c.l.b16 %v3215
    %v3991 = vunpack.c.h.b16 %v3215
    %v3992 = vunpack.c.l.b16 %v3216
    %v3993 = vunpack.c.h.b16 %v3216
    %v3994 = vunpack.c.l.b16 %v3217
    %v3995 = vunpack.c.h.b16 %v3217
    %v3996 = vunpack.c.l.b16 %v3218
    %v3997 = vunpack.c.h.b16 %v3218
    %v3998 = vunpack.c.l.b16 %v3219
    %v3999 = vunpack.c.h.b16 %v3219
    %v4000 = vunpack.c.l.b16 %v3220
    %v4001 = vunpack.c.h.b16 %v3220
    %v4002 = vunpack.c.l.b16 %v3221
    %v4003 = vunpack.c.h.b16 %v3221
    %v4004 = vunpack.c.l.b16 %v3222
    %v4005 = vunpack.c.h.b16 %v3222
    %v4006 = vunpack.c.l.b16 %v3223
    %v4007 = vunpack.c.h.b16 %v3223
    %v4008 = vunpack.c.l.b16 %v3224
    %v4009 = vunpack.c.h.b16 %v3224
    %v4010 = vunpack.c.l.b16 %v3225
    %v4011 = vunpack.c.h.b16 %v3225
    %v4012 = vunpack.c.l.b16 %v3226
    %v4013 = vunpack.c.h.b16 %v3226
    %v4014 = vunpack.c.l.b16 %v3227
    %v4015 = vunpack.c.h.b16 %v3227
    %v4016 = vunpack.c.l.b16 %v3228
    %v4017 = vunpack.c.h.b16 %v3228
    %v4018 = vunpack.c.l.b16 %v3229
    %v4019 = vunpack.c.h.b16 %v3229
    %v4020 = vpack.c.b16 %v3512, %v3508
    %v4021 = vpack.c.b16 %v3513, %v3509
    %v4022 = vpack.c.b16 %v3514, %v3510
    %v4023 = vpack.c.b16 %v3515, %v3511
    %v4024 = vpack.c.b16 %v3520, %v3516
    %v4025 = vpack.c.b16 %v3521, %v3517
    %v4026 = vpack.c.b16 %v3522, %v3518
    %v4027 = vpack.c.b16 %v3523, %v3519
    %v4028 = vpack.c.b16 %v3528, %v3524
    %v4029 = vpack.c.b16 %v3529, %v3525
    %v4030 = vpack.c.b16 %v3530, %v3526
    %v4031 = vpack.c.b16 %v3531, %v3527
    %v4032 = vpack.c.b16 %v3536, %v3532
    %v4033 = vpack.c.b16 %v3537, %v3533
    %v4034 = vpack.c.b16 %v3538, %v3534
    %v4035 = vpack.c.b16 %v3539, %v3535
    %v4036 = vpack.c.b16 %v3544, %v3540
    %v4037 = vpack.c.b16 %v3545, %v3541
    %v4038 = vpack.c.b16 %v3546, %v3542
    %v4039 = vpack.c.b16 %v3547, %v3543
    %v4040 = vpack.c.b16 %v3552, %v3548
    %v4041 = vpack.c.b16 %v3553, %v3549
    %v4042 = vpack.c.b16 %v3554, %v3550
    %v4043 = vpack.c.b16 %v3555, %v3551
    %v4044 = vpack.c.b16 %v3560, %v3556
    %v4045 = vpack.c.b16 %v3561, %v3557
    %v4046 = vpack.c.b16 %v3562, %v3558
    %v4047 = vpack.c.b16 %v3563, %v3559
    %v4048 = vpack.c.b16 %v3568, %v3564
    %v4049 = vpack.c.b16 %v3569, %v3565
    %v4050 = vpack.c.b16 %v3570, %v3566
    %v4051 = vpack.c.b16 %v3571, %v3567
    %v4052 = vpack.c.b16 %v3576, %v3572
    %v4053 = vpack.c.b16 %v3577, %v3573
    %v4054 = vpack.c.b16 %v3578, %v3574
    %v4055 = vpack.c.b16 %v3579, %v3575
    %v4056 = vpack.c.b16 %v3584, %v3580
    %v4057 = vpack.c.b16 %v3585, %v3581
    %v4058 = vpack.c.b16 %v3586, %v3582
    %v4059 = vpack.c.b16 %v3587, %v3583
    %v4060 = vpack.c.b16 %v3592, %v3588
    %v4061 = vpack.c.b16 %v3593, %v3589
    %v4062 = vpack.c.b16 %v3594, %v3590
    %v4063 = vpack.c.b16 %v3595, %v3591
    %v4064 = vpack.c.b16 %v3600, %v3596
    %v4065 = vpack.c.b16 %v3601, %v3597
    %v4066 = vpack.c.b16 %v3602, %v3598
    %v4067 = vpack.c.b16 %v3603, %v3599
    %v4068 = vpack.c.b16 %v3608, %v3604
    %v4069 = vpack.c.b16 %v3609, %v3605
    %v4070 = vpack.c.b16 %v3610, %v3606
    %v4071 = vpack.c.b16 %v3611, %v3607
    %v4072 = vpack.c.b16 %v3616, %v3612
    %v4073 = vpack.c.b16 %v3617, %v3613
    %v4074 = vpack.c.b16 %v3618, %v3614
    %v4075 = vpack.c.b16 %v3619, %v3615
    %v4076 = vpack.c.b16 %v3624, %v3620
    %v4077 = vpack.c.b16 %v3625, %v3621
    %v4078 = vpack.c.b16 %v3626, %v3622
    %v4079 = vpack.c.b16 %v3627, %v3623
    %v4080 = vpack.c.b16 %v3632, %v3628
    %v4081 = vpack.c.b16 %v3633, %v3629
    %v4082 = vpack.c.b16 %v3634, %v3630
    %v4083 = vpack.c.b16 %v3635, %v3631
    %v4084 = vpack.c.b16 %v3640, %v3636
    %v4085 = vpack.c.b16 %v3641, %v3637
    %v4086 = vpack.c.b16 %v3642, %v3638
    %v4087 = vpack.c.b16 %v3643, %v3639
    %v4088 = vpack.c.b16 %v3648, %v3644
    %v4089 = vpack.c.b16 %v3649, %v3645
    %v4090 = vpack.c.b16 %v3650, %v3646
    %v4091 = vpack.c.b16 %v3651, %v3647
    %v4092 = vpack.c.b16 %v3656, %v3652
    %v4093 = vpack.c.b16 %v3657, %v3653
    %v4094 = vpack.c.b16 %v3658, %v3654
    %v4095 = vpack.c.b16 %v3659, %v3655
    %v4096 = vpack.c.b16 %v3664, %v3660
    %v4097 = vpack.c.b16 %v3665, %v3661
    %v4098 = vpack.c.b16 %v3666, %v3662
    %v4099 = vpack.c.b16 %v3667, %v3663
    %v4100 = vpack.c.b16 %v3672, %v3668
    %v4101 = vpack.c.b16 %v3673, %v3669
    %v4102 = vpack.c.b16 %v3674, %v3670
    %v4103 = vpack.c.b16 %v3675, %v3671
    %v4104 = vpack.c.b16 %v3680, %v3676
    %v4105 = vpack.c.b16 %v3681, %v3677
    %v4106 = vpack.c.b16 %v3682, %v3678
    %v4107 = vpack.c.b16 %v3683, %v3679
    %v4108 = vpack.c.b16 %v3688, %v3684
    %v4109 = vpack.c.b16 %v3689, %v3685
    %v4110 = vpack.c.b16 %v3690, %v3686
    %v4111 = vpack.c.b16 %v3691, %v3687
    %v4112 = vpack.c.b16 %v3696, %v3692
    %v4113 = vpack.c.b16 %v3697, %v3693
    %v4114 = vpack.c.b16 %v3698, %v3694
    %v4115 = vpack.c.b16 %v3699, %v3695
    %v4116 = vpack.c.b16 %v3704, %v3700
    %v4117 = vpack.c.b16 %v3705, %v3701
    %v4118 = vpack.c.b16 %v3706, %v3702
    %v4119 = vpack.c.b16 %v3707, %v3703
    %v4120 = vpack.c.b16 %v3712, %v3708
    %v4121 = vpack.c.b16 %v3713, %v3709
    %v4122 = vpack.c.b16 %v3714, %v3710
    %v4123 = vpack.c.b16 %v3715, %v3711
    %v4124 = vpack.c.b16 %v3720, %v3716
    %v4125 = vpack.c.b16 %v3721, %v3717
    %v4126 = vpack.c.b16 %v3722, %v3718
    %v4127 = vpack.c.b16 %v3723, %v3719
    %v4128 = vpack.c.b16 %v3728, %v3724
    %v4129 = vpack.c.b16 %v3729, %v3725
    %v4130 = vpack.c.b16 %v3730, %v3726
    %v4131 = vpack.c.b16 %v3731, %v3727
    %v4132 = vpack.c.b16 %v3736, %v3732
    %v4133 = vpack.c.b16 %v3737, %v3733
    %v4134 = vpack.c.b16 %v3738, %v3734
    %v4135 = vpack.c.b16 %v3739, %v3735
    %v4136 = vpack.c.b16 %v3744, %v3740
    %v4137 = vpack.c.b16 %v3745, %v3741
    %v4138 = vpack.c.b16 %v3746, %v3742
    %v4139 = vpack.c.b16 %v3747, %v3743
    %v4140 = vpack.c.b16 %v3752, %v3748
    %v4141 = vpack.c.b16 %v3753, %v3749
    %v4142 = vpack.c.b16 %v3754, %v3750
    %v4143 = vpack.c.b16 %v3755, %v3751
    %v4144 = vpack.c.b16 %v3760, %v3756
    %v4145 = vpack.c.b16 %v3761, %v3757
    %v4146 = vpack.c.b16 %v3762, %v3758
    %v4147 = vpack.c.b16 %v3763, %v3759
    %v4148 = vpack.c.b16 %v3768, %v3764
    %v4149 = vpack.c.b16 %v3769, %v3765
    %v4150 = vpack.c.b16 %v3770, %v3766
    %v4151 = vpack.c.b16 %v3771, %v3767
    %v4152 = vpack.c.b16 %v3776, %v3772
    %v4153 = vpack.c.b16 %v3777, %v3773
    %v4154 = vpack.c.b16 %v3778, %v3774
    %v4155 = vpack.c.b16 %v3779, %v3775
    %v4156 = vpack.c.b16 %v3784, %v3780
    %v4157 = vpack.c.b16 %v3785, %v3781
    %v4158 = vpack.c.b16 %v3786, %v3782
    %v4159 = vpack.c.b16 %v3787, %v3783
    %v4160 = vpack.c.b16 %v3792, %v3788
    %v4161 = vpack.c.b16 %v3793, %v3789
    %v4162 = vpack.c.b16 %v3794, %v3790
    %v4163 = vpack.c.b16 %v3795, %v3791
    %v4164 = vpack.c.b16 %v3800, %v3796
    %v4165 = vpack.c.b16 %v3801, %v3797
    %v4166 = vpack.c.b16 %v3802, %v3798
    %v4167 = vpack.c.b16 %v3803, %v3799
    %v4168 = vpack.c.b16 %v3808, %v3804
    %v4169 = vpack.c.b16 %v3809, %v3805
    %v4170 = vpack.c.b16 %v3810, %v3806
    %v4171 = vpack.c.b16 %v3811, %v3807
    %v4172 = vpack.c.b16 %v3816, %v3812
    %v4173 = vpack.c.b16 %v3817, %v3813
    %v4174 = vpack.c.b16 %v3818, %v3814
    %v4175 = vpack.c.b16 %v3819, %v3815
    %v4176 = vpack.c.b16 %v3824, %v3820
    %v4177 = vpack.c.b16 %v3825, %v3821
    %v4178 = vpack.c.b16 %v3826, %v3822
    %v4179 = vpack.c.b16 %v3827, %v3823
    %v4180 = vpack.c.b16 %v3832, %v3828
    %v4181 = vpack.c.b16 %v3833, %v3829
    %v4182 = vpack.c.b16 %v3834, %v3830
    %v4183 = vpack.c.b16 %v3835, %v3831
    %v4184 = vpack.c.b16 %v3840, %v3836
    %v4185 = vpack.c.b16 %v3841, %v3837
    %v4186 = vpack.c.b16 %v3842, %v3838
    %v4187 = vpack.c.b16 %v3843, %v3839
    %v4188 = vpack.c.b16 %v3848, %v3844
    %v4189 = vpack.c.b16 %v3849, %v3845
    %v4190 = vpack.c.b16 %v3850, %v3846
    %v4191 = vpack.c.b16 %v3851, %v3847
    %v4192 = vpack.c.b16 %v3856, %v3852
    %v4193 = vpack.c.b16 %v3857, %v3853
    %v4194 = vpack.c.b16 %v3858, %v3854
    %v4195 = vpack.c.b16 %v3859, %v3855
    %v4196 = vpack.c.b16 %v3864, %v3860
    %v4197 = vpack.c.b16 %v3865, %v3861
    %v4198 = vpack.c.b16 %v3866, %v3862
    %v4199 = vpack.c.b16 %v3867, %v3863
    %v4200 = vpack.c.b16 %v3872, %v3868
    %v4201 = vpack.c.b16 %v3873, %v3869
    %v4202 = vpack.c.b16 %v3874, %v3870
    %v4203 = vpack.c.b16 %v3875, %v3871
    %v4204 = vpack.c.b16 %v3880, %v3876
    %v4205 = vpack.c.b16 %v3881, %v3877
    %v4206 = vpack.c.b16 %v3882, %v3878
    %v4207 = vpack.c.b16 %v3883, %v3879
    %v4208 = vpack.c.b16 %v3888, %v3884
    %v4209 = vpack.c.b16 %v3889, %v3885
    %v4210 = vpack.c.b16 %v3890, %v3886
    %v4211 = vpack.c.b16 %v3891, %v3887
    %v4212 = vpack.c.b16 %v3896, %v3892
    %v4213 = vpack.c.b16 %v3897, %v3893
    %v4214 = vpack.c.b16 %v3898, %v3894
    %v4215 = vpack.c.b16 %v3899, %v3895
    %v4216 = vpack.c.b16 %v3904, %v3900
    %v4217 = vpack.c.b16 %v3905, %v3901
    %v4218 = vpack.c.b16 %v3906, %v3902
    %v4219 = vpack.c.b16 %v3907, %v3903
    %v4220 = vpack.c.b16 %v3912, %v3908
    %v4221 = vpack.c.b16 %v3913, %v3909
    %v4222 = vpack.c.b16 %v3914, %v3910
    %v4223 = vpack.c.b16 %v3915, %v3911
    %v4224 = vpack.c.b16 %v3920, %v3916
    %v4225 = vpack.c.b16 %v3921, %v3917
    %v4226 = vpack.c.b16 %v3922, %v3918
    %v4227 = vpack.c.b16 %v3923, %v3919
    %v4228 = vpack.c.b16 %v3928, %v3924
    %v4229 = vpack.c.b16 %v3929, %v3925
    %v4230 = vpack.c.b16 %v3930, %v3926
    %v4231 = vpack.c.b16 %v3931, %v3927
    %v4232 = vpack.c.b16 %v3936, %v3932
    %v4233 = vpack.c.b16 %v3937, %v3933
    %v4234 = vpack.c.b16 %v3938, %v3934
    %v4235 = vpack.c.b16 %v3939, %v3935
    %v4236 = vpack.c.b16 %v3944, %v3940
    %v4237 = vpack.c.b16 %v3945, %v3941
    %v4238 = vpack.c.b16 %v3946, %v3942
    %v4239 = vpack.c.b16 %v3947, %v3943
    %v4240 = vpack.c.b16 %v3952, %v3948
    %v4241 = vpack.c.b16 %v3953, %v3949
    %v4242 = vpack.c.b16 %v3954, %v3950
    %v4243 = vpack.c.b16 %v3955, %v3951
    %v4244 = vpack.c.b16 %v3960, %v3956
    %v4245 = vpack.c.b16 %v3961, %v3957
    %v4246 = vpack.c.b16 %v3962, %v3958
    %v4247 = vpack.c.b16 %v3963, %v3959
    %v4248 = vpack.c.b16 %v3968, %v3964
    %v4249 = vpack.c.b16 %v3969, %v3965
    %v4250 = vpack.c.b16 %v3970, %v3966
    %v4251 = vpack.c.b16 %v3971, %v3967
    %v4252 = vpack.c.b16 %v3976, %v3972
    %v4253 = vpack.c.b16 %v3977, %v3973
    %v4254 = vpack.c.b16 %v3978, %v3974
    %v4255 = vpack.c.b16 %v3979, %v3975
    %v4256 = vpack.c.b16 %v3984, %v3980
    %v4257 = vpack.c.b16 %v3985, %v3981
    %v4258 = vpack.c.b16 %v3986, %v3982
    %v4259 = vpack.c.b16 %v3987, %v3983
    %v4260 = vpack.c.b16 %v3992, %v3988
    %v4261 = vpack.c.b16 %v3993, %v3989
    %v4262 = vpack.c.b16 %v3994, %v3990
    %v4263 = vpack.c.b16 %v3995, %v3991
    %v4264 = vpack.c.b16 %v4000, %v3996
    %v4265 = vpack.c.b16 %v4001, %v3997
    %v4266 = vpack.c.b16 %v4002, %v3998
    %v4267 = vpack.c.b16 %v4003, %v3999
    %v4268 = vpack.c.b16 %v4008, %v4004
    %v4269 = vpack.c.b16 %v4009, %v4005
    %v4270 = vpack.c.b16 %v4010, %v4006
    %v4271 = vpack.c.b16 %v4011, %v4007
    %v4272 = vpack.c.b16 %v4016, %v4012
    %v4273 = vpack.c.b16 %v4017, %v4013
    %v4274 = vpack.c.b16 %v4018, %v4014
    %v4275 = vpack.c.b16 %v4019, %v4015
    %4532 = vmatprep.subr.bf16.mxu0 %v4021
    %4533 = vmatpush1.bf16.msra.mxu0 %v4020
    %4534 = vmatprep.subr.bf16.mxu0 %v4025
    %4535 = vmatpush1.bf16.msra.mxu0 %v4024
    %4536 = vmatprep.subr.bf16.mxu0 %v4029
    %4537 = vmatpush1.bf16.msra.mxu0 %v4028
    %4538 = vmatprep.subr.bf16.mxu0 %v4033
    %4539 = vmatpush1.bf16.msra.mxu0 %v4032
    %4540 = vmatprep.subr.bf16.mxu0 %v4037
    %4541 = vmatpush1.bf16.msra.mxu0 %v4036
    %4542 = vmatprep.subr.bf16.mxu0 %v4041
    %4543 = vmatpush1.bf16.msra.mxu0 %v4040
    %4544 = vmatprep.subr.bf16.mxu0 %v4045
    %4545 = vmatpush1.bf16.msra.mxu0 %v4044
    %4546 = vmatprep.subr.bf16.mxu0 %v4049
    %4547 = vmatpush1.bf16.msra.mxu0 %v4048
    %4548 = vmatprep.subr.bf16.mxu0 %v4053
    %4549 = vmatpush1.bf16.msra.mxu0 %v4052
    %4550 = vmatprep.subr.bf16.mxu0 %v4057
    %4551 = vmatpush1.bf16.msra.mxu0 %v4056
    %4552 = vmatprep.subr.bf16.mxu0 %v4061
    %4553 = vmatpush1.bf16.msra.mxu0 %v4060
    %4554 = vmatprep.subr.bf16.mxu0 %v4065
    %4555 = vmatpush1.bf16.msra.mxu0 %v4064
    %4556 = vmatprep.subr.bf16.mxu0 %v4069
    %4557 = vmatpush1.bf16.msra.mxu0 %v4068
    %4558 = vmatprep.subr.bf16.mxu0 %v4073
    %4559 = vmatpush1.bf16.msra.mxu0 %v4072
    %4560 = vmatprep.subr.bf16.mxu0 %v4077
    %4561 = vmatpush1.bf16.msra.mxu0 %v4076
    %4562 = vmatprep.subr.bf16.mxu0 %v4081
    %4563 = vmatpush1.bf16.msra.mxu0 %v4080
    %4564 = vmatprep.mubr.bf16.mxu0 %v2967
    %4565 = vmatmul.mubr.bf16.gmra.mrb[0].mxu0 %v2966
    %v4566 = vpop.f32.mrb[0].mxu0
    %v4567 = vadd.f32 %v3235, %v4566
    %v4568 = vpop.f32.mrb[0].mxu0
    %v4569 = vadd.f32 %v3239, %v4568
    %v4570 = vpop.f32.mrb[0].mxu0
    %v4571 = vpop.f32.mrb[0].mxu0
    %4572 = vdwg.mxu0
    %4573 = vmatprep.subr.bf16.mxu0 %v4085
    %4574 = vmatpush1.bf16.msra.mxu0 %v4084
    %4575 = vmatprep.subr.bf16.mxu0 %v4089
    %4576 = vmatpush1.bf16.msra.mxu0 %v4088
    %4577 = vmatprep.subr.bf16.mxu0 %v4093
    %4578 = vmatpush1.bf16.msra.mxu0 %v4092
    %4579 = vmatprep.subr.bf16.mxu0 %v4097
    %4580 = vmatpush1.bf16.msra.mxu0 %v4096
    %4581 = vmatprep.subr.bf16.mxu0 %v4101
    %4582 = vmatpush1.bf16.msra.mxu0 %v4100
    %4583 = vmatprep.subr.bf16.mxu0 %v4105
    %4584 = vmatpush1.bf16.msra.mxu0 %v4104
    %4585 = vmatprep.subr.bf16.mxu0 %v4109
    %4586 = vmatpush1.bf16.msra.mxu0 %v4108
    %4587 = vmatprep.subr.bf16.mxu0 %v4113
    %4588 = vmatpush1.bf16.msra.mxu0 %v4112
    %4589 = vmatprep.subr.bf16.mxu0 %v4117
    %4590 = vmatpush1.bf16.msra.mxu0 %v4116
    %4591 = vmatprep.subr.bf16.mxu0 %v4121
    %4592 = vmatpush1.bf16.msra.mxu0 %v4120
    %4593 = vmatprep.subr.bf16.mxu0 %v4125
    %4594 = vmatpush1.bf16.msra.mxu0 %v4124
    %4595 = vmatprep.subr.bf16.mxu0 %v4129
    %4596 = vmatpush1.bf16.msra.mxu0 %v4128
    %4597 = vmatprep.subr.bf16.mxu0 %v4133
    %4598 = vmatpush1.bf16.msra.mxu0 %v4132
    %4599 = vmatprep.subr.bf16.mxu0 %v4137
    %4600 = vmatpush1.bf16.msra.mxu0 %v4136
    %4601 = vmatprep.subr.bf16.mxu0 %v4141
    %4602 = vmatpush1.bf16.msra.mxu0 %v4140
    %4603 = vmatprep.subr.bf16.mxu0 %v4145
    %4604 = vmatpush1.bf16.msra.mxu0 %v4144
    %4605 = vmatprep.mubr.bf16.mxu0 %v2969
    %4606 = vmatmul.mubr.bf16.gmra.mrb[0].mxu0 %v2968
    %v4607 = vpop.f32.mrb[0].mxu0
    %v4608 = vadd.f32 %v4567, %v4607
    %v4609 = vpop.f32.mrb[0].mxu0
    %v4610 = vadd.f32 %v4569, %v4609
    %v4611 = vpop.f32.mrb[0].mxu0
    %v4612 = vpop.f32.mrb[0].mxu0
    %4613 = vdwg.mxu0
    %4614 = vmatprep.subr.bf16.mxu0 %v4149
    %4615 = vmatpush1.bf16.msra.mxu0 %v4148
    %4616 = vmatprep.subr.bf16.mxu0 %v4153
    %4617 = vmatpush1.bf16.msra.mxu0 %v4152
    %4618 = vmatprep.subr.bf16.mxu0 %v4157
    %4619 = vmatpush1.bf16.msra.mxu0 %v4156
    %4620 = vmatprep.subr.bf16.mxu0 %v4161
    %4621 = vmatpush1.bf16.msra.mxu0 %v4160
    %4622 = vmatprep.subr.bf16.mxu0 %v4165
    %4623 = vmatpush1.bf16.msra.mxu0 %v4164
    %4624 = vmatprep.subr.bf16.mxu0 %v4169
    %4625 = vmatpush1.bf16.msra.mxu0 %v4168
    %4626 = vmatprep.subr.bf16.mxu0 %v4173
    %4627 = vmatpush1.bf16.msra.mxu0 %v4172
    %4628 = vmatprep.subr.bf16.mxu0 %v4177
    %4629 = vmatpush1.bf16.msra.mxu0 %v4176
    %4630 = vmatprep.subr.bf16.mxu0 %v4181
    %4631 = vmatpush1.bf16.msra.mxu0 %v4180
    %4632 = vmatprep.subr.bf16.mxu0 %v4185
    %4633 = vmatpush1.bf16.msra.mxu0 %v4184
    %4634 = vmatprep.subr.bf16.mxu0 %v4189
    %4635 = vmatpush1.bf16.msra.mxu0 %v4188
    %4636 = vmatprep.subr.bf16.mxu0 %v4193
    %4637 = vmatpush1.bf16.msra.mxu0 %v4192
    %4638 = vmatprep.subr.bf16.mxu0 %v4197
    %4639 = vmatpush1.bf16.msra.mxu0 %v4196
    %4640 = vmatprep.subr.bf16.mxu0 %v4201
    %4641 = vmatpush1.bf16.msra.mxu0 %v4200
    %4642 = vmatprep.subr.bf16.mxu0 %v4205
    %4643 = vmatpush1.bf16.msra.mxu0 %v4204
    %4644 = vmatprep.subr.bf16.mxu0 %v4209
    %4645 = vmatpush1.bf16.msra.mxu0 %v4208
    %4646 = vmatprep.mubr.bf16.mxu0 %v2971
    %4647 = vmatmul.mubr.bf16.gmra.mrb[0].mxu0 %v2970
    %v4648 = vpop.f32.mrb[0].mxu0
    %v4649 = vadd.f32 %v4608, %v4648
    %v4650 = vpop.f32.mrb[0].mxu0
    %v4651 = vadd.f32 %v4610, %v4650
    %v4652 = vpop.f32.mrb[0].mxu0
    %v4653 = vpop.f32.mrb[0].mxu0
    %4654 = vdwg.mxu0
    %4655 = vmatprep.subr.bf16.mxu0 %v4213
    %4656 = vmatpush1.bf16.msra.mxu0 %v4212
    %4657 = vmatprep.subr.bf16.mxu0 %v4217
    %4658 = vmatpush1.bf16.msra.mxu0 %v4216
    %4659 = vmatprep.subr.bf16.mxu0 %v4221
    %4660 = vmatpush1.bf16.msra.mxu0 %v4220
    %4661 = vmatprep.subr.bf16.mxu0 %v4225
    %4662 = vmatpush1.bf16.msra.mxu0 %v4224
    %4663 = vmatprep.subr.bf16.mxu0 %v4229
    %4664 = vmatpush1.bf16.msra.mxu0 %v4228
    %4665 = vmatprep.subr.bf16.mxu0 %v4233
    %4666 = vmatpush1.bf16.msra.mxu0 %v4232
    %4667 = vmatprep.subr.bf16.mxu0 %v4237
    %4668 = vmatpush1.bf16.msra.mxu0 %v4236
    %4669 = vmatprep.subr.bf16.mxu0 %v4241
    %4670 = vmatpush1.bf16.msra.mxu0 %v4240
    %4671 = vmatprep.subr.bf16.mxu0 %v4245
    %4672 = vmatpush1.bf16.msra.mxu0 %v4244
    %4673 = vmatprep.subr.bf16.mxu0 %v4249
    %4674 = vmatpush1.bf16.msra.mxu0 %v4248
    %4675 = vmatprep.subr.bf16.mxu0 %v4253
    %4676 = vmatpush1.bf16.msra.mxu0 %v4252
    %4677 = vmatprep.subr.bf16.mxu0 %v4257
    %4678 = vmatpush1.bf16.msra.mxu0 %v4256
    %4679 = vmatprep.subr.bf16.mxu0 %v4261
    %4680 = vmatpush1.bf16.msra.mxu0 %v4260
    %4681 = vmatprep.subr.bf16.mxu0 %v4265
    %4682 = vmatpush1.bf16.msra.mxu0 %v4264
    %4683 = vmatprep.subr.bf16.mxu0 %v4269
    %4684 = vmatpush1.bf16.msra.mxu0 %v4268
    %4685 = vmatprep.subr.bf16.mxu0 %v4273
    %4686 = vmatpush1.bf16.msra.mxu0 %v4272
    %4687 = vmatprep.mubr.bf16.mxu0 %v2973
    %4688 = vmatmul.mubr.bf16.gmra.mrb[0].mxu0 %v2972
    %v4689 = vpop.f32.mrb[0].mxu0
    %v4690 = vadd.f32 %v4649, %v4689
    %v4691 = vpop.f32.mrb[0].mxu0
    %v4692 = vadd.f32 %v4651, %v4691
    %v4693 = vpop.f32.mrb[0].mxu0
    %v4694 = vpop.f32.mrb[0].mxu0
    %4695 = vdwg.mxu0
    %4696 = vmatprep.subr.bf16.mxu0 %v4023
    %4697 = vmatpush1.bf16.msra.mxu0 %v4022
    %4698 = vmatprep.subr.bf16.mxu0 %v4027
    %4699 = vmatpush1.bf16.msra.mxu0 %v4026
    %4700 = vmatprep.subr.bf16.mxu0 %v4031
    %4701 = vmatpush1.bf16.msra.mxu0 %v4030
    %4702 = vmatprep.subr.bf16.mxu0 %v4035
    %4703 = vmatpush1.bf16.msra.mxu0 %v4034
    %4704 = vmatprep.subr.bf16.mxu0 %v4039
    %4705 = vmatpush1.bf16.msra.mxu0 %v4038
    %4706 = vmatprep.subr.bf16.mxu0 %v4043
    %4707 = vmatpush1.bf16.msra.mxu0 %v4042
    %4708 = vmatprep.subr.bf16.mxu0 %v4047
    %4709 = vmatpush1.bf16.msra.mxu0 %v4046
    %4710 = vmatprep.subr.bf16.mxu0 %v4051
    %4711 = vmatpush1.bf16.msra.mxu0 %v4050
    %4712 = vmatprep.subr.bf16.mxu0 %v4055
    %4713 = vmatpush1.bf16.msra.mxu0 %v4054
    %4714 = vmatprep.subr.bf16.mxu0 %v4059
    %4715 = vmatpush1.bf16.msra.mxu0 %v4058
    %4716 = vmatprep.subr.bf16.mxu0 %v4063
    %4717 = vmatpush1.bf16.msra.mxu0 %v4062
    %4718 = vmatprep.subr.bf16.mxu0 %v4067
    %4719 = vmatpush1.bf16.msra.mxu0 %v4066
    %4720 = vmatprep.subr.bf16.mxu0 %v4071
    %4721 = vmatpush1.bf16.msra.mxu0 %v4070
    %4722 = vmatprep.subr.bf16.mxu0 %v4075
    %4723 = vmatpush1.bf16.msra.mxu0 %v4074
    %4724 = vmatprep.subr.bf16.mxu0 %v4079
    %4725 = vmatpush1.bf16.msra.mxu0 %v4078
    %4726 = vmatprep.subr.bf16.mxu0 %v4083
    %4727 = vmatpush1.bf16.msra.mxu0 %v4082
    %4728 = vmatprep.mubr.bf16.mxu0 %v2967
    %4729 = vmatmul.mubr.bf16.gmra.mrb[0].mxu0 %v2966
    %v4730 = vpop.f32.mrb[0].mxu0
    %v4731 = vadd.f32 %v3243, %v4730
    %v4732 = vpop.f32.mrb[0].mxu0
    %v4733 = vadd.f32 %v3247, %v4732
    %v4734 = vpop.f32.mrb[0].mxu0
    %v4735 = vpop.f32.mrb[0].mxu0
    %4736 = vdwg.mxu0
    %4737 = vmatprep.subr.bf16.mxu0 %v4087
    %4738 = vmatpush1.bf16.msra.mxu0 %v4086
    %4739 = vmatprep.subr.bf16.mxu0 %v4091
    %4740 = vmatpush1.bf16.msra.mxu0 %v4090
    %4741 = vmatprep.subr.bf16.mxu0 %v4095
    %4742 = vmatpush1.bf16.msra.mxu0 %v4094
    %4743 = vmatprep.subr.bf16.mxu0 %v4099
    %4744 = vmatpush1.bf16.msra.mxu0 %v4098
    %4745 = vmatprep.subr.bf16.mxu0 %v4103
    %4746 = vmatpush1.bf16.msra.mxu0 %v4102
    %4747 = vmatprep.subr.bf16.mxu0 %v4107
    %4748 = vmatpush1.bf16.msra.mxu0 %v4106
    %4749 = vmatprep.subr.bf16.mxu0 %v4111
    %4750 = vmatpush1.bf16.msra.mxu0 %v4110
    %4751 = vmatprep.subr.bf16.mxu0 %v4115
    %4752 = vmatpush1.bf16.msra.mxu0 %v4114
    %4753 = vmatprep.subr.bf16.mxu0 %v4119
    %4754 = vmatpush1.bf16.msra.mxu0 %v4118
    %4755 = vmatprep.subr.bf16.mxu0 %v4123
    %4756 = vmatpush1.bf16.msra.mxu0 %v4122
    %4757 = vmatprep.subr.bf16.mxu0 %v4127
    %4758 = vmatpush1.bf16.msra.mxu0 %v4126
    %4759 = vmatprep.subr.bf16.mxu0 %v4131
    %4760 = vmatpush1.bf16.msra.mxu0 %v4130
    %4761 = vmatprep.subr.bf16.mxu0 %v4135
    %4762 = vmatpush1.bf16.msra.mxu0 %v4134
    %4763 = vmatprep.subr.bf16.mxu0 %v4139
    %4764 = vmatpush1.bf16.msra.mxu0 %v4138
    %4765 = vmatprep.subr.bf16.mxu0 %v4143
    %4766 = vmatpush1.bf16.msra.mxu0 %v4142
    %4767 = vmatprep.subr.bf16.mxu0 %v4147
    %4768 = vmatpush1.bf16.msra.mxu0 %v4146
    %4769 = vmatprep.mubr.bf16.mxu0 %v2969
    %4770 = vmatmul.mubr.bf16.gmra.mrb[0].mxu0 %v2968
    %v4771 = vpop.f32.mrb[0].mxu0
    %v4772 = vadd.f32 %v4731, %v4771
    %v4773 = vpop.f32.mrb[0].mxu0
    %v4774 = vadd.f32 %v4733, %v4773
    %v4775 = vpop.f32.mrb[0].mxu0
    %v4776 = vpop.f32.mrb[0].mxu0
    %4777 = vdwg.mxu0
    %4778 = vmatprep.subr.bf16.mxu0 %v4151
    %4779 = vmatpush1.bf16.msra.mxu0 %v4150
    %4780 = vmatprep.subr.bf16.mxu0 %v4155
    %4781 = vmatpush1.bf16.msra.mxu0 %v4154
    %4782 = vmatprep.subr.bf16.mxu0 %v4159
    %4783 = vmatpush1.bf16.msra.mxu0 %v4158
    %4784 = vmatprep.subr.bf16.mxu0 %v4163
    %4785 = vmatpush1.bf16.msra.mxu0 %v4162
    %4786 = vmatprep.subr.bf16.mxu0 %v4167
    %4787 = vmatpush1.bf16.msra.mxu0 %v4166
    %4788 = vmatprep.subr.bf16.mxu0 %v4171
    %4789 = vmatpush1.bf16.msra.mxu0 %v4170
    %4790 = vmatprep.subr.bf16.mxu0 %v4175
    %4791 = vmatpush1.bf16.msra.mxu0 %v4174
    %4792 = vmatprep.subr.bf16.mxu0 %v4179
    %4793 = vmatpush1.bf16.msra.mxu0 %v4178
    %4794 = vmatprep.subr.bf16.mxu0 %v4183
    %4795 = vmatpush1.bf16.msra.mxu0 %v4182
    %4796 = vmatprep.subr.bf16.mxu0 %v4187
    %4797 = vmatpush1.bf16.msra.mxu0 %v4186
    %4798 = vmatprep.subr.bf16.mxu0 %v4191
    %4799 = vmatpush1.bf16.msra.mxu0 %v4190
    %4800 = vmatprep.subr.bf16.mxu0 %v4195
    %4801 = vmatpush1.bf16.msra.mxu0 %v4194
    %4802 = vmatprep.subr.bf16.mxu0 %v4199
    %4803 = vmatpush1.bf16.msra.mxu0 %v4198
    %4804 = vmatprep.subr.bf16.mxu0 %v4203
    %4805 = vmatpush1.bf16.msra.mxu0 %v4202
    %4806 = vmatprep.subr.bf16.mxu0 %v4207
    %4807 = vmatpush1.bf16.msra.mxu0 %v4206
    %4808 = vmatprep.subr.bf16.mxu0 %v4211
    %4809 = vmatpush1.bf16.msra.mxu0 %v4210
    %4810 = vmatprep.mubr.bf16.mxu0 %v2971
    %4811 = vmatmul.mubr.bf16.gmra.mrb[0].mxu0 %v2970
    %v4812 = vpop.f32.mrb[0].mxu0
    %v4813 = vadd.f32 %v4772, %v4812
    %v4814 = vpop.f32.mrb[0].mxu0
    %v4815 = vadd.f32 %v4774, %v4814
    %v4816 = vpop.f32.mrb[0].mxu0
    %v4817 = vpop.f32.mrb[0].mxu0
    %4818 = vdwg.mxu0
    %4819 = vmatprep.subr.bf16.mxu0 %v4215
    %4820 = vmatpush1.bf16.msra.mxu0 %v4214
    %4821 = vmatprep.subr.bf16.mxu0 %v4219
    %4822 = vmatpush1.bf16.msra.mxu0 %v4218
    %4823 = vmatprep.subr.bf16.mxu0 %v4223
    %4824 = vmatpush1.bf16.msra.mxu0 %v4222
    %4825 = vmatprep.subr.bf16.mxu0 %v4227
    %4826 = vmatpush1.bf16.msra.mxu0 %v4226
    %4827 = vmatprep.subr.bf16.mxu0 %v4231
    %4828 = vmatpush1.bf16.msra.mxu0 %v4230
    %4829 = vmatprep.subr.bf16.mxu0 %v4235
    %4830 = vmatpush1.bf16.msra.mxu0 %v4234
    %4831 = vmatprep.subr.bf16.mxu0 %v4239
    %4832 = vmatpush1.bf16.msra.mxu0 %v4238
    %4833 = vmatprep.subr.bf16.mxu0 %v4243
    %4834 = vmatpush1.bf16.msra.mxu0 %v4242
    %4835 = vmatprep.subr.bf16.mxu0 %v4247
    %4836 = vmatpush1.bf16.msra.mxu0 %v4246
    %4837 = vmatprep.subr.bf16.mxu0 %v4251
    %4838 = vmatpush1.bf16.msra.mxu0 %v4250
    %4839 = vmatprep.subr.bf16.mxu0 %v4255
    %4840 = vmatpush1.bf16.msra.mxu0 %v4254
    %4841 = vmatprep.subr.bf16.mxu0 %v4259
    %4842 = vmatpush1.bf16.msra.mxu0 %v4258
    %4843 = vmatprep.subr.bf16.mxu0 %v4263
    %4844 = vmatpush1.bf16.msra.mxu0 %v4262
    %4845 = vmatprep.subr.bf16.mxu0 %v4267
    %4846 = vmatpush1.bf16.msra.mxu0 %v4266
    %4847 = vmatprep.subr.bf16.mxu0 %v4271
    %4848 = vmatpush1.bf16.msra.mxu0 %v4270
    %4849 = vmatprep.subr.bf16.mxu0 %v4275
    %4850 = vmatpush1.bf16.msra.mxu0 %v4274
    %4851 = vmatprep.mubr.bf16.mxu0 %v2973
    %4852 = vmatmul.mubr.bf16.gmra.mrb[0].mxu0 %v2972
    %v4853 = vpop.f32.mrb[0].mxu0
    %v4854 = vadd.f32 %v4813, %v4853
    %v4855 = vpop.f32.mrb[0].mxu0
    %v4856 = vadd.f32 %v4815, %v4855
    %v4857 = vpop.f32.mrb[0].mxu0
    %v4858 = vpop.f32.mrb[0].mxu0
    %4859 = vdwg.mxu0
    %v4860 = vmax.f32 %v4690, 0.0
    %v4861 = vmax.f32 %v4692, 0.0
    %v4862 = vmax.f32 %v4854, 0.0
    %v4863 = vmax.f32 %v4856, 0.0
    %v4868 = vcombine.low %v4860, %v4861
    %v4869 = vcombine.low %v4862, %v4863
    %v4871 = vunpack.c.l.s4 1983009808
    %v4872 = vunpack.c.0.s8 %v4871
    %v4873 = vlaneseq
    %v4874 = vshrl.u32 %v4873, 7
    %v4875 = vsub.s32 %v4872, %v4874
    %v4876 = vrot.slane %v4868, %v4875
    %v4878 = vunpack.c.l.s4 1983009808
    %v4879 = vunpack.c.0.s8 %v4878
    %v4880 = vlaneseq
    %v4881 = vshrl.u32 %v4880, 7
    %v4882 = vsub.s32 %v4879, %v4881
    %v4883 = vrot.slane %v4869, %v4882
    %v4884 = vcombine.low %v4876, %v4883
    %4886 = vst [vmem:[#allocation14] sm:$0xff] %v4884
    // Predicated region
    $region82: #{tpu_custom_call.1} parent=1 // pred_check
      _
    $region83: #{tpu_custom_call.1} parent=1 // pred_check_branch
      %4888 = sbr.rel (0) target = $region85
    $region84: #{tpu_custom_call.1} parent=1 // pred_region
      %s4890 = ssub.s32 128, 128
      %4891 = vsyncadd [#allocation4], %s4890
      %s4893 = sshll.u32 [#allocation14], 4
      %s4894 = int_to_ptr.vmem [resolvable:$true] %s4893
      %4896 = dma.vmem_to_hbm [thread:$0]  %s4894, 128, %s13, [#allocation4]
    $region85: #{tpu_custom_call.1} parent=1 // pred_fallthru
      _
    // Predicated region
    $region86: #{tpu_custom_call.1} parent=1 // pred_check
      _
    $region87: #{tpu_custom_call.1} parent=1 // pred_check_branch
      %4898 = sbr.rel (0) target = $region89
    $region88: #{tpu_custom_call.1} parent=1 // pred_region
      %4899 = dma.done [#allocation4], 128
    $region89: #{tpu_custom_call.1} parent=1 // pred_fallthru
      _
    %4900 = vsyncpa [#allocation3], 1
    %4901 = vsyncpa [#allocation6], 1
    %4902 = vsyncpa [#allocation9], 1
    %4903 = vsyncpa [#allocation12], 1
    %4904 = vsyncpa [#allocation4], 1

</llo_original>
